<compile_context>
chip_gen: v6e
topology: v6e:2x2x1
jax: 0.10.0
libtpu: 0.0.40
codegen_flags: <defaults>
</compile_context>

<pallas_src>
import numpy as np

import jax
import jax.numpy as jnp
from jax.experimental import pallas as pl
from jax.experimental.pallas import tpu as pltpu


# Column indices of the packed per-channel / scalar parameter array.
(_B1, _BN1S, _BN1T, _B2, _BN2S, _BN2T,
 _DBN2S, _DBN2T, _DBN3S, _DBN3T, _BO,
 _B3, _BN3S, _BN3T, _DBN1S, _DBN1T) = range(16)
_NCOL = 16


# --------------------------------------------------------------------------
# Wrapper-side constant builders (tiny numpy, evaluated at trace time).
# --------------------------------------------------------------------------
def _bilinear_matrix(n_in, n_out):
    # F.interpolate(mode='bilinear', align_corners=False) as (n_out, n_in).
    A = np.zeros((n_out, n_in), dtype=np.float32)
    scale = n_in / n_out
    for i in range(n_out):
        src = max((i + 0.5) * scale - 0.5, 0.0)
        i0 = min(int(np.floor(src)), n_in - 1)
        i1 = min(i0 + 1, n_in - 1)
        frac = src - i0
        A[i, i0] += 1.0 - frac
        A[i, i1] += frac
    return A


def _upsample_matrix_np(h_in, w_in, h_out, w_out):
    # Separable bilinear in flattened layout: out_flat = x_flat @ U.
    U = np.kron(_bilinear_matrix(h_in, h_out), _bilinear_matrix(w_in, w_out))
    return U.T.astype(np.float32)                  # (h_in*w_in, h_out*w_out)


def _pool_select_np(h_in, w_in):
    # 2x2 / stride-2 max pool in flattened layout = elementwise max over the
    # four selection matmuls act @ S_d (one exact 1.0 per column).
    h_o, w_o = h_in // 2, w_in // 2
    mats = np.zeros((4, h_in * w_in, h_o * w_o), dtype=np.float32)
    for dh in range(2):
        for dw in range(2):
            d = dh * 2 + dw
            for i in range(h_o):
                for j in range(w_o):
                    mats[d, (2 * i + dh) * w_in + (2 * j + dw), i * w_o + j] = 1.0
    return mats


def _conv_pixel_maps(w, h_in, w_in, pad):
    # Stride-1 conv with Cout == 1 as per-input-channel Toeplitz matmuls:
    #   y[0, m] = sum_ci  x[ci, :] @ maps[ci]      maps: (Cin, P_in, P_out)
    c_out, c_in, kh, kw = w.shape
    assert c_out == 1
    h_o = h_in + 2 * pad - kh + 1
    w_o = w_in + 2 * pad - kw + 1
    T = np.zeros((kh * kw, h_in * w_in, h_o * w_o), dtype=np.float32)
    for a in range(kh):
        for b in range(kw):
            for ho in range(h_o):
                for wo in range(w_o):
                    hi, wi = ho + a - pad, wo + b - pad
                    if 0 <= hi < h_in and 0 <= wi < w_in:
                        T[a * kw + b, hi * w_in + wi, ho * w_o + wo] = 1.0
    wf = w.reshape(c_out, c_in, kh * kw)[0]                  # (Cin, KH*KW) traced
    return jnp.einsum('ck,kpm->cpm', wf, jnp.asarray(T))     # (Cin, P, M)


def _im2col_full(x, kh, kw, pad):
    # (N, C, H, W) -> (N, C*kh*kw, Ho*Wo) stride-1 patches (ci-major, kh, kw).
    n, c, h, w = x.shape
    xp = jnp.pad(x, ((0, 0), (0, 0), (pad, pad), (pad, pad)))
    ho = h + 2 * pad - kh + 1
    wo = w + 2 * pad - kw + 1
    cols = [xp[:, :, a:a + ho, b:b + wo] for a in range(kh) for b in range(kw)]
    pat = jnp.stack(cols, axis=2)                  # (N, C, kh*kw, Ho, Wo)
    return pat.reshape(n, c * kh * kw, ho * wo)


def _block_diag_np(op, reps):
    return np.kron(np.eye(reps, dtype=np.float32), op)


# --------------------------------------------------------------------------
# Fused forward kernel: one grid step == Bf folded batch elements, all
# activations lane-dense (channels, Bf*pixels), no in-kernel reshapes.
# --------------------------------------------------------------------------
def _fused_kernel(p_ref, w1_ref, s1_ref, w2_ref, s2_ref, c3_ref, s3_ref,
                  wz_ref, bz_ref, u1_ref, u2_ref, u3_ref, wo_ref, colp_ref,
                  o_ref):
    f32 = jnp.float32
    bf16 = jnp.bfloat16
    cz = w1_ref.shape[0]
    cout = wo_ref.shape[0]

    def col(k, n=1):
        return colp_ref[0:n, k:k + 1]              # (n, 1) f32 param column

    def lrelu(y, slope):
        return jnp.where(y >= 0.0, y, slope * y)

    def pool_max(act, s_ref):
        m = jnp.dot(act, s_ref[0], preferred_element_type=f32)
        for d in range(1, 4):
            m = jnp.maximum(m, jnp.dot(act, s_ref[d], preferred_element_type=f32))
        return m

    # --- block1: 9x9 conv (im2col, full res) + bias + LReLU(0.2) + BN + pool
    y1 = jnp.dot(w1_ref[...], p_ref[0], preferred_element_type=f32)   # (Cz, Bf*256)
    y1 = lrelu(y1 + col(_B1, cz), 0.2) * col(_BN1S, cz) + col(_BN1T, cz)
    l1 = pool_max(y1.astype(bf16), s1_ref)                            # (Cz, Bf*64)

    # --- block2: 1x1 conv + bias + LReLU(0.1) + BN + pool
    y2 = jnp.dot(w2_ref[...], l1.astype(bf16), preferred_element_type=f32)
    y2 = lrelu(y2 + col(_B2, cz), 0.1) * col(_BN2S, cz) + col(_BN2T, cz)
    l2 = pool_max(y2.astype(bf16), s2_ref)                            # (Cz, Bf*16)

    # --- block3: 5x5 conv (Cz -> 1) as independent per-channel Toeplitz dots
    parts = [jnp.dot(l2[c:c + 1, :], c3_ref[c], preferred_element_type=f32)
             for c in range(cz)]
    while len(parts) > 1:                                   # balanced tree sum
        nxt = [parts[i] + parts[i + 1] for i in range(0, len(parts) - 1, 2)]
        if len(parts) % 2:
            nxt.append(parts[-1])
        parts = nxt
    y3 = parts[0]                                                     # (1, Bf*16)
    y3 = lrelu(y3 + col(_B3), 0.2) * col(_BN3S) + col(_BN3T)
    l3 = pool_max(y3, s3_ref)                                         # (1, Bf*4)

    # --- Z: Linear + ReLU + dropout(identity, eval) + residual with l3
    z = jnp.dot(l3, wz_ref[...], preferred_element_type=f32) + bz_ref[...]
    x = jnp.maximum(z, 0.0) + l3                                      # (1, Bf*4)

    # --- deblock1: bilinear 2x2->4x4 + ReLU + BN(1 ch), then + l2 (chan bcast)
    x = jnp.dot(x, u1_ref[...], preferred_element_type=f32)           # (1, Bf*16)
    x = jnp.maximum(x, 0.0) * col(_DBN1S) + col(_DBN1T)
    x = x + l2                                                        # (Cz, Bf*16)

    # --- deblock2: 4x4->8x8 + ReLU + BN, then + l1 skip
    x = jnp.dot(x.astype(bf16), u2_ref[...], preferred_element_type=f32)
    x = jnp.maximum(x, 0.0) * col(_DBN2S, cz) + col(_DBN2T, cz)
    x = x + l1                                                        # (Cz, Bf*64)

    # --- deblock3: 8x8->16x16 + ReLU + BN
    x = jnp.dot(x.astype(bf16), u3_ref[...], preferred_element_type=f32)
    x = jnp.maximum(x, 0.0) * col(_DBN3S, cz) + col(_DBN3T, cz)       # (Cz, Bf*256)

    # --- conv_out: 1x1 conv (z_dim -> channels), lane-dense store
    out = (jnp.dot(wo_ref[...], x.astype(bf16), preferred_element_type=f32)
           + col(_BO, cout))
    o_ref[0] = out.astype(o_ref.dtype)


# --------------------------------------------------------------------------
# Forward wrapper.
# --------------------------------------------------------------------------
def data_imputator_forward(g, p, b_fold=None):
    B, Cin, H, W = g.shape
    z_dim = p['w1'].shape[0]
    Cout = p['wo'].shape[0]
    H1, W1 = H // 2, W // 2
    H2, W2 = H1 // 2, W1 // 2
    H3, W3 = H2 // 2, W2 // 2
    P0, P1, P2, P3 = H * W, H1 * W1, H2 * W2, H3 * W3
    F = P3
    K1 = Cin * 81

    # Batch fold factor (review #1): fold Bf batch elements along lanes.
    # TODO(synk): on v7x prefer Bf = B // 2 so both TensorCores get a grid
    #             step, and re-derive Bf against 64 MiB VMEM at large sizes
    #             (block-diag operators scale with Bf^2).
    if b_fold is None:
        b_fold = 1
        for cand in range(min(B, 8), 0, -1):
            if B % cand == 0:
                b_fold = cand
                break
    Bf = b_fold
    assert B % Bf == 0
    G = B // Bf
    bf16 = jnp.bfloat16
    eye = np.eye(Bf, dtype=np.float32)

    # Input patches at full conv-output resolution, batch folded along lanes.
    patches = _im2col_full(g, 9, 9, 4)                          # (B, K1, P0)
    patches = (patches.reshape(G, Bf, K1, P0)
               .transpose(0, 2, 1, 3)
               .reshape(G, K1, Bf * P0).astype(bf16))

    # MXU weights (bf16 operands, f32 accumulation).
    w1_bf = p['w1'].reshape(z_dim, K1).astype(bf16)
    w2_bf = p['w2'].reshape(z_dim, z_dim).astype(bf16)
    wo_bf = p['wo'].reshape(Cout, z_dim).astype(bf16)

    # Pool / upsample / Toeplitz / Z operators, block-diagonal over the fold.
    s1 = _pool_select_np(H, W)
    s2 = _pool_select_np(H1, W1)
    s3 = _pool_select_np(H2, W2)
    s1_bd = jnp.asarray(np.stack([_block_diag_np(s1[d], Bf) for d in range(4)]),
                        dtype=bf16)
    s2_bd = jnp.asarray(np.stack([_block_diag_np(s2[d], Bf) for d in range(4)]),
                        dtype=bf16)
    s3_bd = jnp.asarray(np.stack([_block_diag_np(s3[d], Bf) for d in range(4)]),
                        dtype=jnp.float32)
    u1_bd = jnp.asarray(_block_diag_np(_upsample_matrix_np(H3, W3, H2, W2), Bf),
                        dtype=jnp.float32)
    u2_bd = jnp.asarray(_block_diag_np(_upsample_matrix_np(H2, W2, H1, W1), Bf),
                        dtype=bf16)
    u3_bd = jnp.asarray(_block_diag_np(_upsample_matrix_np(H1, W1, H, W), Bf),
                        dtype=bf16)

    maps3 = _conv_pixel_maps(p['w3'], H2, W2, 2)                 # (z_dim, P2, P2)
    c3_bd = jnp.einsum('cpm,ab->capbm', maps3, eye).reshape(z_dim, Bf * P2, Bf * P2)

    wz_io = p['wz'].T                                            # torch (out,in)->(in,out)
    wz_bd = jnp.einsum('mn,ab->ambn', wz_io, eye).reshape(Bf * F, Bf * F)
    bz_row = jnp.tile(p['bz'], Bf).reshape(1, Bf * F)

    # Packed per-channel / scalar params (review #6): one operand.
    R = max(z_dim, Cout)
    colp = jnp.zeros((R, _NCOL), jnp.float32)
    colp = colp.at[:z_dim, _B1].set(p['b1'])
    colp = colp.at[:z_dim, _BN1S].set(p['bn1_s'])
    colp = colp.at[:z_dim, _BN1T].set(p['bn1_t'])
    colp = colp.at[:z_dim, _B2].set(p['b2'])
    colp = colp.at[:z_dim, _BN2S].set(p['bn2_s'])
    colp = colp.at[:z_dim, _BN2T].set(p['bn2_t'])
    colp = colp.at[:z_dim, _DBN2S].set(p['dbn2_s'])
    colp = colp.at[:z_dim, _DBN2T].set(p['dbn2_t'])
    colp = colp.at[:z_dim, _DBN3S].set(p['dbn3_s'])
    colp = colp.at[:z_dim, _DBN3T].set(p['dbn3_t'])
    colp = colp.at[:Cout, _BO].set(p['bo'])
    colp = colp.at[0, _B3].set(p['b3'][0])
    colp = colp.at[0, _BN3S].set(p['bn3_s'][0])
    colp = colp.at[0, _BN3T].set(p['bn3_t'][0])
    colp = colp.at[0, _DBN1S].set(p['dbn1_s'][0])
    colp = colp.at[0, _DBN1T].set(p['dbn1_t'][0])

    def cspec(shape):
        n = len(shape)
        return pl.BlockSpec(shape, lambda b: (0,) * n)

    out = pl.pallas_call(
        _fused_kernel,
        out_shape=jax.ShapeDtypeStruct((G, Cout, Bf * P0), jnp.float32),
        grid=(G,),
        in_specs=[
            pl.BlockSpec((1, K1, Bf * P0), lambda b: (b, 0, 0)),   # patches
            cspec((z_dim, K1)),                 # w1
            cspec((4, Bf * P0, Bf * P1)),       # s1_bd
            cspec((z_dim, z_dim)),              # w2
            cspec((4, Bf * P1, Bf * P2)),       # s2_bd
            cspec((z_dim, Bf * P2, Bf * P2)),   # c3_bd
            cspec((4, Bf * P2, Bf * P3)),       # s3_bd
            cspec((Bf * F, Bf * F)),            # wz_bd
            cspec((1, Bf * F)),                 # bz_row
            cspec((Bf * P3, Bf * P2)),          # u1_bd
            cspec((Bf * P2, Bf * P1)),          # u2_bd
            cspec((Bf * P1, Bf * P0)),          # u3_bd
            cspec((Cout, z_dim)),               # wo
            cspec((R, _NCOL)),                  # colp
        ],
        out_specs=pl.BlockSpec((1, Cout, Bf * P0), lambda b: (b, 0, 0)),
        compiler_params=pltpu.CompilerParams(
            dimension_semantics=("parallel",)),
    )(patches, w1_bf, s1_bd, w2_bf, s2_bd, c3_bd, s3_bd, wz_bd, bz_row,
      u1_bd, u2_bd, u3_bd, wo_bf, colp)

    out = (out.reshape(G, Cout, Bf, P0)
           .transpose(0, 2, 1, 3)
           .reshape(B, Cout, H, W))
    return out


def _bn_scale_shift(key, c, eps=1e-5):
    k1, k2, k3, k4 = jax.random.split(key, 4)
    gamma = 1.0 + 0.1 * jax.random.normal(k1, (c,), jnp.float32)
    beta = 0.1 * jax.random.normal(k2, (c,), jnp.float32)
    mean = 0.1 * jax.random.normal(k3, (c,), jnp.float32)
    var = 1.0 + jax.random.uniform(k4, (c,), jnp.float32)
    scale = gamma / jnp.sqrt(var + eps)
    shift = beta - mean * scale
    return scale, shift


if __name__ == "__main__":
    channels, z_dim, x_dim, t_dim, batch = 2, 4, 16, 16, 2
    # l1: 16x16 -> 8x8 ; l2: 8x8 -> 4x4 ; l3: 4x4 -> 2x2  => F = 4
    F = (x_dim // 8) * (t_dim // 8)

    k = jax.random.split(jax.random.PRNGKey(0), 17)
    params = dict(
        w1=0.1 * jax.random.normal(k[0], (z_dim, channels, 9, 9), jnp.float32),
        b1=0.1 * jax.random.normal(k[1], (z_dim,), jnp.float32),
        w2=0.3 * jax.random.normal(k[2], (z_dim, z_dim, 1, 1), jnp.float32),
        b2=0.1 * jax.random.normal(k[3], (z_dim,), jnp.float32),
        w3=0.2 * jax.random.normal(k[4], (1, z_dim, 5, 5), jnp.float32),
        b3=0.1 * jax.random.normal(k[5], (1,), jnp.float32),
        wz=0.3 * jax.random.normal(k[6], (F, F), jnp.float32),    # torch (out, in)
        bz=0.1 * jax.random.normal(k[7], (F,), jnp.float32),
        wo=0.3 * jax.random.normal(k[8], (channels, z_dim, 1, 1), jnp.float32),
        bo=0.1 * jax.random.normal(k[9], (channels,), jnp.float32),
    )
    params['bn1_s'], params['bn1_t'] = _bn_scale_shift(k[10], z_dim)
    params['bn2_s'], params['bn2_t'] = _bn_scale_shift(k[11], z_dim)
    params['bn3_s'], params['bn3_t'] = _bn_scale_shift(k[12], 1)
    params['dbn1_s'], params['dbn1_t'] = _bn_scale_shift(k[13], 1)
    params['dbn2_s'], params['dbn2_t'] = _bn_scale_shift(k[14], z_dim)
    params['dbn3_s'], params['dbn3_t'] = _bn_scale_shift(k[15], z_dim)

    g = jax.random.normal(k[16], (batch, channels, x_dim, t_dim), jnp.float32)

    out = jax.jit(data_imputator_forward)(g, params)
    out = jax.block_until_ready(out)

    assert out.shape == (batch, channels, x_dim, t_dim), out.shape
    assert bool(jnp.all(jnp.isfinite(out)))
    print("KERNEL_OK")
</pallas_src>

<mosaic_0001>
module attributes {stable_mosaic.version = 11 : i64} {
  func.func @_fused_kernel(%arg0: i32, %arg1: memref<1x162x512xbf16, #tpu.memory_space<vmem>>, %arg2: memref<4x162xbf16, #tpu.memory_space<vmem>>, %arg3: memref<4x512x128xbf16, #tpu.memory_space<vmem>>, %arg4: memref<4x4xbf16, #tpu.memory_space<vmem>>, %arg5: memref<4x128x32xbf16, #tpu.memory_space<vmem>>, %arg6: memref<4x32x32xf32, #tpu.memory_space<vmem>>, %arg7: memref<4x32x8xf32, #tpu.memory_space<vmem>>, %arg8: memref<8x8xf32, #tpu.memory_space<vmem>>, %arg9: memref<1x8xf32, #tpu.memory_space<vmem>>, %arg10: memref<8x32xf32, #tpu.memory_space<vmem>>, %arg11: memref<32x128xbf16, #tpu.memory_space<vmem>>, %arg12: memref<128x512xbf16, #tpu.memory_space<vmem>>, %arg13: memref<2x4xbf16, #tpu.memory_space<vmem>>, %arg14: memref<4x16xf32, #tpu.memory_space<vmem>>, %arg15: memref<1x2x512xf32, #tpu.memory_space<vmem>>) attributes {dimension_semantics = [#tpu.dimension_semantics<parallel>], iteration_bounds = array<i64: 1>, scalar_prefetch = 0 : i64, scratch_operands = 0 : i64, tpu.core_type = #tpu.core_type<tc>, window_params = [{transform_indices = @transform_0, window_bounds = array<i64: 1, 162, 512>}, {pipeline_mode = #tpu.pipeline_mode<synchronous>, transform_indices = @transform_1, window_bounds = array<i64: 4, 162>}, {pipeline_mode = #tpu.pipeline_mode<synchronous>, transform_indices = @transform_2, window_bounds = array<i64: 4, 512, 128>}, {pipeline_mode = #tpu.pipeline_mode<synchronous>, transform_indices = @transform_3, window_bounds = array<i64: 4, 4>}, {pipeline_mode = #tpu.pipeline_mode<synchronous>, transform_indices = @transform_4, window_bounds = array<i64: 4, 128, 32>}, {pipeline_mode = #tpu.pipeline_mode<synchronous>, transform_indices = @transform_5, window_bounds = array<i64: 4, 32, 32>}, {pipeline_mode = #tpu.pipeline_mode<synchronous>, transform_indices = @transform_6, window_bounds = array<i64: 4, 32, 8>}, {pipeline_mode = #tpu.pipeline_mode<synchronous>, transform_indices = @transform_7, window_bounds = array<i64: 8, 8>}, {pipeline_mode = #tpu.pipeline_mode<synchronous>, transform_indices = @transform_8, window_bounds = array<i64: 1, 8>}, {pipeline_mode = #tpu.pipeline_mode<synchronous>, transform_indices = @transform_9, window_bounds = array<i64: 8, 32>}, {pipeline_mode = #tpu.pipeline_mode<synchronous>, transform_indices = @transform_10, window_bounds = array<i64: 32, 128>}, {pipeline_mode = #tpu.pipeline_mode<synchronous>, transform_indices = @transform_11, window_bounds = array<i64: 128, 512>}, {pipeline_mode = #tpu.pipeline_mode<synchronous>, transform_indices = @transform_12, window_bounds = array<i64: 2, 4>}, {pipeline_mode = #tpu.pipeline_mode<synchronous>, transform_indices = @transform_13, window_bounds = array<i64: 4, 16>}, {transform_indices = @transform_14, window_bounds = array<i64: 1, 2, 512>}]} {
    %c0 = arith.constant 0 : index
    %c0_0 = arith.constant 0 : index
    %0 = vector.load %arg2[%c0, %c0_0] : memref<4x162xbf16, #tpu.memory_space<vmem>>, vector<4x162xbf16>
    %c0_1 = arith.constant 0 : index
    %c0_2 = arith.constant 0 : index
    %c0_3 = arith.constant 0 : index
    %1 = vector.load %arg1[%c0_1, %c0_2, %c0_3] : memref<1x162x512xbf16, #tpu.memory_space<vmem>>, vector<1x162x512xbf16>
    %2 = vector.shape_cast %1 : vector<1x162x512xbf16> to vector<162x512xbf16>
    %cst = arith.constant dense<0.000000e+00> : vector<4x512xf32>
    %3 = tpu.matmul %0, %2, %cst {dimension_numbers = #tpu.dot_dimension_numbers<[1], [0], [0], [1], [0, 0, 1, 1], [], []>} : vector<4x162xbf16>, vector<162x512xbf16>, vector<4x512xf32> -> vector<4x512xf32>
    %c0_4 = arith.constant 0 : index
    %c0_5 = arith.constant 0 : index
    %4 = vector.load %arg14[%c0_4, %c0_5] : memref<4x16xf32, #tpu.memory_space<vmem>>, vector<4x1xf32>
    %5 = vector.broadcast %4 : vector<4x1xf32> to vector<4x512xf32>
    %6 = arith.addf %3, %5 : vector<4x512xf32>
    %cst_6 = arith.constant 0.000000e+00 : f32
    %7 = vector.broadcast %cst_6 : f32 to vector<4x512xf32>
    %8 = arith.cmpf oge, %6, %7 : vector<4x512xf32>
    %cst_7 = arith.constant 2.000000e-01 : f32
    %9 = vector.broadcast %cst_7 : f32 to vector<4x512xf32>
    %10 = arith.mulf %9, %6 : vector<4x512xf32>
    %11 = arith.select %8, %6, %10 : vector<4x512xi1>, vector<4x512xf32>
    %c0_8 = arith.constant 0 : index
    %c1 = arith.constant 1 : index
    %12 = vector.load %arg14[%c0_8, %c1] : memref<4x16xf32, #tpu.memory_space<vmem>>, vector<4x1xf32>
    %13 = vector.broadcast %12 : vector<4x1xf32> to vector<4x512xf32>
    %14 = arith.mulf %11, %13 : vector<4x512xf32>
    %c0_9 = arith.constant 0 : index
    %c2 = arith.constant 2 : index
    %15 = vector.load %arg14[%c0_9, %c2] : memref<4x16xf32, #tpu.memory_space<vmem>>, vector<4x1xf32>
    %16 = vector.broadcast %15 : vector<4x1xf32> to vector<4x512xf32>
    %17 = arith.addf %14, %16 : vector<4x512xf32>
    %18 = arith.truncf %17 : vector<4x512xf32> to vector<4x512xbf16>
    %c0_10 = arith.constant 0 : index
    %c0_11 = arith.constant 0 : index
    %c0_12 = arith.constant 0 : index
    %19 = vector.load %arg3[%c0_10, %c0_11, %c0_12] : memref<4x512x128xbf16, #tpu.memory_space<vmem>>, vector<1x512x128xbf16>
    %20 = vector.shape_cast %19 : vector<1x512x128xbf16> to vector<512x128xbf16>
    %cst_13 = arith.constant dense<0.000000e+00> : vector<4x128xf32>
    %21 = tpu.matmul %18, %20, %cst_13 {dimension_numbers = #tpu.dot_dimension_numbers<[1], [0], [0], [1], [0, 0, 1, 1], [], []>} : vector<4x512xbf16>, vector<512x128xbf16>, vector<4x128xf32> -> vector<4x128xf32>
    %c1_14 = arith.constant 1 : index
    %c0_15 = arith.constant 0 : index
    %c0_16 = arith.constant 0 : index
    %22 = vector.load %arg3[%c1_14, %c0_15, %c0_16] : memref<4x512x128xbf16, #tpu.memory_space<vmem>>, vector<1x512x128xbf16>
    %23 = vector.shape_cast %22 : vector<1x512x128xbf16> to vector<512x128xbf16>
    %cst_17 = arith.constant dense<0.000000e+00> : vector<4x128xf32>
    %24 = tpu.matmul %18, %23, %cst_17 {dimension_numbers = #tpu.dot_dimension_numbers<[1], [0], [0], [1], [0, 0, 1, 1], [], []>} : vector<4x512xbf16>, vector<512x128xbf16>, vector<4x128xf32> -> vector<4x128xf32>
    %25 = arith.maximumf %21, %24 : vector<4x128xf32>
    %c2_18 = arith.constant 2 : index
    %c0_19 = arith.constant 0 : index
    %c0_20 = arith.constant 0 : index
    %26 = vector.load %arg3[%c2_18, %c0_19, %c0_20] : memref<4x512x128xbf16, #tpu.memory_space<vmem>>, vector<1x512x128xbf16>
    %27 = vector.shape_cast %26 : vector<1x512x128xbf16> to vector<512x128xbf16>
    %cst_21 = arith.constant dense<0.000000e+00> : vector<4x128xf32>
    %28 = tpu.matmul %18, %27, %cst_21 {dimension_numbers = #tpu.dot_dimension_numbers<[1], [0], [0], [1], [0, 0, 1, 1], [], []>} : vector<4x512xbf16>, vector<512x128xbf16>, vector<4x128xf32> -> vector<4x128xf32>
    %29 = arith.maximumf %25, %28 : vector<4x128xf32>
    %c3 = arith.constant 3 : index
    %c0_22 = arith.constant 0 : index
    %c0_23 = arith.constant 0 : index
    %30 = vector.load %arg3[%c3, %c0_22, %c0_23] : memref<4x512x128xbf16, #tpu.memory_space<vmem>>, vector<1x512x128xbf16>
    %31 = vector.shape_cast %30 : vector<1x512x128xbf16> to vector<512x128xbf16>
    %cst_24 = arith.constant dense<0.000000e+00> : vector<4x128xf32>
    %32 = tpu.matmul %18, %31, %cst_24 {dimension_numbers = #tpu.dot_dimension_numbers<[1], [0], [0], [1], [0, 0, 1, 1], [], []>} : vector<4x512xbf16>, vector<512x128xbf16>, vector<4x128xf32> -> vector<4x128xf32>
    %33 = arith.maximumf %29, %32 : vector<4x128xf32>
    %c0_25 = arith.constant 0 : index
    %c0_26 = arith.constant 0 : index
    %34 = vector.load %arg4[%c0_25, %c0_26] : memref<4x4xbf16, #tpu.memory_space<vmem>>, vector<4x4xbf16>
    %35 = arith.truncf %33 : vector<4x128xf32> to vector<4x128xbf16>
    %cst_27 = arith.constant dense<0.000000e+00> : vector<4x128xf32>
    %36 = tpu.matmul %34, %35, %cst_27 {dimension_numbers = #tpu.dot_dimension_numbers<[1], [0], [0], [1], [0, 0, 1, 1], [], []>} : vector<4x4xbf16>, vector<4x128xbf16>, vector<4x128xf32> -> vector<4x128xf32>
    %c0_28 = arith.constant 0 : index
    %c3_29 = arith.constant 3 : index
    %37 = vector.load %arg14[%c0_28, %c3_29] : memref<4x16xf32, #tpu.memory_space<vmem>>, vector<4x1xf32>
    %38 = vector.broadcast %37 : vector<4x1xf32> to vector<4x128xf32>
    %39 = arith.addf %36, %38 : vector<4x128xf32>
    %cst_30 = arith.constant 0.000000e+00 : f32
    %40 = vector.broadcast %cst_30 : f32 to vector<4x128xf32>
    %41 = arith.cmpf oge, %39, %40 : vector<4x128xf32>
    %cst_31 = arith.constant 1.000000e-01 : f32
    %42 = vector.broadcast %cst_31 : f32 to vector<4x128xf32>
    %43 = arith.mulf %42, %39 : vector<4x128xf32>
    %44 = arith.select %41, %39, %43 : vector<4x128xi1>, vector<4x128xf32>
    %c0_32 = arith.constant 0 : index
    %c4 = arith.constant 4 : index
    %45 = vector.load %arg14[%c0_32, %c4] : memref<4x16xf32, #tpu.memory_space<vmem>>, vector<4x1xf32>
    %46 = vector.broadcast %45 : vector<4x1xf32> to vector<4x128xf32>
    %47 = arith.mulf %44, %46 : vector<4x128xf32>
    %c0_33 = arith.constant 0 : index
    %c5 = arith.constant 5 : index
    %48 = vector.load %arg14[%c0_33, %c5] : memref<4x16xf32, #tpu.memory_space<vmem>>, vector<4x1xf32>
    %49 = vector.broadcast %48 : vector<4x1xf32> to vector<4x128xf32>
    %50 = arith.addf %47, %49 : vector<4x128xf32>
    %51 = arith.truncf %50 : vector<4x128xf32> to vector<4x128xbf16>
    %c0_34 = arith.constant 0 : index
    %c0_35 = arith.constant 0 : index
    %c0_36 = arith.constant 0 : index
    %52 = vector.load %arg5[%c0_34, %c0_35, %c0_36] : memref<4x128x32xbf16, #tpu.memory_space<vmem>>, vector<1x128x32xbf16>
    %53 = vector.shape_cast %52 : vector<1x128x32xbf16> to vector<128x32xbf16>
    %cst_37 = arith.constant dense<0.000000e+00> : vector<4x32xf32>
    %54 = tpu.matmul %51, %53, %cst_37 {dimension_numbers = #tpu.dot_dimension_numbers<[1], [0], [0], [1], [0, 0, 1, 1], [], []>} : vector<4x128xbf16>, vector<128x32xbf16>, vector<4x32xf32> -> vector<4x32xf32>
    %c1_38 = arith.constant 1 : index
    %c0_39 = arith.constant 0 : index
    %c0_40 = arith.constant 0 : index
    %55 = vector.load %arg5[%c1_38, %c0_39, %c0_40] : memref<4x128x32xbf16, #tpu.memory_space<vmem>>, vector<1x128x32xbf16>
    %56 = vector.shape_cast %55 : vector<1x128x32xbf16> to vector<128x32xbf16>
    %cst_41 = arith.constant dense<0.000000e+00> : vector<4x32xf32>
    %57 = tpu.matmul %51, %56, %cst_41 {dimension_numbers = #tpu.dot_dimension_numbers<[1], [0], [0], [1], [0, 0, 1, 1], [], []>} : vector<4x128xbf16>, vector<128x32xbf16>, vector<4x32xf32> -> vector<4x32xf32>
    %58 = arith.maximumf %54, %57 : vector<4x32xf32>
    %c2_42 = arith.constant 2 : index
    %c0_43 = arith.constant 0 : index
    %c0_44 = arith.constant 0 : index
    %59 = vector.load %arg5[%c2_42, %c0_43, %c0_44] : memref<4x128x32xbf16, #tpu.memory_space<vmem>>, vector<1x128x32xbf16>
    %60 = vector.shape_cast %59 : vector<1x128x32xbf16> to vector<128x32xbf16>
    %cst_45 = arith.constant dense<0.000000e+00> : vector<4x32xf32>
    %61 = tpu.matmul %51, %60, %cst_45 {dimension_numbers = #tpu.dot_dimension_numbers<[1], [0], [0], [1], [0, 0, 1, 1], [], []>} : vector<4x128xbf16>, vector<128x32xbf16>, vector<4x32xf32> -> vector<4x32xf32>
    %62 = arith.maximumf %58, %61 : vector<4x32xf32>
    %c3_46 = arith.constant 3 : index
    %c0_47 = arith.constant 0 : index
    %c0_48 = arith.constant 0 : index
    %63 = vector.load %arg5[%c3_46, %c0_47, %c0_48] : memref<4x128x32xbf16, #tpu.memory_space<vmem>>, vector<1x128x32xbf16>
    %64 = vector.shape_cast %63 : vector<1x128x32xbf16> to vector<128x32xbf16>
    %cst_49 = arith.constant dense<0.000000e+00> : vector<4x32xf32>
    %65 = tpu.matmul %51, %64, %cst_49 {dimension_numbers = #tpu.dot_dimension_numbers<[1], [0], [0], [1], [0, 0, 1, 1], [], []>} : vector<4x128xbf16>, vector<128x32xbf16>, vector<4x32xf32> -> vector<4x32xf32>
    %66 = arith.maximumf %62, %65 : vector<4x32xf32>
    %67 = vector.extract_strided_slice %66 {offsets = [0, 0], sizes = [1, 32], strides = [1, 1]} : vector<4x32xf32> to vector<1x32xf32>
    %c0_50 = arith.constant 0 : index
    %c0_51 = arith.constant 0 : index
    %c0_52 = arith.constant 0 : index
    %68 = vector.load %arg6[%c0_50, %c0_51, %c0_52] : memref<4x32x32xf32, #tpu.memory_space<vmem>>, vector<1x32x32xf32>
    %69 = vector.shape_cast %68 : vector<1x32x32xf32> to vector<32x32xf32>
    %cst_53 = arith.constant dense<0.000000e+00> : vector<1x32xf32>
    %70 = tpu.matmul %67, %69, %cst_53 {dimension_numbers = #tpu.dot_dimension_numbers<[1], [0], [0], [1], [0, 0, 1, 1], [], []>} : vector<1x32xf32>, vector<32x32xf32>, vector<1x32xf32> -> vector<1x32xf32>
    %71 = vector.extract_strided_slice %66 {offsets = [1, 0], sizes = [1, 32], strides = [1, 1]} : vector<4x32xf32> to vector<1x32xf32>
    %c1_54 = arith.constant 1 : index
    %c0_55 = arith.constant 0 : index
    %c0_56 = arith.constant 0 : index
    %72 = vector.load %arg6[%c1_54, %c0_55, %c0_56] : memref<4x32x32xf32, #tpu.memory_space<vmem>>, vector<1x32x32xf32>
    %73 = vector.shape_cast %72 : vector<1x32x32xf32> to vector<32x32xf32>
    %cst_57 = arith.constant dense<0.000000e+00> : vector<1x32xf32>
    %74 = tpu.matmul %71, %73, %cst_57 {dimension_numbers = #tpu.dot_dimension_numbers<[1], [0], [0], [1], [0, 0, 1, 1], [], []>} : vector<1x32xf32>, vector<32x32xf32>, vector<1x32xf32> -> vector<1x32xf32>
    %75 = vector.extract_strided_slice %66 {offsets = [2, 0], sizes = [1, 32], strides = [1, 1]} : vector<4x32xf32> to vector<1x32xf32>
    %c2_58 = arith.constant 2 : index
    %c0_59 = arith.constant 0 : index
    %c0_60 = arith.constant 0 : index
    %76 = vector.load %arg6[%c2_58, %c0_59, %c0_60] : memref<4x32x32xf32, #tpu.memory_space<vmem>>, vector<1x32x32xf32>
    %77 = vector.shape_cast %76 : vector<1x32x32xf32> to vector<32x32xf32>
    %cst_61 = arith.constant dense<0.000000e+00> : vector<1x32xf32>
    %78 = tpu.matmul %75, %77, %cst_61 {dimension_numbers = #tpu.dot_dimension_numbers<[1], [0], [0], [1], [0, 0, 1, 1], [], []>} : vector<1x32xf32>, vector<32x32xf32>, vector<1x32xf32> -> vector<1x32xf32>
    %79 = vector.extract_strided_slice %66 {offsets = [3, 0], sizes = [1, 32], strides = [1, 1]} : vector<4x32xf32> to vector<1x32xf32>
    %c3_62 = arith.constant 3 : index
    %c0_63 = arith.constant 0 : index
    %c0_64 = arith.constant 0 : index
    %80 = vector.load %arg6[%c3_62, %c0_63, %c0_64] : memref<4x32x32xf32, #tpu.memory_space<vmem>>, vector<1x32x32xf32>
    %81 = vector.shape_cast %80 : vector<1x32x32xf32> to vector<32x32xf32>
    %cst_65 = arith.constant dense<0.000000e+00> : vector<1x32xf32>
    %82 = tpu.matmul %79, %81, %cst_65 {dimension_numbers = #tpu.dot_dimension_numbers<[1], [0], [0], [1], [0, 0, 1, 1], [], []>} : vector<1x32xf32>, vector<32x32xf32>, vector<1x32xf32> -> vector<1x32xf32>
    %83 = arith.addf %70, %74 : vector<1x32xf32>
    %84 = arith.addf %78, %82 : vector<1x32xf32>
    %85 = arith.addf %83, %84 : vector<1x32xf32>
    %c0_66 = arith.constant 0 : index
    %c11 = arith.constant 11 : index
    %86 = vector.load %arg14[%c0_66, %c11] : memref<4x16xf32, #tpu.memory_space<vmem>>, vector<1x1xf32>
    %87 = vector.broadcast %86 : vector<1x1xf32> to vector<1x32xf32>
    %88 = arith.addf %85, %87 : vector<1x32xf32>
    %cst_67 = arith.constant 0.000000e+00 : f32
    %89 = vector.broadcast %cst_67 : f32 to vector<1x32xf32>
    %90 = arith.cmpf oge, %88, %89 : vector<1x32xf32>
    %cst_68 = arith.constant 2.000000e-01 : f32
    %91 = vector.broadcast %cst_68 : f32 to vector<1x32xf32>
    %92 = arith.mulf %91, %88 : vector<1x32xf32>
    %93 = arith.select %90, %88, %92 : vector<1x32xi1>, vector<1x32xf32>
    %c0_69 = arith.constant 0 : index
    %c12 = arith.constant 12 : index
    %94 = vector.load %arg14[%c0_69, %c12] : memref<4x16xf32, #tpu.memory_space<vmem>>, vector<1x1xf32>
    %95 = vector.broadcast %94 : vector<1x1xf32> to vector<1x32xf32>
    %96 = arith.mulf %93, %95 : vector<1x32xf32>
    %c0_70 = arith.constant 0 : index
    %c13 = arith.constant 13 : index
    %97 = vector.load %arg14[%c0_70, %c13] : memref<4x16xf32, #tpu.memory_space<vmem>>, vector<1x1xf32>
    %98 = vector.broadcast %97 : vector<1x1xf32> to vector<1x32xf32>
    %99 = arith.addf %96, %98 : vector<1x32xf32>
    %c0_71 = arith.constant 0 : index
    %c0_72 = arith.constant 0 : index
    %c0_73 = arith.constant 0 : index
    %100 = vector.load %arg7[%c0_71, %c0_72, %c0_73] : memref<4x32x8xf32, #tpu.memory_space<vmem>>, vector<1x32x8xf32>
    %101 = vector.shape_cast %100 : vector<1x32x8xf32> to vector<32x8xf32>
    %cst_74 = arith.constant dense<0.000000e+00> : vector<1x8xf32>
    %102 = tpu.matmul %99, %101, %cst_74 {dimension_numbers = #tpu.dot_dimension_numbers<[1], [0], [0], [1], [0, 0, 1, 1], [], []>} : vector<1x32xf32>, vector<32x8xf32>, vector<1x8xf32> -> vector<1x8xf32>
    %c1_75 = arith.constant 1 : index
    %c0_76 = arith.constant 0 : index
    %c0_77 = arith.constant 0 : index
    %103 = vector.load %arg7[%c1_75, %c0_76, %c0_77] : memref<4x32x8xf32, #tpu.memory_space<vmem>>, vector<1x32x8xf32>
    %104 = vector.shape_cast %103 : vector<1x32x8xf32> to vector<32x8xf32>
    %cst_78 = arith.constant dense<0.000000e+00> : vector<1x8xf32>
    %105 = tpu.matmul %99, %104, %cst_78 {dimension_numbers = #tpu.dot_dimension_numbers<[1], [0], [0], [1], [0, 0, 1, 1], [], []>} : vector<1x32xf32>, vector<32x8xf32>, vector<1x8xf32> -> vector<1x8xf32>
    %106 = arith.maximumf %102, %105 : vector<1x8xf32>
    %c2_79 = arith.constant 2 : index
    %c0_80 = arith.constant 0 : index
    %c0_81 = arith.constant 0 : index
    %107 = vector.load %arg7[%c2_79, %c0_80, %c0_81] : memref<4x32x8xf32, #tpu.memory_space<vmem>>, vector<1x32x8xf32>
    %108 = vector.shape_cast %107 : vector<1x32x8xf32> to vector<32x8xf32>
    %cst_82 = arith.constant dense<0.000000e+00> : vector<1x8xf32>
    %109 = tpu.matmul %99, %108, %cst_82 {dimension_numbers = #tpu.dot_dimension_numbers<[1], [0], [0], [1], [0, 0, 1, 1], [], []>} : vector<1x32xf32>, vector<32x8xf32>, vector<1x8xf32> -> vector<1x8xf32>
    %110 = arith.maximumf %106, %109 : vector<1x8xf32>
    %c3_83 = arith.constant 3 : index
    %c0_84 = arith.constant 0 : index
    %c0_85 = arith.constant 0 : index
    %111 = vector.load %arg7[%c3_83, %c0_84, %c0_85] : memref<4x32x8xf32, #tpu.memory_space<vmem>>, vector<1x32x8xf32>
    %112 = vector.shape_cast %111 : vector<1x32x8xf32> to vector<32x8xf32>
    %cst_86 = arith.constant dense<0.000000e+00> : vector<1x8xf32>
    %113 = tpu.matmul %99, %112, %cst_86 {dimension_numbers = #tpu.dot_dimension_numbers<[1], [0], [0], [1], [0, 0, 1, 1], [], []>} : vector<1x32xf32>, vector<32x8xf32>, vector<1x8xf32> -> vector<1x8xf32>
    %114 = arith.maximumf %110, %113 : vector<1x8xf32>
    %c0_87 = arith.constant 0 : index
    %c0_88 = arith.constant 0 : index
    %115 = vector.load %arg8[%c0_87, %c0_88] : memref<8x8xf32, #tpu.memory_space<vmem>>, vector<8x8xf32>
    %cst_89 = arith.constant dense<0.000000e+00> : vector<1x8xf32>
    %116 = tpu.matmul %114, %115, %cst_89 {dimension_numbers = #tpu.dot_dimension_numbers<[1], [0], [0], [1], [0, 0, 1, 1], [], []>} : vector<1x8xf32>, vector<8x8xf32>, vector<1x8xf32> -> vector<1x8xf32>
    %c0_90 = arith.constant 0 : index
    %c0_91 = arith.constant 0 : index
    %117 = vector.load %arg9[%c0_90, %c0_91] : memref<1x8xf32, #tpu.memory_space<vmem>>, vector<1x8xf32>
    %118 = arith.addf %116, %117 : vector<1x8xf32>
    %cst_92 = arith.constant 0.000000e+00 : f32
    %119 = vector.broadcast %cst_92 : f32 to vector<1x8xf32>
    %120 = arith.maximumf %118, %119 : vector<1x8xf32>
    %121 = arith.addf %120, %114 : vector<1x8xf32>
    %c0_93 = arith.constant 0 : index
    %c0_94 = arith.constant 0 : index
    %122 = vector.load %arg10[%c0_93, %c0_94] : memref<8x32xf32, #tpu.memory_space<vmem>>, vector<8x32xf32>
    %cst_95 = arith.constant dense<0.000000e+00> : vector<1x32xf32>
    %123 = tpu.matmul %121, %122, %cst_95 {dimension_numbers = #tpu.dot_dimension_numbers<[1], [0], [0], [1], [0, 0, 1, 1], [], []>} : vector<1x8xf32>, vector<8x32xf32>, vector<1x32xf32> -> vector<1x32xf32>
    %cst_96 = arith.constant 0.000000e+00 : f32
    %124 = vector.broadcast %cst_96 : f32 to vector<1x32xf32>
    %125 = arith.maximumf %123, %124 : vector<1x32xf32>
    %c0_97 = arith.constant 0 : index
    %c14 = arith.constant 14 : index
    %126 = vector.load %arg14[%c0_97, %c14] : memref<4x16xf32, #tpu.memory_space<vmem>>, vector<1x1xf32>
    %127 = vector.broadcast %126 : vector<1x1xf32> to vector<1x32xf32>
    %128 = arith.mulf %125, %127 : vector<1x32xf32>
    %c0_98 = arith.constant 0 : index
    %c15 = arith.constant 15 : index
    %129 = vector.load %arg14[%c0_98, %c15] : memref<4x16xf32, #tpu.memory_space<vmem>>, vector<1x1xf32>
    %130 = vector.broadcast %129 : vector<1x1xf32> to vector<1x32xf32>
    %131 = arith.addf %128, %130 : vector<1x32xf32>
    %132 = vector.broadcast %131 : vector<1x32xf32> to vector<4x32xf32>
    %133 = arith.addf %132, %66 : vector<4x32xf32>
    %134 = arith.truncf %133 : vector<4x32xf32> to vector<4x32xbf16>
    %c0_99 = arith.constant 0 : index
    %c0_100 = arith.constant 0 : index
    %135 = vector.load %arg11[%c0_99, %c0_100] : memref<32x128xbf16, #tpu.memory_space<vmem>>, vector<32x128xbf16>
    %cst_101 = arith.constant dense<0.000000e+00> : vector<4x128xf32>
    %136 = tpu.matmul %134, %135, %cst_101 {dimension_numbers = #tpu.dot_dimension_numbers<[1], [0], [0], [1], [0, 0, 1, 1], [], []>} : vector<4x32xbf16>, vector<32x128xbf16>, vector<4x128xf32> -> vector<4x128xf32>
    %cst_102 = arith.constant 0.000000e+00 : f32
    %137 = vector.broadcast %cst_102 : f32 to vector<4x128xf32>
    %138 = arith.maximumf %136, %137 : vector<4x128xf32>
    %c0_103 = arith.constant 0 : index
    %c6 = arith.constant 6 : index
    %139 = vector.load %arg14[%c0_103, %c6] : memref<4x16xf32, #tpu.memory_space<vmem>>, vector<4x1xf32>
    %140 = vector.broadcast %139 : vector<4x1xf32> to vector<4x128xf32>
    %141 = arith.mulf %138, %140 : vector<4x128xf32>
    %c0_104 = arith.constant 0 : index
    %c7 = arith.constant 7 : index
    %142 = vector.load %arg14[%c0_104, %c7] : memref<4x16xf32, #tpu.memory_space<vmem>>, vector<4x1xf32>
    %143 = vector.broadcast %142 : vector<4x1xf32> to vector<4x128xf32>
    %144 = arith.addf %141, %143 : vector<4x128xf32>
    %145 = arith.addf %144, %33 : vector<4x128xf32>
    %146 = arith.truncf %145 : vector<4x128xf32> to vector<4x128xbf16>
    %c0_105 = arith.constant 0 : index
    %c0_106 = arith.constant 0 : index
    %147 = vector.load %arg12[%c0_105, %c0_106] : memref<128x512xbf16, #tpu.memory_space<vmem>>, vector<128x512xbf16>
    %cst_107 = arith.constant dense<0.000000e+00> : vector<4x512xf32>
    %148 = tpu.matmul %146, %147, %cst_107 {dimension_numbers = #tpu.dot_dimension_numbers<[1], [0], [0], [1], [0, 0, 1, 1], [], []>} : vector<4x128xbf16>, vector<128x512xbf16>, vector<4x512xf32> -> vector<4x512xf32>
    %cst_108 = arith.constant 0.000000e+00 : f32
    %149 = vector.broadcast %cst_108 : f32 to vector<4x512xf32>
    %150 = arith.maximumf %148, %149 : vector<4x512xf32>
    %c0_109 = arith.constant 0 : index
    %c8 = arith.constant 8 : index
    %151 = vector.load %arg14[%c0_109, %c8] : memref<4x16xf32, #tpu.memory_space<vmem>>, vector<4x1xf32>
    %152 = vector.broadcast %151 : vector<4x1xf32> to vector<4x512xf32>
    %153 = arith.mulf %150, %152 : vector<4x512xf32>
    %c0_110 = arith.constant 0 : index
    %c9 = arith.constant 9 : index
    %154 = vector.load %arg14[%c0_110, %c9] : memref<4x16xf32, #tpu.memory_space<vmem>>, vector<4x1xf32>
    %155 = vector.broadcast %154 : vector<4x1xf32> to vector<4x512xf32>
    %156 = arith.addf %153, %155 : vector<4x512xf32>
    %c0_111 = arith.constant 0 : index
    %c0_112 = arith.constant 0 : index
    %157 = vector.load %arg13[%c0_111, %c0_112] : memref<2x4xbf16, #tpu.memory_space<vmem>>, vector<2x4xbf16>
    %158 = arith.truncf %156 : vector<4x512xf32> to vector<4x512xbf16>
    %cst_113 = arith.constant dense<0.000000e+00> : vector<2x512xf32>
    %159 = tpu.matmul %157, %158, %cst_113 {dimension_numbers = #tpu.dot_dimension_numbers<[1], [0], [0], [1], [0, 0, 1, 1], [], []>} : vector<2x4xbf16>, vector<4x512xbf16>, vector<2x512xf32> -> vector<2x512xf32>
    %c0_114 = arith.constant 0 : index
    %c10 = arith.constant 10 : index
    %160 = vector.load %arg14[%c0_114, %c10] : memref<4x16xf32, #tpu.memory_space<vmem>>, vector<2x1xf32>
    %161 = vector.broadcast %160 : vector<2x1xf32> to vector<2x512xf32>
    %162 = arith.addf %159, %161 : vector<2x512xf32>
    %c0_115 = arith.constant 0 : index
    %c0_116 = arith.constant 0 : index
    %c0_117 = arith.constant 0 : index
    %163 = vector.load %arg15[%c0_115, %c0_116, %c0_117] : memref<1x2x512xf32, #tpu.memory_space<vmem>>, vector<1x2x512xf32>
    %164 = vector.shape_cast %163 : vector<1x2x512xf32> to vector<2x512xf32>
    %165 = vector.shape_cast %162 : vector<2x512xf32> to vector<1x2x512xf32>
    tpu.vector_store %arg15[%c0_115, %c0_116, %c0_117], %165 {strides = array<i32>} : memref<1x2x512xf32, #tpu.memory_space<vmem>>, vector<1x2x512xf32>,
    return
  }
  func.func @transform_0(%arg0: i32) -> (i32, i32, i32) {
    %c0_i32 = arith.constant 0 : i32
    %c0_i32_0 = arith.constant 0 : i32
    %c0_i32_1 = arith.constant 0 : i32
    return %arg0, %c0_i32, %c0_i32_0 : i32, i32, i32
  }
  func.func @transform_1(%arg0: i32) -> (i32, i32) {
    %c0_i32 = arith.constant 0 : i32
    %c0_i32_0 = arith.constant 0 : i32
    %c0_i32_1 = arith.constant 0 : i32
    return %c0_i32, %c0_i32_0 : i32, i32
  }
  func.func @transform_2(%arg0: i32) -> (i32, i32, i32) {
    %c0_i32 = arith.constant 0 : i32
    %c0_i32_0 = arith.constant 0 : i32
    %c0_i32_1 = arith.constant 0 : i32
    %c0_i32_2 = arith.constant 0 : i32
    return %c0_i32, %c0_i32_0, %c0_i32_1 : i32, i32, i32
  }
  func.func @transform_3(%arg0: i32) -> (i32, i32) {
    %c0_i32 = arith.constant 0 : i32
    %c0_i32_0 = arith.constant 0 : i32
    %c0_i32_1 = arith.constant 0 : i32
    return %c0_i32, %c0_i32_0 : i32, i32
  }
  func.func @transform_4(%arg0: i32) -> (i32, i32, i32) {
    %c0_i32 = arith.constant 0 : i32
    %c0_i32_0 = arith.constant 0 : i32
    %c0_i32_1 = arith.constant 0 : i32
    %c0_i32_2 = arith.constant 0 : i32
    return %c0_i32, %c0_i32_0, %c0_i32_1 : i32, i32, i32
  }
  func.func @transform_5(%arg0: i32) -> (i32, i32, i32) {
    %c0_i32 = arith.constant 0 : i32
    %c0_i32_0 = arith.constant 0 : i32
    %c0_i32_1 = arith.constant 0 : i32
    %c0_i32_2 = arith.constant 0 : i32
    return %c0_i32, %c0_i32_0, %c0_i32_1 : i32, i32, i32
  }
  func.func @transform_6(%arg0: i32) -> (i32, i32, i32) {
    %c0_i32 = arith.constant 0 : i32
    %c0_i32_0 = arith.constant 0 : i32
    %c0_i32_1 = arith.constant 0 : i32
    %c0_i32_2 = arith.constant 0 : i32
    return %c0_i32, %c0_i32_0, %c0_i32_1 : i32, i32, i32
  }
  func.func @transform_7(%arg0: i32) -> (i32, i32) {
    %c0_i32 = arith.constant 0 : i32
    %c0_i32_0 = arith.constant 0 : i32
    %c0_i32_1 = arith.constant 0 : i32
    return %c0_i32, %c0_i32_0 : i32, i32
  }
  func.func @transform_8(%arg0: i32) -> (i32, i32) {
    %c0_i32 = arith.constant 0 : i32
    %c0_i32_0 = arith.constant 0 : i32
    %c0_i32_1 = arith.constant 0 : i32
    return %c0_i32, %c0_i32_0 : i32, i32
  }
  func.func @transform_9(%arg0: i32) -> (i32, i32) {
    %c0_i32 = arith.constant 0 : i32
    %c0_i32_0 = arith.constant 0 : i32
    %c0_i32_1 = arith.constant 0 : i32
    return %c0_i32, %c0_i32_0 : i32, i32
  }
  func.func @transform_10(%arg0: i32) -> (i32, i32) {
    %c0_i32 = arith.constant 0 : i32
    %c0_i32_0 = arith.constant 0 : i32
    %c0_i32_1 = arith.constant 0 : i32
    return %c0_i32, %c0_i32_0 : i32, i32
  }
  func.func @transform_11(%arg0: i32) -> (i32, i32) {
    %c0_i32 = arith.constant 0 : i32
    %c0_i32_0 = arith.constant 0 : i32
    %c0_i32_1 = arith.constant 0 : i32
    return %c0_i32, %c0_i32_0 : i32, i32
  }
  func.func @transform_12(%arg0: i32) -> (i32, i32) {
    %c0_i32 = arith.constant 0 : i32
    %c0_i32_0 = arith.constant 0 : i32
    %c0_i32_1 = arith.constant 0 : i32
    return %c0_i32, %c0_i32_0 : i32, i32
  }
  func.func @transform_13(%arg0: i32) -> (i32, i32) {
    %c0_i32 = arith.constant 0 : i32
    %c0_i32_0 = arith.constant 0 : i32
    %c0_i32_1 = arith.constant 0 : i32
    return %c0_i32, %c0_i32_0 : i32, i32
  }
  func.func @transform_14(%arg0: i32) -> (i32, i32, i32) {
    %c0_i32 = arith.constant 0 : i32
    %c0_i32_0 = arith.constant 0 : i32
    %c0_i32_1 = arith.constant 0 : i32
    return %arg0, %c0_i32, %c0_i32_0 : i32, i32, i32
  }
}

</mosaic_0001>

<llo_original>
// kernel: tile.8
$region0: #{tile.8}
  #allocation0 [shape = 's32[1]{0}', space=sflag, size = 0x4, scoped, tag = 'scoped memory for tile.8']
  %s0 = inlined_call_operand.vmem [shape: f32[4], index: 0, kind: input, shape index: {}]
  %s1 = inlined_call_operand.vmem [shape: f32[2,4], index: 1, kind: output, shape index: {}]
  // Predicated region
  $region2: #{tile.8} parent=0 // pred_check
    _
  $region3: #{tile.8} parent=0 // pred_check_branch
    %3 = sbr.rel (0) target = $region5
  $region4: #{tile.8} parent=0 // pred_region
    _
  $region5: #{tile.8} parent=0 // pred_fallthru
    _
  %v4 = vld [vmem:[%s0] ss:$0 sm:$0xff]
  %5 = vst [vmem:[%s1] sm:$0x3] %v4

// kernel: tile.9
$region0: #{tile.9}
  %s0 = inlined_call_operand.vmem [shape: f32[2,4], index: 0, kind: input, shape index: {}]
  %s1 = inlined_call_operand.vmem [shape: f32[1,8], index: 1, kind: output, shape index: {}]
  $region1: #{tile.9} parent=0
    #allocation0 [shape = 'u8[4096]{0}', space=vmem, size = 0x1000, scoped, tag = 'scoped mem for output reshape']
    #allocation1 [shape = 'u8[4096]{0}', space=vmem, size = 0x1000, scoped, tag = 'scoped mem for input reshape']
    %s3 = sshll.u32 1, 2
    %s4 = ssub.s32 %s3, 1
    %v5 = vld [vmem:[%s0] sm:%s4]
    %6 = vst [vmem:[#allocation1] sm:%s4] %v5
    %v7 = vld [vmem:[#allocation1] sm:$0x1]
    %vm8 = vcmask 31744
    %9 = vst.msk [vmem:[#allocation0] sm:$0x1] %vm8, %v7
    %s10 = scalar_lea.vmem [#allocation1], 1
    %v11 = vld [vmem:[%s10] sm:$0x1]
    %12 = vrot.lane.b32.xlu0 %v11, 4
    %v13 = vpop.permute.xlu0 %12
    %vm14 = vcmask 64544
    %15 = vst.msk [vmem:[#allocation0] sm:$0x1] %vm14, %v13
    %s17 = sshll.u32 1, 1
    %s18 = ssub.s32 %s17, 1
    %v20 = vld [vmem:[#allocation0] sm:%s18]
    %s21 = sshll.u32 1, 1
    %s22 = ssub.s32 %s21, 1
    %23 = vst [vmem:[%s1] sm:%s22] %v20

// kernel: data_imputator_forward.1
$region0: #{data_imputator_forward.1}
  #allocation0 [shape = 'u32[]', space=smem, size = 0x4, offset = 0x4, fixed_abs, tag = 'smem constant byte address 0x4 - core index']
  #allocation1 [shape = 'u32[144,128]{1,0:T(1,128)}', space=vmem, size = 0x12000, scoped, tag = 'internal scratch']
  %s0 = inlined_call_operand.vmem [shape: bf16[1,162,512], index: 0, kind: input, shape index: {}]
  %s1 = inlined_call_operand.vmem [shape: bf16[4,162], index: 1, kind: input, shape index: {}]
  %s2 = inlined_call_operand.vmem [shape: bf16[4,512,128], index: 2, kind: input, shape index: {}]
  %s3 = inlined_call_operand.vmem [shape: bf16[4,4], index: 3, kind: input, shape index: {}]
  %s4 = inlined_call_operand.vmem [shape: bf16[4,128,32], index: 4, kind: input, shape index: {}]
  %s5 = inlined_call_operand.vmem [shape: f32[4,32,32], index: 5, kind: input, shape index: {}]
  %s6 = inlined_call_operand.vmem [shape: f32[4,32,8], index: 6, kind: input, shape index: {}]
  %s7 = inlined_call_operand.vmem [shape: f32[8,8], index: 7, kind: input, shape index: {}]
  %s8 = inlined_call_operand.vmem [shape: f32[1,8], index: 8, kind: input, shape index: {}]
  %s9 = inlined_call_operand.vmem [shape: f32[8,32], index: 9, kind: input, shape index: {}]
  %s10 = inlined_call_operand.vmem [shape: bf16[32,128], index: 10, kind: input, shape index: {}]
  %s11 = inlined_call_operand.vmem [shape: bf16[128,512], index: 11, kind: input, shape index: {}]
  %s12 = inlined_call_operand.vmem [shape: bf16[2,4], index: 12, kind: input, shape index: {}]
  %s13 = inlined_call_operand.vmem [shape: f32[4,16], index: 13, kind: input, shape index: {}]
  %s14 = inlined_call_operand.vmem [shape: f32[1,2,512], index: 14, kind: output, shape index: {}]
  %s15 = sld [smem:[#allocation0]]
  $region66: #{data_imputator_forward.1} parent=0
    _
  %s17 = ssub.s32 1, %s15
  %s18 = scalar_select 0, %s17, %s15
  // Predicated region
  $region2: #{data_imputator_forward.1} parent=0 // pred_check
    _
  $region3: #{data_imputator_forward.1} parent=0 // pred_check_branch
    %20 = sbr.rel (0) target = $region5
  $region4: #{data_imputator_forward.1} parent=0 // pred_region
    _
  $region5: #{data_imputator_forward.1} parent=0 // pred_fallthru
    _
  // Predicated region
  $region6: #{data_imputator_forward.1} parent=0 // pred_check
    _
  $region7: #{data_imputator_forward.1} parent=0 // pred_check_branch
    %22 = sbr.rel (0) target = $region9
  $region8: #{data_imputator_forward.1} parent=0 // pred_region
    _
  $region9: #{data_imputator_forward.1} parent=0 // pred_fallthru
    _
  // Predicated region
  $region10: #{data_imputator_forward.1} parent=0 // pred_check
    _
  $region11: #{data_imputator_forward.1} parent=0 // pred_check_branch
    %24 = sbr.rel (0) target = $region13
  $region12: #{data_imputator_forward.1} parent=0 // pred_region
    _
  $region13: #{data_imputator_forward.1} parent=0 // pred_fallthru
    _
  // Predicated region
  $region14: #{data_imputator_forward.1} parent=0 // pred_check
    _
  $region15: #{data_imputator_forward.1} parent=0 // pred_check_branch
    %26 = sbr.rel (0) target = $region17
  $region16: #{data_imputator_forward.1} parent=0 // pred_region
    _
  $region17: #{data_imputator_forward.1} parent=0 // pred_fallthru
    _
  // Predicated region
  $region18: #{data_imputator_forward.1} parent=0 // pred_check
    _
  $region19: #{data_imputator_forward.1} parent=0 // pred_check_branch
    %28 = sbr.rel (0) target = $region21
  $region20: #{data_imputator_forward.1} parent=0 // pred_region
    _
  $region21: #{data_imputator_forward.1} parent=0 // pred_fallthru
    _
  // Predicated region
  $region22: #{data_imputator_forward.1} parent=0 // pred_check
    _
  $region23: #{data_imputator_forward.1} parent=0 // pred_check_branch
    %30 = sbr.rel (0) target = $region25
  $region24: #{data_imputator_forward.1} parent=0 // pred_region
    _
  $region25: #{data_imputator_forward.1} parent=0 // pred_fallthru
    _
  // Predicated region
  $region26: #{data_imputator_forward.1} parent=0 // pred_check
    _
  $region27: #{data_imputator_forward.1} parent=0 // pred_check_branch
    %32 = sbr.rel (0) target = $region29
  $region28: #{data_imputator_forward.1} parent=0 // pred_region
    _
  $region29: #{data_imputator_forward.1} parent=0 // pred_fallthru
    _
  // Predicated region
  $region30: #{data_imputator_forward.1} parent=0 // pred_check
    _
  $region31: #{data_imputator_forward.1} parent=0 // pred_check_branch
    %34 = sbr.rel (0) target = $region33
  $region32: #{data_imputator_forward.1} parent=0 // pred_region
    _
  $region33: #{data_imputator_forward.1} parent=0 // pred_fallthru
    _
  // Predicated region
  $region34: #{data_imputator_forward.1} parent=0 // pred_check
    _
  $region35: #{data_imputator_forward.1} parent=0 // pred_check_branch
    %36 = sbr.rel (0) target = $region37
  $region36: #{data_imputator_forward.1} parent=0 // pred_region
    _
  $region37: #{data_imputator_forward.1} parent=0 // pred_fallthru
    _
  // Predicated region
  $region38: #{data_imputator_forward.1} parent=0 // pred_check
    _
  $region39: #{data_imputator_forward.1} parent=0 // pred_check_branch
    %38 = sbr.rel (0) target = $region41
  $region40: #{data_imputator_forward.1} parent=0 // pred_region
    _
  $region41: #{data_imputator_forward.1} parent=0 // pred_fallthru
    _
  // Predicated region
  $region42: #{data_imputator_forward.1} parent=0 // pred_check
    _
  $region43: #{data_imputator_forward.1} parent=0 // pred_check_branch
    %40 = sbr.rel (0) target = $region45
  $region44: #{data_imputator_forward.1} parent=0 // pred_region
    _
  $region45: #{data_imputator_forward.1} parent=0 // pred_fallthru
    _
  // Predicated region
  $region46: #{data_imputator_forward.1} parent=0 // pred_check
    _
  $region47: #{data_imputator_forward.1} parent=0 // pred_check_branch
    %42 = sbr.rel (0) target = $region49
  $region48: #{data_imputator_forward.1} parent=0 // pred_region
    _
  $region49: #{data_imputator_forward.1} parent=0 // pred_fallthru
    _
  // Predicated region
  $region50: #{data_imputator_forward.1} parent=0 // pred_check
    _
  $region51: #{data_imputator_forward.1} parent=0 // pred_check_branch
    %44 = sbr.rel (0) target = $region53
  $region52: #{data_imputator_forward.1} parent=0 // pred_region
    _
  $region53: #{data_imputator_forward.1} parent=0 // pred_fallthru
    _
  // Predicated region
  $region54: #{data_imputator_forward.1} parent=0 // pred_check
    _
  $region55: #{data_imputator_forward.1} parent=0 // pred_check_branch
    %46 = sbr.rel (0) target = $region57
  $region56: #{data_imputator_forward.1} parent=0 // pred_region
    _
  $region57: #{data_imputator_forward.1} parent=0 // pred_fallthru
    _
  %v48 = vld [vmem:[%s1] sm:$0xf]
  %v49 = vld [vmem:[%s0] sm:$0xff]
  %v50 = vld [vmem:[%s0 + $0x8] sm:$0xff]
  %v51 = vld [vmem:[%s0 + $0x10] sm:$0xff]
  %v52 = vld [vmem:[%s0 + $0x18] sm:$0xff]
  %v53 = vld [vmem:[%s0 + $0x20] sm:$0xff]
  %v54 = vld [vmem:[%s0 + $0x28] sm:$0xff]
  %v55 = vld [vmem:[%s0 + $0x30] sm:$0xff]
  %v56 = vld [vmem:[%s0 + $0x38] sm:$0xff]
  %v57 = vld [vmem:[%s0 + $0x40] sm:$0xff]
  %v58 = vld [vmem:[%s0 + $0x48] sm:$0xff]
  %v59 = vld [vmem:[%s0 + $0x50] sm:$0xff]
  %v60 = vld [vmem:[%s0 + $0x58] sm:$0xff]
  %v61 = vld [vmem:[%s0 + $0x60] sm:$0xff]
  %v62 = vld [vmem:[%s0 + $0x68] sm:$0xff]
  %v63 = vld [vmem:[%s0 + $0x70] sm:$0xff]
  %v64 = vld [vmem:[%s0 + $0x78] sm:$0xff]
  %v65 = vld [vmem:[%s0 + $0x80] sm:$0xff]
  %v66 = vld [vmem:[%s0 + $0x88] sm:$0xff]
  %v67 = vld [vmem:[%s0 + $0x90] sm:$0xff]
  %v68 = vld [vmem:[%s0 + $0x98] sm:$0xff]
  %v69 = vld [vmem:[%s0 + $0xa0] sm:$0xff]
  %v70 = vld [vmem:[%s0 + $0xa8] sm:$0xff]
  %v71 = vld [vmem:[%s0 + $0xb0] sm:$0xff]
  %v72 = vld [vmem:[%s0 + $0xb8] sm:$0xff]
  %v73 = vld [vmem:[%s0 + $0xc0] sm:$0xff]
  %v74 = vld [vmem:[%s0 + $0xc8] sm:$0xff]
  %v75 = vld [vmem:[%s0 + $0xd0] sm:$0xff]
  %v76 = vld [vmem:[%s0 + $0xd8] sm:$0xff]
  %v77 = vld [vmem:[%s0 + $0xe0] sm:$0xff]
  %v78 = vld [vmem:[%s0 + $0xe8] sm:$0xff]
  %v79 = vld [vmem:[%s0 + $0xf0] sm:$0xff]
  %v80 = vld [vmem:[%s0 + $0xf8] sm:$0xff]
  %v81 = vld [vmem:[%s0 + $0x100] sm:$0xff]
  %v82 = vld [vmem:[%s0 + $0x108] sm:$0xff]
  %v83 = vld [vmem:[%s0 + $0x110] sm:$0xff]
  %v84 = vld [vmem:[%s0 + $0x118] sm:$0xff]
  %v85 = vld [vmem:[%s0 + $0x120] sm:$0xff]
  %v86 = vld [vmem:[%s0 + $0x128] sm:$0xff]
  %v87 = vld [vmem:[%s0 + $0x130] sm:$0xff]
  %v88 = vld [vmem:[%s0 + $0x138] sm:$0xff]
  %v89 = vld [vmem:[%s0 + $0x140] sm:$0x11]
  %v90 = vld [vmem:[%s0 + $0x148] sm:$0x11]
  %v91 = vld [vmem:[%s13] sm:$0xf]
  %93 = vset.pattern.permute.xlu0 0
  %94 = vperm.xlu0 %93, %v91
  %v95 = vpop.permute.xlu0 %94
  %v99 = vunpack.c.l.s4 1983009808
  %v100 = vunpack.c.0.s8 %v99
  %v101 = vlaneseq
  %v102 = vshrl.u32 %v101, 7
  %v103 = vsub.s32 %v100, %v102
  %v104 = vrot.slane %v48, %v103
  %v105 = vcombine.high %v104, %v104
  %v149 = vunpack.c.l.b16 %v49
  %v150 = vunpack.c.h.b16 %v49
  %v151 = vunpack.c.l.b16 %v50
  %v152 = vunpack.c.h.b16 %v50
  %v153 = vunpack.c.l.b16 %v51
  %v154 = vunpack.c.h.b16 %v51
  %v155 = vunpack.c.l.b16 %v52
  %v156 = vunpack.c.h.b16 %v52
  %v157 = vunpack.c.l.b16 %v53
  %v158 = vunpack.c.h.b16 %v53
  %v159 = vunpack.c.l.b16 %v54
  %v160 = vunpack.c.h.b16 %v54
  %v161 = vunpack.c.l.b16 %v55
  %v162 = vunpack.c.h.b16 %v55
  %v163 = vunpack.c.l.b16 %v56
  %v164 = vunpack.c.h.b16 %v56
  %v165 = vunpack.c.l.b16 %v57
  %v166 = vunpack.c.h.b16 %v57
  %v167 = vunpack.c.l.b16 %v58
  %v168 = vunpack.c.h.b16 %v58
  %v169 = vunpack.c.l.b16 %v59
  %v170 = vunpack.c.h.b16 %v59
  %v171 = vunpack.c.l.b16 %v60
  %v172 = vunpack.c.h.b16 %v60
  %v173 = vunpack.c.l.b16 %v61
  %v174 = vunpack.c.h.b16 %v61
  %v175 = vunpack.c.l.b16 %v62
  %v176 = vunpack.c.h.b16 %v62
  %v177 = vunpack.c.l.b16 %v63
  %v178 = vunpack.c.h.b16 %v63
  %v179 = vunpack.c.l.b16 %v64
  %v180 = vunpack.c.h.b16 %v64
  %v181 = vunpack.c.l.b16 %v65
  %v182 = vunpack.c.h.b16 %v65
  %v183 = vunpack.c.l.b16 %v66
  %v184 = vunpack.c.h.b16 %v66
  %v185 = vunpack.c.l.b16 %v67
  %v186 = vunpack.c.h.b16 %v67
  %v187 = vunpack.c.l.b16 %v68
  %v188 = vunpack.c.h.b16 %v68
  %v189 = vunpack.c.l.b16 %v69
  %v190 = vunpack.c.h.b16 %v69
  %v191 = vunpack.c.l.b16 %v70
  %v192 = vunpack.c.h.b16 %v70
  %v193 = vunpack.c.l.b16 %v71
  %v194 = vunpack.c.h.b16 %v71
  %v195 = vunpack.c.l.b16 %v72
  %v196 = vunpack.c.h.b16 %v72
  %v197 = vunpack.c.l.b16 %v73
  %v198 = vunpack.c.h.b16 %v73
  %v199 = vunpack.c.l.b16 %v74
  %v200 = vunpack.c.h.b16 %v74
  %v201 = vunpack.c.l.b16 %v75
  %v202 = vunpack.c.h.b16 %v75
  %v203 = vunpack.c.l.b16 %v76
  %v204 = vunpack.c.h.b16 %v76
  %v205 = vunpack.c.l.b16 %v77
  %v206 = vunpack.c.h.b16 %v77
  %v207 = vunpack.c.l.b16 %v78
  %v208 = vunpack.c.h.b16 %v78
  %v209 = vunpack.c.l.b16 %v79
  %v210 = vunpack.c.h.b16 %v79
  %v211 = vunpack.c.l.b16 %v80
  %v212 = vunpack.c.h.b16 %v80
  %v213 = vunpack.c.l.b16 %v81
  %v214 = vunpack.c.h.b16 %v81
  %v215 = vunpack.c.l.b16 %v82
  %v216 = vunpack.c.h.b16 %v82
  %v217 = vunpack.c.l.b16 %v83
  %v218 = vunpack.c.h.b16 %v83
  %v219 = vunpack.c.l.b16 %v84
  %v220 = vunpack.c.h.b16 %v84
  %v221 = vunpack.c.l.b16 %v85
  %v222 = vunpack.c.h.b16 %v85
  %v223 = vunpack.c.l.b16 %v86
  %v224 = vunpack.c.h.b16 %v86
  %v225 = vunpack.c.l.b16 %v87
  %v226 = vunpack.c.h.b16 %v87
  %v227 = vunpack.c.l.b16 %v88
  %v228 = vunpack.c.h.b16 %v88
  %v229 = vunpack.c.l.b16 %v89
  %v230 = vunpack.c.h.b16 %v89
  %v231 = vunpack.c.l.b16 %v90
  %v232 = vunpack.c.h.b16 %v90
  %v233 = vpack.c.b16 %v153, %v149
  %v234 = vpack.c.b16 %v154, %v150
  %v235 = vpack.c.b16 %v155, %v151
  %v236 = vpack.c.b16 %v156, %v152
  %v237 = vpack.c.b16 %v161, %v157
  %v238 = vpack.c.b16 %v162, %v158
  %v239 = vpack.c.b16 %v163, %v159
  %v240 = vpack.c.b16 %v164, %v160
  %v241 = vpack.c.b16 %v169, %v165
  %v242 = vpack.c.b16 %v170, %v166
  %v243 = vpack.c.b16 %v171, %v167
  %v244 = vpack.c.b16 %v172, %v168
  %v245 = vpack.c.b16 %v177, %v173
  %v246 = vpack.c.b16 %v178, %v174
  %v247 = vpack.c.b16 %v179, %v175
  %v248 = vpack.c.b16 %v180, %v176
  %v249 = vpack.c.b16 %v185, %v181
  %v250 = vpack.c.b16 %v186, %v182
  %v251 = vpack.c.b16 %v187, %v183
  %v252 = vpack.c.b16 %v188, %v184
  %v253 = vpack.c.b16 %v193, %v189
  %v254 = vpack.c.b16 %v194, %v190
  %v255 = vpack.c.b16 %v195, %v191
  %v256 = vpack.c.b16 %v196, %v192
  %v257 = vpack.c.b16 %v201, %v197
  %v258 = vpack.c.b16 %v202, %v198
  %v259 = vpack.c.b16 %v203, %v199
  %v260 = vpack.c.b16 %v204, %v200
  %v261 = vpack.c.b16 %v209, %v205
  %v262 = vpack.c.b16 %v210, %v206
  %v263 = vpack.c.b16 %v211, %v207
  %v264 = vpack.c.b16 %v212, %v208
  %v265 = vpack.c.b16 %v217, %v213
  %v266 = vpack.c.b16 %v218, %v214
  %v267 = vpack.c.b16 %v219, %v215
  %v268 = vpack.c.b16 %v220, %v216
  %v269 = vpack.c.b16 %v225, %v221
  %v270 = vpack.c.b16 %v226, %v222
  %v271 = vpack.c.b16 %v227, %v223
  %v272 = vpack.c.b16 %v228, %v224
  %v273 = vpack.c.b16 %v229, %v229
  %v274 = vpack.c.b16 %v230, %v230
  %v275 = vpack.c.b16 %v231, %v231
  %v276 = vpack.c.b16 %v232, %v232
  %vm317 = vcmask 277504
  %v319 = vsel %vm317, %v105, 0
  %vm321 = vcmask 1040384
  %v323 = vsel %vm321, %v273, 0
  %v326 = vsel %vm321, %v274, 0
  %v329 = vsel %vm321, %v275, 0
  %v332 = vsel %vm321, %v276, 0
  %334 = vmatprep.subr.bf16.mxu0 %v262
  %335 = vmatpush1.bf16.msra.mxu0 %v261
  %336 = vmatprep.subr.bf16.mxu0 %v258
  %337 = vmatpush1.bf16.msra.mxu0 %v257
  %338 = vmatprep.subr.bf16.mxu0 %v254
  %339 = vmatpush1.bf16.msra.mxu0 %v253
  %340 = vmatprep.subr.bf16.mxu0 %v250
  %341 = vmatpush1.bf16.msra.mxu0 %v249
  %342 = vmatprep.subr.bf16.mxu0 %v246
  %343 = vmatpush1.bf16.msra.mxu0 %v245
  %344 = vmatprep.subr.bf16.mxu0 %v242
  %345 = vmatpush1.bf16.msra.mxu0 %v241
  %346 = vmatprep.subr.bf16.mxu0 %v238
  %347 = vmatpush1.bf16.msra.mxu0 %v237
  %348 = vmatprep.subr.bf16.mxu0 %v234
  %349 = vmatpush1.bf16.msra.mxu0 %v233
  %350 = vmatprep.subr.bf16.mxu0 0
  %351 = vmatpush2.bf16.msra.mxu0 0
  %352 = vmatprep.subr.bf16.mxu0 0
  %353 = vmatpush2.bf16.msra.mxu0 0
  %354 = vmatprep.subr.bf16.mxu0 0
  %355 = vmatpush2.bf16.msra.mxu0 0
  %356 = vmatprep.subr.bf16.mxu0 0
  %357 = vmatpush2.bf16.msra.mxu0 0
  %358 = vmatprep.subr.bf16.mxu0 0
  %359 = vmatpush2.bf16.msra.mxu0 0
  %360 = vmatprep.subr.bf16.mxu0 %v326
  %361 = vmatpush2.bf16.msra.mxu0 %v323
  %362 = vmatprep.subr.bf16.mxu0 %v270
  %363 = vmatpush2.bf16.msra.mxu0 %v269
  %364 = vmatprep.subr.bf16.mxu0 %v266
  %365 = vmatpush2.bf16.msra.mxu0 %v265
  %366 = vmatprep.mubr.bf16.mxu0 %v319
  %367 = vmatmul.mubr.bf16.gmra.mxu0 %v104
  %v368 = vpop.f32.mrf.mxu0
  %v369 = vadd.f32 %v95, %v368
  %v370 = vpop.f32.mrf.mxu0
  %v371 = vadd.f32 %v95, %v370
  %v372 = vpop.f32.mrf.mxu0
  %v373 = vpop.f32.mrf.mxu0
  %374 = vdwg.mxu0
  %375 = vmatprep.subr.bf16.mxu0 %v264
  %376 = vmatpush1.bf16.msra.mxu0 %v263
  %377 = vmatprep.subr.bf16.mxu0 %v260
  %378 = vmatpush1.bf16.msra.mxu0 %v259
  %379 = vmatprep.subr.bf16.mxu0 %v256
  %380 = vmatpush1.bf16.msra.mxu0 %v255
  %381 = vmatprep.subr.bf16.mxu0 %v252
  %382 = vmatpush1.bf16.msra.mxu0 %v251
  %383 = vmatprep.subr.bf16.mxu0 %v248
  %384 = vmatpush1.bf16.msra.mxu0 %v247
  %385 = vmatprep.subr.bf16.mxu0 %v244
  %386 = vmatpush1.bf16.msra.mxu0 %v243
  %387 = vmatprep.subr.bf16.mxu0 %v240
  %388 = vmatpush1.bf16.msra.mxu0 %v239
  %389 = vmatprep.subr.bf16.mxu0 %v236
  %390 = vmatpush1.bf16.msra.mxu0 %v235
  %391 = vmatprep.subr.bf16.mxu0 0
  %392 = vmatpush2.bf16.msra.mxu0 0
  %393 = vmatprep.subr.bf16.mxu0 0
  %394 = vmatpush2.bf16.msra.mxu0 0
  %395 = vmatprep.subr.bf16.mxu0 0
  %396 = vmatpush2.bf16.msra.mxu0 0
  %397 = vmatprep.subr.bf16.mxu0 0
  %398 = vmatpush2.bf16.msra.mxu0 0
  %399 = vmatprep.subr.bf16.mxu0 0
  %400 = vmatpush2.bf16.msra.mxu0 0
  %401 = vmatprep.subr.bf16.mxu0 %v332
  %402 = vmatpush2.bf16.msra.mxu0 %v329
  %403 = vmatprep.subr.bf16.mxu0 %v272
  %404 = vmatpush2.bf16.msra.mxu0 %v271
  %405 = vmatprep.subr.bf16.mxu0 %v268
  %406 = vmatpush2.bf16.msra.mxu0 %v267
  %407 = vmatprep.mubr.bf16.mxu0 %v319
  %408 = vmatmul.mubr.bf16.gmra.mxu0 %v104
  %v409 = vpop.f32.mrf.mxu0
  %v410 = vadd.f32 %v95, %v409
  %v411 = vpop.f32.mrf.mxu0
  %v412 = vadd.f32 %v95, %v411
  %v413 = vpop.f32.mrf.mxu0
  %v414 = vpop.f32.mrf.mxu0
  %415 = vdwg.mxu0
  %vm416 = vcmp.ge.f32.partialorder %v369, 0.0
  %vm417 = vcmp.ge.f32.partialorder %v371, 0.0
  %vm418 = vcmp.ge.f32.partialorder %v410, 0.0
  %vm419 = vcmp.ge.f32.partialorder %v412, 0.0
  %v420 = vmul.f32 %v369, 0.2
  %v421 = vmul.f32 %v371, 0.2
  %v422 = vmul.f32 %v410, 0.2
  %v423 = vmul.f32 %v412, 0.2
  %v424 = vsel %vm416, %v369, %v420
  %v425 = vsel %vm417, %v371, %v421
  %v426 = vsel %vm418, %v410, %v422
  %v427 = vsel %vm419, %v412, %v423
  %v428 = vld [vmem:[%s13] sm:$0xf]
  %430 = vset.pattern.permute.xlu0 1
  %431 = vperm.xlu0 %430, %v428
  %v432 = vpop.permute.xlu0 %431
  %v434 = vmul.f32 %v424, %v432
  %v435 = vmul.f32 %v425, %v432
  %v436 = vmul.f32 %v426, %v432
  %v437 = vmul.f32 %v427, %v432
  %438 = vset.pattern.permute.xlu0 2
  %439 = vperm.xlu0 %438, %v428
  %v440 = vpop.permute.xlu0 %439
  %v442 = vadd.f32 %v434, %v440
  %v443 = vadd.f32 %v435, %v440
  %v444 = vadd.f32 %v436, %v440
  %v445 = vadd.f32 %v437, %v440
  %v446 = vpack.c.bf16 %v442, %v442
  %v447 = vpack.c.bf16 %v443, %v443
  %v448 = vpack.c.bf16 %v444, %v444
  %v449 = vpack.c.bf16 %v445, %v445
  %v450 = vld [vmem:[%s2] sm:$0xf]
  %v451 = vld [vmem:[%s2 + $0x4] sm:$0xf]
  %v452 = vld [vmem:[%s2 + $0x8] sm:$0xf]
  %v453 = vld [vmem:[%s2 + $0xc] sm:$0xf]
  %v454 = vld [vmem:[%s2 + $0x10] sm:$0xf]
  %v455 = vld [vmem:[%s2 + $0x14] sm:$0xf]
  %v456 = vld [vmem:[%s2 + $0x18] sm:$0xf]
  %v457 = vld [vmem:[%s2 + $0x1c] sm:$0xf]
  %v458 = vld [vmem:[%s2 + $0x20] sm:$0xf]
  %v459 = vld [vmem:[%s2 + $0x24] sm:$0xf]
  %v460 = vld [vmem:[%s2 + $0x28] sm:$0xf]
  %v461 = vld [vmem:[%s2 + $0x2c] sm:$0xf]
  %v462 = vld [vmem:[%s2 + $0x30] sm:$0xf]
  %v463 = vld [vmem:[%s2 + $0x34] sm:$0xf]
  %v464 = vld [vmem:[%s2 + $0x38] sm:$0xf]
  %v465 = vld [vmem:[%s2 + $0x3c] sm:$0xf]
  %v466 = vld [vmem:[%s2 + $0x40] sm:$0xf]
  %v467 = vld [vmem:[%s2 + $0x44] sm:$0xf]
  %v468 = vld [vmem:[%s2 + $0x48] sm:$0xf]
  %v469 = vld [vmem:[%s2 + $0x4c] sm:$0xf]
  %v470 = vld [vmem:[%s2 + $0x50] sm:$0xf]
  %v471 = vld [vmem:[%s2 + $0x54] sm:$0xf]
  %v472 = vld [vmem:[%s2 + $0x58] sm:$0xf]
  %v473 = vld [vmem:[%s2 + $0x5c] sm:$0xf]
  %v474 = vld [vmem:[%s2 + $0x60] sm:$0xf]
  %v475 = vld [vmem:[%s2 + $0x64] sm:$0xf]
  %v476 = vld [vmem:[%s2 + $0x68] sm:$0xf]
  %v477 = vld [vmem:[%s2 + $0x6c] sm:$0xf]
  %v478 = vld [vmem:[%s2 + $0x70] sm:$0xf]
  %v479 = vld [vmem:[%s2 + $0x74] sm:$0xf]
  %v480 = vld [vmem:[%s2 + $0x78] sm:$0xf]
  %v481 = vld [vmem:[%s2 + $0x7c] sm:$0xf]
  %v482 = vld [vmem:[%s2 + $0x80] sm:$0xf]
  %v483 = vld [vmem:[%s2 + $0x84] sm:$0xf]
  %v484 = vld [vmem:[%s2 + $0x88] sm:$0xf]
  %v485 = vld [vmem:[%s2 + $0x8c] sm:$0xf]
  %v486 = vld [vmem:[%s2 + $0x90] sm:$0xf]
  %v487 = vld [vmem:[%s2 + $0x94] sm:$0xf]
  %v488 = vld [vmem:[%s2 + $0x98] sm:$0xf]
  %v489 = vld [vmem:[%s2 + $0x9c] sm:$0xf]
  %v490 = vld [vmem:[%s2 + $0xa0] sm:$0xf]
  %v491 = vld [vmem:[%s2 + $0xa4] sm:$0xf]
  %v492 = vld [vmem:[%s2 + $0xa8] sm:$0xf]
  %v493 = vld [vmem:[%s2 + $0xac] sm:$0xf]
  %v494 = vld [vmem:[%s2 + $0xb0] sm:$0xf]
  %v495 = vld [vmem:[%s2 + $0xb4] sm:$0xf]
  %v496 = vld [vmem:[%s2 + $0xb8] sm:$0xf]
  %v497 = vld [vmem:[%s2 + $0xbc] sm:$0xf]
  %v498 = vld [vmem:[%s2 + $0xc0] sm:$0xf]
  %v499 = vld [vmem:[%s2 + $0xc4] sm:$0xf]
  %v500 = vld [vmem:[%s2 + $0xc8] sm:$0xf]
  %v501 = vld [vmem:[%s2 + $0xcc] sm:$0xf]
  %v502 = vld [vmem:[%s2 + $0xd0] sm:$0xf]
  %v503 = vld [vmem:[%s2 + $0xd4] sm:$0xf]
  %v504 = vld [vmem:[%s2 + $0xd8] sm:$0xf]
  %v505 = vld [vmem:[%s2 + $0xdc] sm:$0xf]
  %v506 = vld [vmem:[%s2 + $0xe0] sm:$0xf]
  %v507 = vld [vmem:[%s2 + $0xe4] sm:$0xf]
  %v508 = vld [vmem:[%s2 + $0xe8] sm:$0xf]
  %v509 = vld [vmem:[%s2 + $0xec] sm:$0xf]
  %v510 = vld [vmem:[%s2 + $0xf0] sm:$0xf]
  %v511 = vld [vmem:[%s2 + $0xf4] sm:$0xf]
  %v512 = vld [vmem:[%s2 + $0xf8] sm:$0xf]
  %v513 = vld [vmem:[%s2 + $0xfc] sm:$0xf]
  %v578 = vunpack.c.l.b16 %v450
  %v579 = vunpack.c.l.b16 %v451
  %v580 = vunpack.c.l.b16 %v452
  %v581 = vunpack.c.l.b16 %v453
  %v582 = vunpack.c.l.b16 %v454
  %v583 = vunpack.c.l.b16 %v455
  %v584 = vunpack.c.l.b16 %v456
  %v585 = vunpack.c.l.b16 %v457
  %v586 = vunpack.c.l.b16 %v458
  %v587 = vunpack.c.l.b16 %v459
  %v588 = vunpack.c.l.b16 %v460
  %v589 = vunpack.c.l.b16 %v461
  %v590 = vunpack.c.l.b16 %v462
  %v591 = vunpack.c.l.b16 %v463
  %v592 = vunpack.c.l.b16 %v464
  %v593 = vunpack.c.l.b16 %v465
  %v594 = vunpack.c.l.b16 %v466
  %v595 = vunpack.c.l.b16 %v467
  %v596 = vunpack.c.l.b16 %v468
  %v597 = vunpack.c.l.b16 %v469
  %v598 = vunpack.c.l.b16 %v470
  %v599 = vunpack.c.l.b16 %v471
  %v600 = vunpack.c.l.b16 %v472
  %v601 = vunpack.c.l.b16 %v473
  %v602 = vunpack.c.l.b16 %v474
  %v603 = vunpack.c.l.b16 %v475
  %v604 = vunpack.c.l.b16 %v476
  %v605 = vunpack.c.l.b16 %v477
  %v606 = vunpack.c.l.b16 %v478
  %v607 = vunpack.c.l.b16 %v479
  %v608 = vunpack.c.l.b16 %v480
  %v609 = vunpack.c.l.b16 %v481
  %v610 = vunpack.c.l.b16 %v482
  %v611 = vunpack.c.l.b16 %v483
  %v612 = vunpack.c.l.b16 %v484
  %v613 = vunpack.c.l.b16 %v485
  %v614 = vunpack.c.l.b16 %v486
  %v615 = vunpack.c.l.b16 %v487
  %v616 = vunpack.c.l.b16 %v488
  %v617 = vunpack.c.l.b16 %v489
  %v618 = vunpack.c.l.b16 %v490
  %v619 = vunpack.c.l.b16 %v491
  %v620 = vunpack.c.l.b16 %v492
  %v621 = vunpack.c.l.b16 %v493
  %v622 = vunpack.c.l.b16 %v494
  %v623 = vunpack.c.l.b16 %v495
  %v624 = vunpack.c.l.b16 %v496
  %v625 = vunpack.c.l.b16 %v497
  %v626 = vunpack.c.l.b16 %v498
  %v627 = vunpack.c.l.b16 %v499
  %v628 = vunpack.c.l.b16 %v500
  %v629 = vunpack.c.l.b16 %v501
  %v630 = vunpack.c.l.b16 %v502
  %v631 = vunpack.c.l.b16 %v503
  %v632 = vunpack.c.l.b16 %v504
  %v633 = vunpack.c.l.b16 %v505
  %v634 = vunpack.c.l.b16 %v506
  %v635 = vunpack.c.l.b16 %v507
  %v636 = vunpack.c.l.b16 %v508
  %v637 = vunpack.c.l.b16 %v509
  %v638 = vunpack.c.l.b16 %v510
  %v639 = vunpack.c.l.b16 %v511
  %v640 = vunpack.c.l.b16 %v512
  %v641 = vunpack.c.l.b16 %v513
  %v642 = vpack.c.b16 %v579, %v578
  %v643 = vpack.c.b16 %v581, %v580
  %v644 = vpack.c.b16 %v583, %v582
  %v645 = vpack.c.b16 %v585, %v584
  %v646 = vpack.c.b16 %v587, %v586
  %v647 = vpack.c.b16 %v589, %v588
  %v648 = vpack.c.b16 %v591, %v590
  %v649 = vpack.c.b16 %v593, %v592
  %v650 = vpack.c.b16 %v595, %v594
  %v651 = vpack.c.b16 %v597, %v596
  %v652 = vpack.c.b16 %v599, %v598
  %v653 = vpack.c.b16 %v601, %v600
  %v654 = vpack.c.b16 %v603, %v602
  %v655 = vpack.c.b16 %v605, %v604
  %v656 = vpack.c.b16 %v607, %v606
  %v657 = vpack.c.b16 %v609, %v608
  %v658 = vpack.c.b16 %v611, %v610
  %v659 = vpack.c.b16 %v613, %v612
  %v660 = vpack.c.b16 %v615, %v614
  %v661 = vpack.c.b16 %v617, %v616
  %v662 = vpack.c.b16 %v619, %v618
  %v663 = vpack.c.b16 %v621, %v620
  %v664 = vpack.c.b16 %v623, %v622
  %v665 = vpack.c.b16 %v625, %v624
  %v666 = vpack.c.b16 %v627, %v626
  %v667 = vpack.c.b16 %v629, %v628
  %v668 = vpack.c.b16 %v631, %v630
  %v669 = vpack.c.b16 %v633, %v632
  %v670 = vpack.c.b16 %v635, %v634
  %v671 = vpack.c.b16 %v637, %v636
  %v672 = vpack.c.b16 %v639, %v638
  %v673 = vpack.c.b16 %v641, %v640
  %706 = vmatprep.subr.bf16.mxu0 0
  %707 = vmatpush1.bf16.msra.mxu0 %v649
  %708 = vmatprep.subr.bf16.mxu0 0
  %709 = vmatpush1.bf16.msra.mxu0 %v648
  %710 = vmatprep.subr.bf16.mxu0 0
  %711 = vmatpush1.bf16.msra.mxu0 %v647
  %712 = vmatprep.subr.bf16.mxu0 0
  %713 = vmatpush1.bf16.msra.mxu0 %v646
  %714 = vmatprep.subr.bf16.mxu0 0
  %715 = vmatpush1.bf16.msra.mxu0 %v645
  %716 = vmatprep.subr.bf16.mxu0 0
  %717 = vmatpush1.bf16.msra.mxu0 %v644
  %718 = vmatprep.subr.bf16.mxu0 0
  %719 = vmatpush1.bf16.msra.mxu0 %v643
  %720 = vmatprep.subr.bf16.mxu0 0
  %721 = vmatpush1.bf16.msra.mxu0 %v642
  %722 = vmatprep.subr.bf16.mxu0 0
  %723 = vmatpush2.bf16.msra.mxu0 %v657
  %724 = vmatprep.subr.bf16.mxu0 0
  %725 = vmatpush2.bf16.msra.mxu0 %v656
  %726 = vmatprep.subr.bf16.mxu0 0
  %727 = vmatpush2.bf16.msra.mxu0 %v655
  %728 = vmatprep.subr.bf16.mxu0 0
  %729 = vmatpush2.bf16.msra.mxu0 %v654
  %730 = vmatprep.subr.bf16.mxu0 0
  %731 = vmatpush2.bf16.msra.mxu0 %v653
  %732 = vmatprep.subr.bf16.mxu0 0
  %733 = vmatpush2.bf16.msra.mxu0 %v652
  %734 = vmatprep.subr.bf16.mxu0 0
  %735 = vmatpush2.bf16.msra.mxu0 %v651
  %736 = vmatprep.subr.bf16.mxu0 0
  %737 = vmatpush2.bf16.msra.mxu0 %v650
  %738 = vmatprep.mubr.bf16.mxu0 %v447
  %739 = vmatmul.mubr.bf16.gmra.mxu0 %v446
  %v740 = vpop.f32.mrf.mxu0
  %v741 = vadd.f32 0.0, %v740
  %v742 = vpop.f32.mrf.mxu0
  %v743 = vpop.f32.mrf.mxu0
  %v744 = vpop.f32.mrf.mxu0
  %745 = vdwg.mxu0
  %746 = vmatprep.subr.bf16.mxu0 0
  %747 = vmatpush1.bf16.msra.mxu0 %v665
  %748 = vmatprep.subr.bf16.mxu0 0
  %749 = vmatpush1.bf16.msra.mxu0 %v664
  %750 = vmatprep.subr.bf16.mxu0 0
  %751 = vmatpush1.bf16.msra.mxu0 %v663
  %752 = vmatprep.subr.bf16.mxu0 0
  %753 = vmatpush1.bf16.msra.mxu0 %v662
  %754 = vmatprep.subr.bf16.mxu0 0
  %755 = vmatpush1.bf16.msra.mxu0 %v661
  %756 = vmatprep.subr.bf16.mxu0 0
  %757 = vmatpush1.bf16.msra.mxu0 %v660
  %758 = vmatprep.subr.bf16.mxu0 0
  %759 = vmatpush1.bf16.msra.mxu0 %v659
  %760 = vmatprep.subr.bf16.mxu0 0
  %761 = vmatpush1.bf16.msra.mxu0 %v658
  %762 = vmatprep.subr.bf16.mxu0 0
  %763 = vmatpush2.bf16.msra.mxu0 %v673
  %764 = vmatprep.subr.bf16.mxu0 0
  %765 = vmatpush2.bf16.msra.mxu0 %v672
  %766 = vmatprep.subr.bf16.mxu0 0
  %767 = vmatpush2.bf16.msra.mxu0 %v671
  %768 = vmatprep.subr.bf16.mxu0 0
  %769 = vmatpush2.bf16.msra.mxu0 %v670
  %770 = vmatprep.subr.bf16.mxu0 0
  %771 = vmatpush2.bf16.msra.mxu0 %v669
  %772 = vmatprep.subr.bf16.mxu0 0
  %773 = vmatpush2.bf16.msra.mxu0 %v668
  %774 = vmatprep.subr.bf16.mxu0 0
  %775 = vmatpush2.bf16.msra.mxu0 %v667
  %776 = vmatprep.subr.bf16.mxu0 0
  %777 = vmatpush2.bf16.msra.mxu0 %v666
  %778 = vmatprep.mubr.bf16.mxu0 %v449
  %779 = vmatmul.mubr.bf16.gmra.mxu0 %v448
  %v780 = vpop.f32.mrf.mxu0
  %v781 = vadd.f32 %v741, %v780
  %v782 = vpop.f32.mrf.mxu0
  %v783 = vpop.f32.mrf.mxu0
  %v784 = vpop.f32.mrf.mxu0
  %785 = vdwg.mxu0
  %s786 = scalar_lea.vmem %s2, 256
  %v787 = vld [vmem:[%s786] sm:$0xf]
  %v788 = vld [vmem:[%s786 + $0x4] sm:$0xf]
  %v789 = vld [vmem:[%s786 + $0x8] sm:$0xf]
  %v790 = vld [vmem:[%s786 + $0xc] sm:$0xf]
  %v791 = vld [vmem:[%s786 + $0x10] sm:$0xf]
  %v792 = vld [vmem:[%s786 + $0x14] sm:$0xf]
  %v793 = vld [vmem:[%s786 + $0x18] sm:$0xf]
  %v794 = vld [vmem:[%s786 + $0x1c] sm:$0xf]
  %v795 = vld [vmem:[%s786 + $0x20] sm:$0xf]
  %v796 = vld [vmem:[%s786 + $0x24] sm:$0xf]
  %v797 = vld [vmem:[%s786 + $0x28] sm:$0xf]
  %v798 = vld [vmem:[%s786 + $0x2c] sm:$0xf]
  %v799 = vld [vmem:[%s786 + $0x30] sm:$0xf]
  %v800 = vld [vmem:[%s786 + $0x34] sm:$0xf]
  %v801 = vld [vmem:[%s786 + $0x38] sm:$0xf]
  %v802 = vld [vmem:[%s786 + $0x3c] sm:$0xf]
  %v803 = vld [vmem:[%s786 + $0x40] sm:$0xf]
  %v804 = vld [vmem:[%s786 + $0x44] sm:$0xf]
  %v805 = vld [vmem:[%s786 + $0x48] sm:$0xf]
  %v806 = vld [vmem:[%s786 + $0x4c] sm:$0xf]
  %v807 = vld [vmem:[%s786 + $0x50] sm:$0xf]
  %v808 = vld [vmem:[%s786 + $0x54] sm:$0xf]
  %v809 = vld [vmem:[%s786 + $0x58] sm:$0xf]
  %v810 = vld [vmem:[%s786 + $0x5c] sm:$0xf]
  %v811 = vld [vmem:[%s786 + $0x60] sm:$0xf]
  %v812 = vld [vmem:[%s786 + $0x64] sm:$0xf]
  %v813 = vld [vmem:[%s786 + $0x68] sm:$0xf]
  %v814 = vld [vmem:[%s786 + $0x6c] sm:$0xf]
  %v815 = vld [vmem:[%s786 + $0x70] sm:$0xf]
  %v816 = vld [vmem:[%s786 + $0x74] sm:$0xf]
  %v817 = vld [vmem:[%s786 + $0x78] sm:$0xf]
  %v818 = vld [vmem:[%s786 + $0x7c] sm:$0xf]
  %v819 = vld [vmem:[%s786 + $0x80] sm:$0xf]
  %v820 = vld [vmem:[%s786 + $0x84] sm:$0xf]
  %v821 = vld [vmem:[%s786 + $0x88] sm:$0xf]
  %v822 = vld [vmem:[%s786 + $0x8c] sm:$0xf]
  %v823 = vld [vmem:[%s786 + $0x90] sm:$0xf]
  %v824 = vld [vmem:[%s786 + $0x94] sm:$0xf]
  %v825 = vld [vmem:[%s786 + $0x98] sm:$0xf]
  %v826 = vld [vmem:[%s786 + $0x9c] sm:$0xf]
  %v827 = vld [vmem:[%s786 + $0xa0] sm:$0xf]
  %v828 = vld [vmem:[%s786 + $0xa4] sm:$0xf]
  %v829 = vld [vmem:[%s786 + $0xa8] sm:$0xf]
  %v830 = vld [vmem:[%s786 + $0xac] sm:$0xf]
  %v831 = vld [vmem:[%s786 + $0xb0] sm:$0xf]
  %v832 = vld [vmem:[%s786 + $0xb4] sm:$0xf]
  %v833 = vld [vmem:[%s786 + $0xb8] sm:$0xf]
  %v834 = vld [vmem:[%s786 + $0xbc] sm:$0xf]
  %v835 = vld [vmem:[%s786 + $0xc0] sm:$0xf]
  %v836 = vld [vmem:[%s786 + $0xc4] sm:$0xf]
  %v837 = vld [vmem:[%s786 + $0xc8] sm:$0xf]
  %v838 = vld [vmem:[%s786 + $0xcc] sm:$0xf]
  %v839 = vld [vmem:[%s786 + $0xd0] sm:$0xf]
  %v840 = vld [vmem:[%s786 + $0xd4] sm:$0xf]
  %v841 = vld [vmem:[%s786 + $0xd8] sm:$0xf]
  %v842 = vld [vmem:[%s786 + $0xdc] sm:$0xf]
  %v843 = vld [vmem:[%s786 + $0xe0] sm:$0xf]
  %v844 = vld [vmem:[%s786 + $0xe4] sm:$0xf]
  %v845 = vld [vmem:[%s786 + $0xe8] sm:$0xf]
  %v846 = vld [vmem:[%s786 + $0xec] sm:$0xf]
  %v847 = vld [vmem:[%s786 + $0xf0] sm:$0xf]
  %v848 = vld [vmem:[%s786 + $0xf4] sm:$0xf]
  %v849 = vld [vmem:[%s786 + $0xf8] sm:$0xf]
  %v850 = vld [vmem:[%s786 + $0xfc] sm:$0xf]
  %v915 = vunpack.c.l.b16 %v787
  %v916 = vunpack.c.l.b16 %v788
  %v917 = vunpack.c.l.b16 %v789
  %v918 = vunpack.c.l.b16 %v790
  %v919 = vunpack.c.l.b16 %v791
  %v920 = vunpack.c.l.b16 %v792
  %v921 = vunpack.c.l.b16 %v793
  %v922 = vunpack.c.l.b16 %v794
  %v923 = vunpack.c.l.b16 %v795
  %v924 = vunpack.c.l.b16 %v796
  %v925 = vunpack.c.l.b16 %v797
  %v926 = vunpack.c.l.b16 %v798
  %v927 = vunpack.c.l.b16 %v799
  %v928 = vunpack.c.l.b16 %v800
  %v929 = vunpack.c.l.b16 %v801
  %v930 = vunpack.c.l.b16 %v802
  %v931 = vunpack.c.l.b16 %v803
  %v932 = vunpack.c.l.b16 %v804
  %v933 = vunpack.c.l.b16 %v805
  %v934 = vunpack.c.l.b16 %v806
  %v935 = vunpack.c.l.b16 %v807
  %v936 = vunpack.c.l.b16 %v808
  %v937 = vunpack.c.l.b16 %v809
  %v938 = vunpack.c.l.b16 %v810
  %v939 = vunpack.c.l.b16 %v811
  %v940 = vunpack.c.l.b16 %v812
  %v941 = vunpack.c.l.b16 %v813
  %v942 = vunpack.c.l.b16 %v814
  %v943 = vunpack.c.l.b16 %v815
  %v944 = vunpack.c.l.b16 %v816
  %v945 = vunpack.c.l.b16 %v817
  %v946 = vunpack.c.l.b16 %v818
  %v947 = vunpack.c.l.b16 %v819
  %v948 = vunpack.c.l.b16 %v820
  %v949 = vunpack.c.l.b16 %v821
  %v950 = vunpack.c.l.b16 %v822
  %v951 = vunpack.c.l.b16 %v823
  %v952 = vunpack.c.l.b16 %v824
  %v953 = vunpack.c.l.b16 %v825
  %v954 = vunpack.c.l.b16 %v826
  %v955 = vunpack.c.l.b16 %v827
  %v956 = vunpack.c.l.b16 %v828
  %v957 = vunpack.c.l.b16 %v829
  %v958 = vunpack.c.l.b16 %v830
  %v959 = vunpack.c.l.b16 %v831
  %v960 = vunpack.c.l.b16 %v832
  %v961 = vunpack.c.l.b16 %v833
  %v962 = vunpack.c.l.b16 %v834
  %v963 = vunpack.c.l.b16 %v835
  %v964 = vunpack.c.l.b16 %v836
  %v965 = vunpack.c.l.b16 %v837
  %v966 = vunpack.c.l.b16 %v838
  %v967 = vunpack.c.l.b16 %v839
  %v968 = vunpack.c.l.b16 %v840
  %v969 = vunpack.c.l.b16 %v841
  %v970 = vunpack.c.l.b16 %v842
  %v971 = vunpack.c.l.b16 %v843
  %v972 = vunpack.c.l.b16 %v844
  %v973 = vunpack.c.l.b16 %v845
  %v974 = vunpack.c.l.b16 %v846
  %v975 = vunpack.c.l.b16 %v847
  %v976 = vunpack.c.l.b16 %v848
  %v977 = vunpack.c.l.b16 %v849
  %v978 = vunpack.c.l.b16 %v850
  %v979 = vpack.c.b16 %v916, %v915
  %v980 = vpack.c.b16 %v918, %v917
  %v981 = vpack.c.b16 %v920, %v919
  %v982 = vpack.c.b16 %v922, %v921
  %v983 = vpack.c.b16 %v924, %v923
  %v984 = vpack.c.b16 %v926, %v925
  %v985 = vpack.c.b16 %v928, %v927
  %v986 = vpack.c.b16 %v930, %v929
  %v987 = vpack.c.b16 %v932, %v931
  %v988 = vpack.c.b16 %v934, %v933
  %v989 = vpack.c.b16 %v936, %v935
  %v990 = vpack.c.b16 %v938, %v937
  %v991 = vpack.c.b16 %v940, %v939
  %v992 = vpack.c.b16 %v942, %v941
  %v993 = vpack.c.b16 %v944, %v943
  %v994 = vpack.c.b16 %v946, %v945
  %v995 = vpack.c.b16 %v948, %v947
  %v996 = vpack.c.b16 %v950, %v949
  %v997 = vpack.c.b16 %v952, %v951
  %v998 = vpack.c.b16 %v954, %v953
  %v999 = vpack.c.b16 %v956, %v955
  %v1000 = vpack.c.b16 %v958, %v957
  %v1001 = vpack.c.b16 %v960, %v959
  %v1002 = vpack.c.b16 %v962, %v961
  %v1003 = vpack.c.b16 %v964, %v963
  %v1004 = vpack.c.b16 %v966, %v965
  %v1005 = vpack.c.b16 %v968, %v967
  %v1006 = vpack.c.b16 %v970, %v969
  %v1007 = vpack.c.b16 %v972, %v971
  %v1008 = vpack.c.b16 %v974, %v973
  %v1009 = vpack.c.b16 %v976, %v975
  %v1010 = vpack.c.b16 %v978, %v977
  %1043 = vmatprep.subr.bf16.mxu0 0
  %1044 = vmatpush1.bf16.msra.mxu0 %v986
  %1045 = vmatprep.subr.bf16.mxu0 0
  %1046 = vmatpush1.bf16.msra.mxu0 %v985
  %1047 = vmatprep.subr.bf16.mxu0 0
  %1048 = vmatpush1.bf16.msra.mxu0 %v984
  %1049 = vmatprep.subr.bf16.mxu0 0
  %1050 = vmatpush1.bf16.msra.mxu0 %v983
  %1051 = vmatprep.subr.bf16.mxu0 0
  %1052 = vmatpush1.bf16.msra.mxu0 %v982
  %1053 = vmatprep.subr.bf16.mxu0 0
  %1054 = vmatpush1.bf16.msra.mxu0 %v981
  %1055 = vmatprep.subr.bf16.mxu0 0
  %1056 = vmatpush1.bf16.msra.mxu0 %v980
  %1057 = vmatprep.subr.bf16.mxu0 0
  %1058 = vmatpush1.bf16.msra.mxu0 %v979
  %1059 = vmatprep.subr.bf16.mxu0 0
  %1060 = vmatpush2.bf16.msra.mxu0 %v994
  %1061 = vmatprep.subr.bf16.mxu0 0
  %1062 = vmatpush2.bf16.msra.mxu0 %v993
  %1063 = vmatprep.subr.bf16.mxu0 0
  %1064 = vmatpush2.bf16.msra.mxu0 %v992
  %1065 = vmatprep.subr.bf16.mxu0 0
  %1066 = vmatpush2.bf16.msra.mxu0 %v991
  %1067 = vmatprep.subr.bf16.mxu0 0
  %1068 = vmatpush2.bf16.msra.mxu0 %v990
  %1069 = vmatprep.subr.bf16.mxu0 0
  %1070 = vmatpush2.bf16.msra.mxu0 %v989
  %1071 = vmatprep.subr.bf16.mxu0 0
  %1072 = vmatpush2.bf16.msra.mxu0 %v988
  %1073 = vmatprep.subr.bf16.mxu0 0
  %1074 = vmatpush2.bf16.msra.mxu0 %v987
  %1075 = vmatprep.mubr.bf16.mxu0 %v447
  %1076 = vmatmul.mubr.bf16.gmra.mxu0 %v446
  %v1077 = vpop.f32.mrf.mxu0
  %v1078 = vadd.f32 0.0, %v1077
  %v1079 = vpop.f32.mrf.mxu0
  %v1080 = vpop.f32.mrf.mxu0
  %v1081 = vpop.f32.mrf.mxu0
  %1082 = vdwg.mxu0
  %1083 = vmatprep.subr.bf16.mxu0 0
  %1084 = vmatpush1.bf16.msra.mxu0 %v1002
  %1085 = vmatprep.subr.bf16.mxu0 0
  %1086 = vmatpush1.bf16.msra.mxu0 %v1001
  %1087 = vmatprep.subr.bf16.mxu0 0
  %1088 = vmatpush1.bf16.msra.mxu0 %v1000
  %1089 = vmatprep.subr.bf16.mxu0 0
  %1090 = vmatpush1.bf16.msra.mxu0 %v999
  %1091 = vmatprep.subr.bf16.mxu0 0
  %1092 = vmatpush1.bf16.msra.mxu0 %v998
  %1093 = vmatprep.subr.bf16.mxu0 0
  %1094 = vmatpush1.bf16.msra.mxu0 %v997
  %1095 = vmatprep.subr.bf16.mxu0 0
  %1096 = vmatpush1.bf16.msra.mxu0 %v996
  %1097 = vmatprep.subr.bf16.mxu0 0
  %1098 = vmatpush1.bf16.msra.mxu0 %v995
  %1099 = vmatprep.subr.bf16.mxu0 0
  %1100 = vmatpush2.bf16.msra.mxu0 %v1010
  %1101 = vmatprep.subr.bf16.mxu0 0
  %1102 = vmatpush2.bf16.msra.mxu0 %v1009
  %1103 = vmatprep.subr.bf16.mxu0 0
  %1104 = vmatpush2.bf16.msra.mxu0 %v1008
  %1105 = vmatprep.subr.bf16.mxu0 0
  %1106 = vmatpush2.bf16.msra.mxu0 %v1007
  %1107 = vmatprep.subr.bf16.mxu0 0
  %1108 = vmatpush2.bf16.msra.mxu0 %v1006
  %1109 = vmatprep.subr.bf16.mxu0 0
  %1110 = vmatpush2.bf16.msra.mxu0 %v1005
  %1111 = vmatprep.subr.bf16.mxu0 0
  %1112 = vmatpush2.bf16.msra.mxu0 %v1004
  %1113 = vmatprep.subr.bf16.mxu0 0
  %1114 = vmatpush2.bf16.msra.mxu0 %v1003
  %1115 = vmatprep.mubr.bf16.mxu0 %v449
  %1116 = vmatmul.mubr.bf16.gmra.mxu0 %v448
  %v1117 = vpop.f32.mrf.mxu0
  %v1118 = vadd.f32 %v1078, %v1117
  %v1119 = vpop.f32.mrf.mxu0
  %v1120 = vpop.f32.mrf.mxu0
  %v1121 = vpop.f32.mrf.mxu0
  %1122 = vdwg.mxu0
  %v1123 = vmax.f32 %v781, %v1118
  %s1124 = scalar_lea.vmem %s2, 512
  %v1125 = vld [vmem:[%s1124] sm:$0xf]
  %v1126 = vld [vmem:[%s1124 + $0x4] sm:$0xf]
  %v1127 = vld [vmem:[%s1124 + $0x8] sm:$0xf]
  %v1128 = vld [vmem:[%s1124 + $0xc] sm:$0xf]
  %v1129 = vld [vmem:[%s1124 + $0x10] sm:$0xf]
  %v1130 = vld [vmem:[%s1124 + $0x14] sm:$0xf]
  %v1131 = vld [vmem:[%s1124 + $0x18] sm:$0xf]
  %v1132 = vld [vmem:[%s1124 + $0x1c] sm:$0xf]
  %v1133 = vld [vmem:[%s1124 + $0x20] sm:$0xf]
  %v1134 = vld [vmem:[%s1124 + $0x24] sm:$0xf]
  %v1135 = vld [vmem:[%s1124 + $0x28] sm:$0xf]
  %v1136 = vld [vmem:[%s1124 + $0x2c] sm:$0xf]
  %v1137 = vld [vmem:[%s1124 + $0x30] sm:$0xf]
  %v1138 = vld [vmem:[%s1124 + $0x34] sm:$0xf]
  %v1139 = vld [vmem:[%s1124 + $0x38] sm:$0xf]
  %v1140 = vld [vmem:[%s1124 + $0x3c] sm:$0xf]
  %v1141 = vld [vmem:[%s1124 + $0x40] sm:$0xf]
  %v1142 = vld [vmem:[%s1124 + $0x44] sm:$0xf]
  %v1143 = vld [vmem:[%s1124 + $0x48] sm:$0xf]
  %v1144 = vld [vmem:[%s1124 + $0x4c] sm:$0xf]
  %v1145 = vld [vmem:[%s1124 + $0x50] sm:$0xf]
  %v1146 = vld [vmem:[%s1124 + $0x54] sm:$0xf]
  %v1147 = vld [vmem:[%s1124 + $0x58] sm:$0xf]
  %v1148 = vld [vmem:[%s1124 + $0x5c] sm:$0xf]
  %v1149 = vld [vmem:[%s1124 + $0x60] sm:$0xf]
  %v1150 = vld [vmem:[%s1124 + $0x64] sm:$0xf]
  %v1151 = vld [vmem:[%s1124 + $0x68] sm:$0xf]
  %v1152 = vld [vmem:[%s1124 + $0x6c] sm:$0xf]
  %v1153 = vld [vmem:[%s1124 + $0x70] sm:$0xf]
  %v1154 = vld [vmem:[%s1124 + $0x74] sm:$0xf]
  %v1155 = vld [vmem:[%s1124 + $0x78] sm:$0xf]
  %v1156 = vld [vmem:[%s1124 + $0x7c] sm:$0xf]
  %v1157 = vld [vmem:[%s1124 + $0x80] sm:$0xf]
  %v1158 = vld [vmem:[%s1124 + $0x84] sm:$0xf]
  %v1159 = vld [vmem:[%s1124 + $0x88] sm:$0xf]
  %v1160 = vld [vmem:[%s1124 + $0x8c] sm:$0xf]
  %v1161 = vld [vmem:[%s1124 + $0x90] sm:$0xf]
  %v1162 = vld [vmem:[%s1124 + $0x94] sm:$0xf]
  %v1163 = vld [vmem:[%s1124 + $0x98] sm:$0xf]
  %v1164 = vld [vmem:[%s1124 + $0x9c] sm:$0xf]
  %v1165 = vld [vmem:[%s1124 + $0xa0] sm:$0xf]
  %v1166 = vld [vmem:[%s1124 + $0xa4] sm:$0xf]
  %v1167 = vld [vmem:[%s1124 + $0xa8] sm:$0xf]
  %v1168 = vld [vmem:[%s1124 + $0xac] sm:$0xf]
  %v1169 = vld [vmem:[%s1124 + $0xb0] sm:$0xf]
  %v1170 = vld [vmem:[%s1124 + $0xb4] sm:$0xf]
  %v1171 = vld [vmem:[%s1124 + $0xb8] sm:$0xf]
  %v1172 = vld [vmem:[%s1124 + $0xbc] sm:$0xf]
  %v1173 = vld [vmem:[%s1124 + $0xc0] sm:$0xf]
  %v1174 = vld [vmem:[%s1124 + $0xc4] sm:$0xf]
  %v1175 = vld [vmem:[%s1124 + $0xc8] sm:$0xf]
  %v1176 = vld [vmem:[%s1124 + $0xcc] sm:$0xf]
  %v1177 = vld [vmem:[%s1124 + $0xd0] sm:$0xf]
  %v1178 = vld [vmem:[%s1124 + $0xd4] sm:$0xf]
  %v1179 = vld [vmem:[%s1124 + $0xd8] sm:$0xf]
  %v1180 = vld [vmem:[%s1124 + $0xdc] sm:$0xf]
  %v1181 = vld [vmem:[%s1124 + $0xe0] sm:$0xf]
  %v1182 = vld [vmem:[%s1124 + $0xe4] sm:$0xf]
  %v1183 = vld [vmem:[%s1124 + $0xe8] sm:$0xf]
  %v1184 = vld [vmem:[%s1124 + $0xec] sm:$0xf]
  %v1185 = vld [vmem:[%s1124 + $0xf0] sm:$0xf]
  %v1186 = vld [vmem:[%s1124 + $0xf4] sm:$0xf]
  %v1187 = vld [vmem:[%s1124 + $0xf8] sm:$0xf]
  %v1188 = vld [vmem:[%s1124 + $0xfc] sm:$0xf]
  %v1253 = vunpack.c.l.b16 %v1125
  %v1254 = vunpack.c.l.b16 %v1126
  %v1255 = vunpack.c.l.b16 %v1127
  %v1256 = vunpack.c.l.b16 %v1128
  %v1257 = vunpack.c.l.b16 %v1129
  %v1258 = vunpack.c.l.b16 %v1130
  %v1259 = vunpack.c.l.b16 %v1131
  %v1260 = vunpack.c.l.b16 %v1132
  %v1261 = vunpack.c.l.b16 %v1133
  %v1262 = vunpack.c.l.b16 %v1134
  %v1263 = vunpack.c.l.b16 %v1135
  %v1264 = vunpack.c.l.b16 %v1136
  %v1265 = vunpack.c.l.b16 %v1137
  %v1266 = vunpack.c.l.b16 %v1138
  %v1267 = vunpack.c.l.b16 %v1139
  %v1268 = vunpack.c.l.b16 %v1140
  %v1269 = vunpack.c.l.b16 %v1141
  %v1270 = vunpack.c.l.b16 %v1142
  %v1271 = vunpack.c.l.b16 %v1143
  %v1272 = vunpack.c.l.b16 %v1144
  %v1273 = vunpack.c.l.b16 %v1145
  %v1274 = vunpack.c.l.b16 %v1146
  %v1275 = vunpack.c.l.b16 %v1147
  %v1276 = vunpack.c.l.b16 %v1148
  %v1277 = vunpack.c.l.b16 %v1149
  %v1278 = vunpack.c.l.b16 %v1150
  %v1279 = vunpack.c.l.b16 %v1151
  %v1280 = vunpack.c.l.b16 %v1152
  %v1281 = vunpack.c.l.b16 %v1153
  %v1282 = vunpack.c.l.b16 %v1154
  %v1283 = vunpack.c.l.b16 %v1155
  %v1284 = vunpack.c.l.b16 %v1156
  %v1285 = vunpack.c.l.b16 %v1157
  %v1286 = vunpack.c.l.b16 %v1158
  %v1287 = vunpack.c.l.b16 %v1159
  %v1288 = vunpack.c.l.b16 %v1160
  %v1289 = vunpack.c.l.b16 %v1161
  %v1290 = vunpack.c.l.b16 %v1162
  %v1291 = vunpack.c.l.b16 %v1163
  %v1292 = vunpack.c.l.b16 %v1164
  %v1293 = vunpack.c.l.b16 %v1165
  %v1294 = vunpack.c.l.b16 %v1166
  %v1295 = vunpack.c.l.b16 %v1167
  %v1296 = vunpack.c.l.b16 %v1168
  %v1297 = vunpack.c.l.b16 %v1169
  %v1298 = vunpack.c.l.b16 %v1170
  %v1299 = vunpack.c.l.b16 %v1171
  %v1300 = vunpack.c.l.b16 %v1172
  %v1301 = vunpack.c.l.b16 %v1173
  %v1302 = vunpack.c.l.b16 %v1174
  %v1303 = vunpack.c.l.b16 %v1175
  %v1304 = vunpack.c.l.b16 %v1176
  %v1305 = vunpack.c.l.b16 %v1177
  %v1306 = vunpack.c.l.b16 %v1178
  %v1307 = vunpack.c.l.b16 %v1179
  %v1308 = vunpack.c.l.b16 %v1180
  %v1309 = vunpack.c.l.b16 %v1181
  %v1310 = vunpack.c.l.b16 %v1182
  %v1311 = vunpack.c.l.b16 %v1183
  %v1312 = vunpack.c.l.b16 %v1184
  %v1313 = vunpack.c.l.b16 %v1185
  %v1314 = vunpack.c.l.b16 %v1186
  %v1315 = vunpack.c.l.b16 %v1187
  %v1316 = vunpack.c.l.b16 %v1188
  %v1317 = vpack.c.b16 %v1254, %v1253
  %v1318 = vpack.c.b16 %v1256, %v1255
  %v1319 = vpack.c.b16 %v1258, %v1257
  %v1320 = vpack.c.b16 %v1260, %v1259
  %v1321 = vpack.c.b16 %v1262, %v1261
  %v1322 = vpack.c.b16 %v1264, %v1263
  %v1323 = vpack.c.b16 %v1266, %v1265
  %v1324 = vpack.c.b16 %v1268, %v1267
  %v1325 = vpack.c.b16 %v1270, %v1269
  %v1326 = vpack.c.b16 %v1272, %v1271
  %v1327 = vpack.c.b16 %v1274, %v1273
  %v1328 = vpack.c.b16 %v1276, %v1275
  %v1329 = vpack.c.b16 %v1278, %v1277
  %v1330 = vpack.c.b16 %v1280, %v1279
  %v1331 = vpack.c.b16 %v1282, %v1281
  %v1332 = vpack.c.b16 %v1284, %v1283
  %v1333 = vpack.c.b16 %v1286, %v1285
  %v1334 = vpack.c.b16 %v1288, %v1287
  %v1335 = vpack.c.b16 %v1290, %v1289
  %v1336 = vpack.c.b16 %v1292, %v1291
  %v1337 = vpack.c.b16 %v1294, %v1293
  %v1338 = vpack.c.b16 %v1296, %v1295
  %v1339 = vpack.c.b16 %v1298, %v1297
  %v1340 = vpack.c.b16 %v1300, %v1299
  %v1341 = vpack.c.b16 %v1302, %v1301
  %v1342 = vpack.c.b16 %v1304, %v1303
  %v1343 = vpack.c.b16 %v1306, %v1305
  %v1344 = vpack.c.b16 %v1308, %v1307
  %v1345 = vpack.c.b16 %v1310, %v1309
  %v1346 = vpack.c.b16 %v1312, %v1311
  %v1347 = vpack.c.b16 %v1314, %v1313
  %v1348 = vpack.c.b16 %v1316, %v1315
  %1381 = vmatprep.subr.bf16.mxu0 0
  %1382 = vmatpush1.bf16.msra.mxu0 %v1324
  %1383 = vmatprep.subr.bf16.mxu0 0
  %1384 = vmatpush1.bf16.msra.mxu0 %v1323
  %1385 = vmatprep.subr.bf16.mxu0 0
  %1386 = vmatpush1.bf16.msra.mxu0 %v1322
  %1387 = vmatprep.subr.bf16.mxu0 0
  %1388 = vmatpush1.bf16.msra.mxu0 %v1321
  %1389 = vmatprep.subr.bf16.mxu0 0
  %1390 = vmatpush1.bf16.msra.mxu0 %v1320
  %1391 = vmatprep.subr.bf16.mxu0 0
  %1392 = vmatpush1.bf16.msra.mxu0 %v1319
  %1393 = vmatprep.subr.bf16.mxu0 0
  %1394 = vmatpush1.bf16.msra.mxu0 %v1318
  %1395 = vmatprep.subr.bf16.mxu0 0
  %1396 = vmatpush1.bf16.msra.mxu0 %v1317
  %1397 = vmatprep.subr.bf16.mxu0 0
  %1398 = vmatpush2.bf16.msra.mxu0 %v1332
  %1399 = vmatprep.subr.bf16.mxu0 0
  %1400 = vmatpush2.bf16.msra.mxu0 %v1331
  %1401 = vmatprep.subr.bf16.mxu0 0
  %1402 = vmatpush2.bf16.msra.mxu0 %v1330
  %1403 = vmatprep.subr.bf16.mxu0 0
  %1404 = vmatpush2.bf16.msra.mxu0 %v1329
  %1405 = vmatprep.subr.bf16.mxu0 0
  %1406 = vmatpush2.bf16.msra.mxu0 %v1328
  %1407 = vmatprep.subr.bf16.mxu0 0
  %1408 = vmatpush2.bf16.msra.mxu0 %v1327
  %1409 = vmatprep.subr.bf16.mxu0 0
  %1410 = vmatpush2.bf16.msra.mxu0 %v1326
  %1411 = vmatprep.subr.bf16.mxu0 0
  %1412 = vmatpush2.bf16.msra.mxu0 %v1325
  %1413 = vmatprep.mubr.bf16.mxu0 %v447
  %1414 = vmatmul.mubr.bf16.gmra.mxu0 %v446
  %v1415 = vpop.f32.mrf.mxu0
  %v1416 = vadd.f32 0.0, %v1415
  %v1417 = vpop.f32.mrf.mxu0
  %v1418 = vpop.f32.mrf.mxu0
  %v1419 = vpop.f32.mrf.mxu0
  %1420 = vdwg.mxu0
  %1421 = vmatprep.subr.bf16.mxu0 0
  %1422 = vmatpush1.bf16.msra.mxu0 %v1340
  %1423 = vmatprep.subr.bf16.mxu0 0
  %1424 = vmatpush1.bf16.msra.mxu0 %v1339
  %1425 = vmatprep.subr.bf16.mxu0 0
  %1426 = vmatpush1.bf16.msra.mxu0 %v1338
  %1427 = vmatprep.subr.bf16.mxu0 0
  %1428 = vmatpush1.bf16.msra.mxu0 %v1337
  %1429 = vmatprep.subr.bf16.mxu0 0
  %1430 = vmatpush1.bf16.msra.mxu0 %v1336
  %1431 = vmatprep.subr.bf16.mxu0 0
  %1432 = vmatpush1.bf16.msra.mxu0 %v1335
  %1433 = vmatprep.subr.bf16.mxu0 0
  %1434 = vmatpush1.bf16.msra.mxu0 %v1334
  %1435 = vmatprep.subr.bf16.mxu0 0
  %1436 = vmatpush1.bf16.msra.mxu0 %v1333
  %1437 = vmatprep.subr.bf16.mxu0 0
  %1438 = vmatpush2.bf16.msra.mxu0 %v1348
  %1439 = vmatprep.subr.bf16.mxu0 0
  %1440 = vmatpush2.bf16.msra.mxu0 %v1347
  %1441 = vmatprep.subr.bf16.mxu0 0
  %1442 = vmatpush2.bf16.msra.mxu0 %v1346
  %1443 = vmatprep.subr.bf16.mxu0 0
  %1444 = vmatpush2.bf16.msra.mxu0 %v1345
  %1445 = vmatprep.subr.bf16.mxu0 0
  %1446 = vmatpush2.bf16.msra.mxu0 %v1344
  %1447 = vmatprep.subr.bf16.mxu0 0
  %1448 = vmatpush2.bf16.msra.mxu0 %v1343
  %1449 = vmatprep.subr.bf16.mxu0 0
  %1450 = vmatpush2.bf16.msra.mxu0 %v1342
  %1451 = vmatprep.subr.bf16.mxu0 0
  %1452 = vmatpush2.bf16.msra.mxu0 %v1341
  %1453 = vmatprep.mubr.bf16.mxu0 %v449
  %1454 = vmatmul.mubr.bf16.gmra.mxu0 %v448
  %v1455 = vpop.f32.mrf.mxu0
  %v1456 = vadd.f32 %v1416, %v1455
  %v1457 = vpop.f32.mrf.mxu0
  %v1458 = vpop.f32.mrf.mxu0
  %v1459 = vpop.f32.mrf.mxu0
  %1460 = vdwg.mxu0
  %v1461 = vmax.f32 %v1123, %v1456
  %s1462 = scalar_lea.vmem %s2, 768
  %v1463 = vld [vmem:[%s1462] sm:$0xf]
  %v1464 = vld [vmem:[%s1462 + $0x4] sm:$0xf]
  %v1465 = vld [vmem:[%s1462 + $0x8] sm:$0xf]
  %v1466 = vld [vmem:[%s1462 + $0xc] sm:$0xf]
  %v1467 = vld [vmem:[%s1462 + $0x10] sm:$0xf]
  %v1468 = vld [vmem:[%s1462 + $0x14] sm:$0xf]
  %v1469 = vld [vmem:[%s1462 + $0x18] sm:$0xf]
  %v1470 = vld [vmem:[%s1462 + $0x1c] sm:$0xf]
  %v1471 = vld [vmem:[%s1462 + $0x20] sm:$0xf]
  %v1472 = vld [vmem:[%s1462 + $0x24] sm:$0xf]
  %v1473 = vld [vmem:[%s1462 + $0x28] sm:$0xf]
  %v1474 = vld [vmem:[%s1462 + $0x2c] sm:$0xf]
  %v1475 = vld [vmem:[%s1462 + $0x30] sm:$0xf]
  %v1476 = vld [vmem:[%s1462 + $0x34] sm:$0xf]
  %v1477 = vld [vmem:[%s1462 + $0x38] sm:$0xf]
  %v1478 = vld [vmem:[%s1462 + $0x3c] sm:$0xf]
  %v1479 = vld [vmem:[%s1462 + $0x40] sm:$0xf]
  %v1480 = vld [vmem:[%s1462 + $0x44] sm:$0xf]
  %v1481 = vld [vmem:[%s1462 + $0x48] sm:$0xf]
  %v1482 = vld [vmem:[%s1462 + $0x4c] sm:$0xf]
  %v1483 = vld [vmem:[%s1462 + $0x50] sm:$0xf]
  %v1484 = vld [vmem:[%s1462 + $0x54] sm:$0xf]
  %v1485 = vld [vmem:[%s1462 + $0x58] sm:$0xf]
  %v1486 = vld [vmem:[%s1462 + $0x5c] sm:$0xf]
  %v1487 = vld [vmem:[%s1462 + $0x60] sm:$0xf]
  %v1488 = vld [vmem:[%s1462 + $0x64] sm:$0xf]
  %v1489 = vld [vmem:[%s1462 + $0x68] sm:$0xf]
  %v1490 = vld [vmem:[%s1462 + $0x6c] sm:$0xf]
  %v1491 = vld [vmem:[%s1462 + $0x70] sm:$0xf]
  %v1492 = vld [vmem:[%s1462 + $0x74] sm:$0xf]
  %v1493 = vld [vmem:[%s1462 + $0x78] sm:$0xf]
  %v1494 = vld [vmem:[%s1462 + $0x7c] sm:$0xf]
  %v1495 = vld [vmem:[%s1462 + $0x80] sm:$0xf]
  %v1496 = vld [vmem:[%s1462 + $0x84] sm:$0xf]
  %v1497 = vld [vmem:[%s1462 + $0x88] sm:$0xf]
  %v1498 = vld [vmem:[%s1462 + $0x8c] sm:$0xf]
  %v1499 = vld [vmem:[%s1462 + $0x90] sm:$0xf]
  %v1500 = vld [vmem:[%s1462 + $0x94] sm:$0xf]
  %v1501 = vld [vmem:[%s1462 + $0x98] sm:$0xf]
  %v1502 = vld [vmem:[%s1462 + $0x9c] sm:$0xf]
  %v1503 = vld [vmem:[%s1462 + $0xa0] sm:$0xf]
  %v1504 = vld [vmem:[%s1462 + $0xa4] sm:$0xf]
  %v1505 = vld [vmem:[%s1462 + $0xa8] sm:$0xf]
  %v1506 = vld [vmem:[%s1462 + $0xac] sm:$0xf]
  %v1507 = vld [vmem:[%s1462 + $0xb0] sm:$0xf]
  %v1508 = vld [vmem:[%s1462 + $0xb4] sm:$0xf]
  %v1509 = vld [vmem:[%s1462 + $0xb8] sm:$0xf]
  %v1510 = vld [vmem:[%s1462 + $0xbc] sm:$0xf]
  %v1511 = vld [vmem:[%s1462 + $0xc0] sm:$0xf]
  %v1512 = vld [vmem:[%s1462 + $0xc4] sm:$0xf]
  %v1513 = vld [vmem:[%s1462 + $0xc8] sm:$0xf]
  %v1514 = vld [vmem:[%s1462 + $0xcc] sm:$0xf]
  %v1515 = vld [vmem:[%s1462 + $0xd0] sm:$0xf]
  %v1516 = vld [vmem:[%s1462 + $0xd4] sm:$0xf]
  %v1517 = vld [vmem:[%s1462 + $0xd8] sm:$0xf]
  %v1518 = vld [vmem:[%s1462 + $0xdc] sm:$0xf]
  %v1519 = vld [vmem:[%s1462 + $0xe0] sm:$0xf]
  %v1520 = vld [vmem:[%s1462 + $0xe4] sm:$0xf]
  %v1521 = vld [vmem:[%s1462 + $0xe8] sm:$0xf]
  %v1522 = vld [vmem:[%s1462 + $0xec] sm:$0xf]
  %v1523 = vld [vmem:[%s1462 + $0xf0] sm:$0xf]
  %v1524 = vld [vmem:[%s1462 + $0xf4] sm:$0xf]
  %v1525 = vld [vmem:[%s1462 + $0xf8] sm:$0xf]
  %v1526 = vld [vmem:[%s1462 + $0xfc] sm:$0xf]
  %v1591 = vunpack.c.l.b16 %v1463
  %v1592 = vunpack.c.l.b16 %v1464
  %v1593 = vunpack.c.l.b16 %v1465
  %v1594 = vunpack.c.l.b16 %v1466
  %v1595 = vunpack.c.l.b16 %v1467
  %v1596 = vunpack.c.l.b16 %v1468
  %v1597 = vunpack.c.l.b16 %v1469
  %v1598 = vunpack.c.l.b16 %v1470
  %v1599 = vunpack.c.l.b16 %v1471
  %v1600 = vunpack.c.l.b16 %v1472
  %v1601 = vunpack.c.l.b16 %v1473
  %v1602 = vunpack.c.l.b16 %v1474
  %v1603 = vunpack.c.l.b16 %v1475
  %v1604 = vunpack.c.l.b16 %v1476
  %v1605 = vunpack.c.l.b16 %v1477
  %v1606 = vunpack.c.l.b16 %v1478
  %v1607 = vunpack.c.l.b16 %v1479
  %v1608 = vunpack.c.l.b16 %v1480
  %v1609 = vunpack.c.l.b16 %v1481
  %v1610 = vunpack.c.l.b16 %v1482
  %v1611 = vunpack.c.l.b16 %v1483
  %v1612 = vunpack.c.l.b16 %v1484
  %v1613 = vunpack.c.l.b16 %v1485
  %v1614 = vunpack.c.l.b16 %v1486
  %v1615 = vunpack.c.l.b16 %v1487
  %v1616 = vunpack.c.l.b16 %v1488
  %v1617 = vunpack.c.l.b16 %v1489
  %v1618 = vunpack.c.l.b16 %v1490
  %v1619 = vunpack.c.l.b16 %v1491
  %v1620 = vunpack.c.l.b16 %v1492
  %v1621 = vunpack.c.l.b16 %v1493
  %v1622 = vunpack.c.l.b16 %v1494
  %v1623 = vunpack.c.l.b16 %v1495
  %v1624 = vunpack.c.l.b16 %v1496
  %v1625 = vunpack.c.l.b16 %v1497
  %v1626 = vunpack.c.l.b16 %v1498
  %v1627 = vunpack.c.l.b16 %v1499
  %v1628 = vunpack.c.l.b16 %v1500
  %v1629 = vunpack.c.l.b16 %v1501
  %v1630 = vunpack.c.l.b16 %v1502
  %v1631 = vunpack.c.l.b16 %v1503
  %v1632 = vunpack.c.l.b16 %v1504
  %v1633 = vunpack.c.l.b16 %v1505
  %v1634 = vunpack.c.l.b16 %v1506
  %v1635 = vunpack.c.l.b16 %v1507
  %v1636 = vunpack.c.l.b16 %v1508
  %v1637 = vunpack.c.l.b16 %v1509
  %v1638 = vunpack.c.l.b16 %v1510
  %v1639 = vunpack.c.l.b16 %v1511
  %v1640 = vunpack.c.l.b16 %v1512
  %v1641 = vunpack.c.l.b16 %v1513
  %v1642 = vunpack.c.l.b16 %v1514
  %v1643 = vunpack.c.l.b16 %v1515
  %v1644 = vunpack.c.l.b16 %v1516
  %v1645 = vunpack.c.l.b16 %v1517
  %v1646 = vunpack.c.l.b16 %v1518
  %v1647 = vunpack.c.l.b16 %v1519
  %v1648 = vunpack.c.l.b16 %v1520
  %v1649 = vunpack.c.l.b16 %v1521
  %v1650 = vunpack.c.l.b16 %v1522
  %v1651 = vunpack.c.l.b16 %v1523
  %v1652 = vunpack.c.l.b16 %v1524
  %v1653 = vunpack.c.l.b16 %v1525
  %v1654 = vunpack.c.l.b16 %v1526
  %v1655 = vpack.c.b16 %v1592, %v1591
  %v1656 = vpack.c.b16 %v1594, %v1593
  %v1657 = vpack.c.b16 %v1596, %v1595
  %v1658 = vpack.c.b16 %v1598, %v1597
  %v1659 = vpack.c.b16 %v1600, %v1599
  %v1660 = vpack.c.b16 %v1602, %v1601
  %v1661 = vpack.c.b16 %v1604, %v1603
  %v1662 = vpack.c.b16 %v1606, %v1605
  %v1663 = vpack.c.b16 %v1608, %v1607
  %v1664 = vpack.c.b16 %v1610, %v1609
  %v1665 = vpack.c.b16 %v1612, %v1611
  %v1666 = vpack.c.b16 %v1614, %v1613
  %v1667 = vpack.c.b16 %v1616, %v1615
  %v1668 = vpack.c.b16 %v1618, %v1617
  %v1669 = vpack.c.b16 %v1620, %v1619
  %v1670 = vpack.c.b16 %v1622, %v1621
  %v1671 = vpack.c.b16 %v1624, %v1623
  %v1672 = vpack.c.b16 %v1626, %v1625
  %v1673 = vpack.c.b16 %v1628, %v1627
  %v1674 = vpack.c.b16 %v1630, %v1629
  %v1675 = vpack.c.b16 %v1632, %v1631
  %v1676 = vpack.c.b16 %v1634, %v1633
  %v1677 = vpack.c.b16 %v1636, %v1635
  %v1678 = vpack.c.b16 %v1638, %v1637
  %v1679 = vpack.c.b16 %v1640, %v1639
  %v1680 = vpack.c.b16 %v1642, %v1641
  %v1681 = vpack.c.b16 %v1644, %v1643
  %v1682 = vpack.c.b16 %v1646, %v1645
  %v1683 = vpack.c.b16 %v1648, %v1647
  %v1684 = vpack.c.b16 %v1650, %v1649
  %v1685 = vpack.c.b16 %v1652, %v1651
  %v1686 = vpack.c.b16 %v1654, %v1653
  %1719 = vmatprep.subr.bf16.mxu0 0
  %1720 = vmatpush1.bf16.msra.mxu0 %v1662
  %1721 = vmatprep.subr.bf16.mxu0 0
  %1722 = vmatpush1.bf16.msra.mxu0 %v1661
  %1723 = vmatprep.subr.bf16.mxu0 0
  %1724 = vmatpush1.bf16.msra.mxu0 %v1660
  %1725 = vmatprep.subr.bf16.mxu0 0
  %1726 = vmatpush1.bf16.msra.mxu0 %v1659
  %1727 = vmatprep.subr.bf16.mxu0 0
  %1728 = vmatpush1.bf16.msra.mxu0 %v1658
  %1729 = vmatprep.subr.bf16.mxu0 0
  %1730 = vmatpush1.bf16.msra.mxu0 %v1657
  %1731 = vmatprep.subr.bf16.mxu0 0
  %1732 = vmatpush1.bf16.msra.mxu0 %v1656
  %1733 = vmatprep.subr.bf16.mxu0 0
  %1734 = vmatpush1.bf16.msra.mxu0 %v1655
  %1735 = vmatprep.subr.bf16.mxu0 0
  %1736 = vmatpush2.bf16.msra.mxu0 %v1670
  %1737 = vmatprep.subr.bf16.mxu0 0
  %1738 = vmatpush2.bf16.msra.mxu0 %v1669
  %1739 = vmatprep.subr.bf16.mxu0 0
  %1740 = vmatpush2.bf16.msra.mxu0 %v1668
  %1741 = vmatprep.subr.bf16.mxu0 0
  %1742 = vmatpush2.bf16.msra.mxu0 %v1667
  %1743 = vmatprep.subr.bf16.mxu0 0
  %1744 = vmatpush2.bf16.msra.mxu0 %v1666
  %1745 = vmatprep.subr.bf16.mxu0 0
  %1746 = vmatpush2.bf16.msra.mxu0 %v1665
  %1747 = vmatprep.subr.bf16.mxu0 0
  %1748 = vmatpush2.bf16.msra.mxu0 %v1664
  %1749 = vmatprep.subr.bf16.mxu0 0
  %1750 = vmatpush2.bf16.msra.mxu0 %v1663
  %1751 = vmatprep.mubr.bf16.mxu0 %v447
  %1752 = vmatmul.mubr.bf16.gmra.mxu0 %v446
  %v1753 = vpop.f32.mrf.mxu0
  %v1754 = vadd.f32 0.0, %v1753
  %v1755 = vpop.f32.mrf.mxu0
  %v1756 = vpop.f32.mrf.mxu0
  %v1757 = vpop.f32.mrf.mxu0
  %1758 = vdwg.mxu0
  %1759 = vmatprep.subr.bf16.mxu0 0
  %1760 = vmatpush1.bf16.msra.mxu0 %v1678
  %1761 = vmatprep.subr.bf16.mxu0 0
  %1762 = vmatpush1.bf16.msra.mxu0 %v1677
  %1763 = vmatprep.subr.bf16.mxu0 0
  %1764 = vmatpush1.bf16.msra.mxu0 %v1676
  %1765 = vmatprep.subr.bf16.mxu0 0
  %1766 = vmatpush1.bf16.msra.mxu0 %v1675
  %1767 = vmatprep.subr.bf16.mxu0 0
  %1768 = vmatpush1.bf16.msra.mxu0 %v1674
  %1769 = vmatprep.subr.bf16.mxu0 0
  %1770 = vmatpush1.bf16.msra.mxu0 %v1673
  %1771 = vmatprep.subr.bf16.mxu0 0
  %1772 = vmatpush1.bf16.msra.mxu0 %v1672
  %1773 = vmatprep.subr.bf16.mxu0 0
  %1774 = vmatpush1.bf16.msra.mxu0 %v1671
  %1775 = vmatprep.subr.bf16.mxu0 0
  %1776 = vmatpush2.bf16.msra.mxu0 %v1686
  %1777 = vmatprep.subr.bf16.mxu0 0
  %1778 = vmatpush2.bf16.msra.mxu0 %v1685
  %1779 = vmatprep.subr.bf16.mxu0 0
  %1780 = vmatpush2.bf16.msra.mxu0 %v1684
  %1781 = vmatprep.subr.bf16.mxu0 0
  %1782 = vmatpush2.bf16.msra.mxu0 %v1683
  %1783 = vmatprep.subr.bf16.mxu0 0
  %1784 = vmatpush2.bf16.msra.mxu0 %v1682
  %1785 = vmatprep.subr.bf16.mxu0 0
  %1786 = vmatpush2.bf16.msra.mxu0 %v1681
  %1787 = vmatprep.subr.bf16.mxu0 0
  %1788 = vmatpush2.bf16.msra.mxu0 %v1680
  %1789 = vmatprep.subr.bf16.mxu0 0
  %1790 = vmatpush2.bf16.msra.mxu0 %v1679
  %1791 = vmatprep.mubr.bf16.mxu0 %v449
  %1792 = vmatmul.mubr.bf16.gmra.mxu0 %v448
  %v1793 = vpop.f32.mrf.mxu0
  %v1794 = vadd.f32 %v1754, %v1793
  %v1795 = vpop.f32.mrf.mxu0
  %v1796 = vpop.f32.mrf.mxu0
  %v1797 = vpop.f32.mrf.mxu0
  %1798 = vdwg.mxu0
  %v1799 = vmax.f32 %v1461, %v1794
  %v1800 = vld [vmem:[%s3] sm:$0x3]
  %v1801 = vpack.c.bf16 %v1799, %v1799
  %1802 = vset.pattern.permute.xlu0 3
  %1803 = vperm.xlu0 %1802, %v428
  %v1804 = vpop.permute.xlu0 %1803
  %vm1806 = vcmask 31744
  %v1808 = vsel %vm1806, %v1800, 0
  %vm1810 = vcmask 1041408
  %v1812 = vsel %vm1810, %v1801, 0
  %1814 = vmatprep.subr.bf16.mxu0 0
  %1815 = vmatpush1.bf16.msra.mxu0 0
  %1816 = vmatprep.subr.bf16.mxu0 0
  %1817 = vmatpush1.bf16.msra.mxu0 0
  %1818 = vmatprep.subr.bf16.mxu0 0
  %1819 = vmatpush1.bf16.msra.mxu0 0
  %1820 = vmatprep.subr.bf16.mxu0 0
  %1821 = vmatpush1.bf16.msra.mxu0 0
  %1822 = vmatprep.subr.bf16.mxu0 0
  %1823 = vmatpush1.bf16.msra.mxu0 0
  %1824 = vmatprep.subr.bf16.mxu0 0
  %1825 = vmatpush1.bf16.msra.mxu0 0
  %1826 = vmatprep.subr.bf16.mxu0 0
  %1827 = vmatpush1.bf16.msra.mxu0 0
  %1828 = vmatprep.subr.bf16.mxu0 0
  %1829 = vmatpush1.bf16.msra.mxu0 %v1812
  %1830 = vmatprep.subr.bf16.mxu0 0
  %1831 = vmatpush2.bf16.msra.mxu0 0
  %1832 = vmatprep.subr.bf16.mxu0 0
  %1833 = vmatpush2.bf16.msra.mxu0 0
  %1834 = vmatprep.subr.bf16.mxu0 0
  %1835 = vmatpush2.bf16.msra.mxu0 0
  %1836 = vmatprep.subr.bf16.mxu0 0
  %1837 = vmatpush2.bf16.msra.mxu0 0
  %1838 = vmatprep.subr.bf16.mxu0 0
  %1839 = vmatpush2.bf16.msra.mxu0 0
  %1840 = vmatprep.subr.bf16.mxu0 0
  %1841 = vmatpush2.bf16.msra.mxu0 0
  %1842 = vmatprep.subr.bf16.mxu0 0
  %1843 = vmatpush2.bf16.msra.mxu0 0
  %1844 = vmatprep.subr.bf16.mxu0 0
  %1845 = vmatpush2.bf16.msra.mxu0 0
  %1846 = vmatprep.mubr.bf16.mxu0 0
  %1847 = vmatmul.mubr.bf16.gmra.mxu0 %v1808
  %v1848 = vpop.f32.mrf.mxu0
  %v1849 = vadd.f32 %v1804, %v1848
  %v1850 = vpop.f32.mrf.mxu0
  %v1851 = vpop.f32.mrf.mxu0
  %v1852 = vpop.f32.mrf.mxu0
  %1853 = vdwg.mxu0
  %vm1854 = vcmp.ge.f32.partialorder %v1849, 0.0
  %v1855 = vmul.f32 %v1849, 0.1
  %v1856 = vsel %vm1854, %v1849, %v1855
  %1857 = vset.pattern.permute.xlu0 4
  %1858 = vperm.xlu0 %1857, %v428
  %v1859 = vpop.permute.xlu0 %1858
  %v1861 = vmul.f32 %v1856, %v1859
  %1862 = vset.pattern.permute.xlu0 5
  %1863 = vperm.xlu0 %1862, %v428
  %v1864 = vpop.permute.xlu0 %1863
  %v1866 = vadd.f32 %v1861, %v1864
  %v1867 = vpack.c.bf16 %v1866, %v1866
  %v1868 = vld [vmem:[%s4] sm:$0xf]
  %v1869 = vld [vmem:[%s4 + $0x4] sm:$0xf]
  %v1870 = vld [vmem:[%s4 + $0x8] sm:$0xf]
  %v1871 = vld [vmem:[%s4 + $0xc] sm:$0xf]
  %v1872 = vld [vmem:[%s4 + $0x10] sm:$0xf]
  %v1873 = vld [vmem:[%s4 + $0x14] sm:$0xf]
  %v1874 = vld [vmem:[%s4 + $0x18] sm:$0xf]
  %v1875 = vld [vmem:[%s4 + $0x1c] sm:$0xf]
  %v1876 = vld [vmem:[%s4 + $0x20] sm:$0xf]
  %v1877 = vld [vmem:[%s4 + $0x24] sm:$0xf]
  %v1878 = vld [vmem:[%s4 + $0x28] sm:$0xf]
  %v1879 = vld [vmem:[%s4 + $0x2c] sm:$0xf]
  %v1880 = vld [vmem:[%s4 + $0x30] sm:$0xf]
  %v1881 = vld [vmem:[%s4 + $0x34] sm:$0xf]
  %v1882 = vld [vmem:[%s4 + $0x38] sm:$0xf]
  %v1883 = vld [vmem:[%s4 + $0x3c] sm:$0xf]
  %v1900 = vunpack.c.l.b16 %v1868
  %v1901 = vunpack.c.l.b16 %v1869
  %v1902 = vunpack.c.l.b16 %v1870
  %v1903 = vunpack.c.l.b16 %v1871
  %v1904 = vunpack.c.l.b16 %v1872
  %v1905 = vunpack.c.l.b16 %v1873
  %v1906 = vunpack.c.l.b16 %v1874
  %v1907 = vunpack.c.l.b16 %v1875
  %v1908 = vunpack.c.l.b16 %v1876
  %v1909 = vunpack.c.l.b16 %v1877
  %v1910 = vunpack.c.l.b16 %v1878
  %v1911 = vunpack.c.l.b16 %v1879
  %v1912 = vunpack.c.l.b16 %v1880
  %v1913 = vunpack.c.l.b16 %v1881
  %v1914 = vunpack.c.l.b16 %v1882
  %v1915 = vunpack.c.l.b16 %v1883
  %v1916 = vpack.c.b16 %v1901, %v1900
  %v1917 = vpack.c.b16 %v1903, %v1902
  %v1918 = vpack.c.b16 %v1905, %v1904
  %v1919 = vpack.c.b16 %v1907, %v1906
  %v1920 = vpack.c.b16 %v1909, %v1908
  %v1921 = vpack.c.b16 %v1911, %v1910
  %v1922 = vpack.c.b16 %v1913, %v1912
  %v1923 = vpack.c.b16 %v1915, %v1914
  %1932 = vmatprep.subr.bf16.mxu0 0
  %1933 = vmatpush1.bf16.msra.mxu0 %v1923
  %1934 = vmatprep.subr.bf16.mxu0 0
  %1935 = vmatpush1.bf16.msra.mxu0 %v1922
  %1936 = vmatprep.subr.bf16.mxu0 0
  %1937 = vmatpush1.bf16.msra.mxu0 %v1921
  %1938 = vmatprep.subr.bf16.mxu0 0
  %1939 = vmatpush1.bf16.msra.mxu0 %v1920
  %1940 = vmatprep.subr.bf16.mxu0 0
  %1941 = vmatpush1.bf16.msra.mxu0 %v1919
  %1942 = vmatprep.subr.bf16.mxu0 0
  %1943 = vmatpush1.bf16.msra.mxu0 %v1918
  %1944 = vmatprep.subr.bf16.mxu0 0
  %1945 = vmatpush1.bf16.msra.mxu0 %v1917
  %1946 = vmatprep.subr.bf16.mxu0 0
  %1947 = vmatpush1.bf16.msra.mxu0 %v1916
  %1948 = vmatprep.subr.bf16.mxu0 0
  %1949 = vmatpush2.bf16.msra.mxu0 0
  %1950 = vmatprep.subr.bf16.mxu0 0
  %1951 = vmatpush2.bf16.msra.mxu0 0
  %1952 = vmatprep.subr.bf16.mxu0 0
  %1953 = vmatpush2.bf16.msra.mxu0 0
  %1954 = vmatprep.subr.bf16.mxu0 0
  %1955 = vmatpush2.bf16.msra.mxu0 0
  %1956 = vmatprep.subr.bf16.mxu0 0
  %1957 = vmatpush2.bf16.msra.mxu0 0
  %1958 = vmatprep.subr.bf16.mxu0 0
  %1959 = vmatpush2.bf16.msra.mxu0 0
  %1960 = vmatprep.subr.bf16.mxu0 0
  %1961 = vmatpush2.bf16.msra.mxu0 0
  %1962 = vmatprep.subr.bf16.mxu0 0
  %1963 = vmatpush2.bf16.msra.mxu0 0
  %1964 = vmatprep.mubr.bf16.mxu0 0
  %1965 = vmatmul.mubr.bf16.gmra.mxu0 %v1867
  %v1966 = vpop.f32.mrf.mxu0
  %v1967 = vadd.f32 0.0, %v1966
  %v1968 = vpop.f32.mrf.mxu0
  %v1969 = vpop.f32.mrf.mxu0
  %v1970 = vpop.f32.mrf.mxu0
  %1971 = vdwg.mxu0
  %s1972 = scalar_lea.vmem %s4, 64
  %v1973 = vld [vmem:[%s1972] sm:$0xf]
  %v1974 = vld [vmem:[%s1972 + $0x4] sm:$0xf]
  %v1975 = vld [vmem:[%s1972 + $0x8] sm:$0xf]
  %v1976 = vld [vmem:[%s1972 + $0xc] sm:$0xf]
  %v1977 = vld [vmem:[%s1972 + $0x10] sm:$0xf]
  %v1978 = vld [vmem:[%s1972 + $0x14] sm:$0xf]
  %v1979 = vld [vmem:[%s1972 + $0x18] sm:$0xf]
  %v1980 = vld [vmem:[%s1972 + $0x1c] sm:$0xf]
  %v1981 = vld [vmem:[%s1972 + $0x20] sm:$0xf]
  %v1982 = vld [vmem:[%s1972 + $0x24] sm:$0xf]
  %v1983 = vld [vmem:[%s1972 + $0x28] sm:$0xf]
  %v1984 = vld [vmem:[%s1972 + $0x2c] sm:$0xf]
  %v1985 = vld [vmem:[%s1972 + $0x30] sm:$0xf]
  %v1986 = vld [vmem:[%s1972 + $0x34] sm:$0xf]
  %v1987 = vld [vmem:[%s1972 + $0x38] sm:$0xf]
  %v1988 = vld [vmem:[%s1972 + $0x3c] sm:$0xf]
  %v2005 = vunpack.c.l.b16 %v1973
  %v2006 = vunpack.c.l.b16 %v1974
  %v2007 = vunpack.c.l.b16 %v1975
  %v2008 = vunpack.c.l.b16 %v1976
  %v2009 = vunpack.c.l.b16 %v1977
  %v2010 = vunpack.c.l.b16 %v1978
  %v2011 = vunpack.c.l.b16 %v1979
  %v2012 = vunpack.c.l.b16 %v1980
  %v2013 = vunpack.c.l.b16 %v1981
  %v2014 = vunpack.c.l.b16 %v1982
  %v2015 = vunpack.c.l.b16 %v1983
  %v2016 = vunpack.c.l.b16 %v1984
  %v2017 = vunpack.c.l.b16 %v1985
  %v2018 = vunpack.c.l.b16 %v1986
  %v2019 = vunpack.c.l.b16 %v1987
  %v2020 = vunpack.c.l.b16 %v1988
  %v2021 = vpack.c.b16 %v2006, %v2005
  %v2022 = vpack.c.b16 %v2008, %v2007
  %v2023 = vpack.c.b16 %v2010, %v2009
  %v2024 = vpack.c.b16 %v2012, %v2011
  %v2025 = vpack.c.b16 %v2014, %v2013
  %v2026 = vpack.c.b16 %v2016, %v2015
  %v2027 = vpack.c.b16 %v2018, %v2017
  %v2028 = vpack.c.b16 %v2020, %v2019
  %2037 = vmatprep.subr.bf16.mxu0 0
  %2038 = vmatpush1.bf16.msra.mxu0 %v2028
  %2039 = vmatprep.subr.bf16.mxu0 0
  %2040 = vmatpush1.bf16.msra.mxu0 %v2027
  %2041 = vmatprep.subr.bf16.mxu0 0
  %2042 = vmatpush1.bf16.msra.mxu0 %v2026
  %2043 = vmatprep.subr.bf16.mxu0 0
  %2044 = vmatpush1.bf16.msra.mxu0 %v2025
  %2045 = vmatprep.subr.bf16.mxu0 0
  %2046 = vmatpush1.bf16.msra.mxu0 %v2024
  %2047 = vmatprep.subr.bf16.mxu0 0
  %2048 = vmatpush1.bf16.msra.mxu0 %v2023
  %2049 = vmatprep.subr.bf16.mxu0 0
  %2050 = vmatpush1.bf16.msra.mxu0 %v2022
  %2051 = vmatprep.subr.bf16.mxu0 0
  %2052 = vmatpush1.bf16.msra.mxu0 %v2021
  %2053 = vmatprep.subr.bf16.mxu0 0
  %2054 = vmatpush2.bf16.msra.mxu0 0
  %2055 = vmatprep.subr.bf16.mxu0 0
  %2056 = vmatpush2.bf16.msra.mxu0 0
  %2057 = vmatprep.subr.bf16.mxu0 0
  %2058 = vmatpush2.bf16.msra.mxu0 0
  %2059 = vmatprep.subr.bf16.mxu0 0
  %2060 = vmatpush2.bf16.msra.mxu0 0
  %2061 = vmatprep.subr.bf16.mxu0 0
  %2062 = vmatpush2.bf16.msra.mxu0 0
  %2063 = vmatprep.subr.bf16.mxu0 0
  %2064 = vmatpush2.bf16.msra.mxu0 0
  %2065 = vmatprep.subr.bf16.mxu0 0
  %2066 = vmatpush2.bf16.msra.mxu0 0
  %2067 = vmatprep.subr.bf16.mxu0 0
  %2068 = vmatpush2.bf16.msra.mxu0 0
  %2069 = vmatprep.mubr.bf16.mxu0 0
  %2070 = vmatmul.mubr.bf16.gmra.mxu0 %v1867
  %v2071 = vpop.f32.mrf.mxu0
  %v2072 = vadd.f32 0.0, %v2071
  %v2073 = vpop.f32.mrf.mxu0
  %v2074 = vpop.f32.mrf.mxu0
  %v2075 = vpop.f32.mrf.mxu0
  %2076 = vdwg.mxu0
  %v2077 = vmax.f32 %v1967, %v2072
  %s2078 = scalar_lea.vmem %s4, 128
  %v2079 = vld [vmem:[%s2078] sm:$0xf]
  %v2080 = vld [vmem:[%s2078 + $0x4] sm:$0xf]
  %v2081 = vld [vmem:[%s2078 + $0x8] sm:$0xf]
  %v2082 = vld [vmem:[%s2078 + $0xc] sm:$0xf]
  %v2083 = vld [vmem:[%s2078 + $0x10] sm:$0xf]
  %v2084 = vld [vmem:[%s2078 + $0x14] sm:$0xf]
  %v2085 = vld [vmem:[%s2078 + $0x18] sm:$0xf]
  %v2086 = vld [vmem:[%s2078 + $0x1c] sm:$0xf]
  %v2087 = vld [vmem:[%s2078 + $0x20] sm:$0xf]
  %v2088 = vld [vmem:[%s2078 + $0x24] sm:$0xf]
  %v2089 = vld [vmem:[%s2078 + $0x28] sm:$0xf]
  %v2090 = vld [vmem:[%s2078 + $0x2c] sm:$0xf]
  %v2091 = vld [vmem:[%s2078 + $0x30] sm:$0xf]
  %v2092 = vld [vmem:[%s2078 + $0x34] sm:$0xf]
  %v2093 = vld [vmem:[%s2078 + $0x38] sm:$0xf]
  %v2094 = vld [vmem:[%s2078 + $0x3c] sm:$0xf]
  %v2111 = vunpack.c.l.b16 %v2079
  %v2112 = vunpack.c.l.b16 %v2080
  %v2113 = vunpack.c.l.b16 %v2081
  %v2114 = vunpack.c.l.b16 %v2082
  %v2115 = vunpack.c.l.b16 %v2083
  %v2116 = vunpack.c.l.b16 %v2084
  %v2117 = vunpack.c.l.b16 %v2085
  %v2118 = vunpack.c.l.b16 %v2086
  %v2119 = vunpack.c.l.b16 %v2087
  %v2120 = vunpack.c.l.b16 %v2088
  %v2121 = vunpack.c.l.b16 %v2089
  %v2122 = vunpack.c.l.b16 %v2090
  %v2123 = vunpack.c.l.b16 %v2091
  %v2124 = vunpack.c.l.b16 %v2092
  %v2125 = vunpack.c.l.b16 %v2093
  %v2126 = vunpack.c.l.b16 %v2094
  %v2127 = vpack.c.b16 %v2112, %v2111
  %v2128 = vpack.c.b16 %v2114, %v2113
  %v2129 = vpack.c.b16 %v2116, %v2115
  %v2130 = vpack.c.b16 %v2118, %v2117
  %v2131 = vpack.c.b16 %v2120, %v2119
  %v2132 = vpack.c.b16 %v2122, %v2121
  %v2133 = vpack.c.b16 %v2124, %v2123
  %v2134 = vpack.c.b16 %v2126, %v2125
  %2143 = vmatprep.subr.bf16.mxu0 0
  %2144 = vmatpush1.bf16.msra.mxu0 %v2134
  %2145 = vmatprep.subr.bf16.mxu0 0
  %2146 = vmatpush1.bf16.msra.mxu0 %v2133
  %2147 = vmatprep.subr.bf16.mxu0 0
  %2148 = vmatpush1.bf16.msra.mxu0 %v2132
  %2149 = vmatprep.subr.bf16.mxu0 0
  %2150 = vmatpush1.bf16.msra.mxu0 %v2131
  %2151 = vmatprep.subr.bf16.mxu0 0
  %2152 = vmatpush1.bf16.msra.mxu0 %v2130
  %2153 = vmatprep.subr.bf16.mxu0 0
  %2154 = vmatpush1.bf16.msra.mxu0 %v2129
  %2155 = vmatprep.subr.bf16.mxu0 0
  %2156 = vmatpush1.bf16.msra.mxu0 %v2128
  %2157 = vmatprep.subr.bf16.mxu0 0
  %2158 = vmatpush1.bf16.msra.mxu0 %v2127
  %2159 = vmatprep.subr.bf16.mxu0 0
  %2160 = vmatpush2.bf16.msra.mxu0 0
  %2161 = vmatprep.subr.bf16.mxu0 0
  %2162 = vmatpush2.bf16.msra.mxu0 0
  %2163 = vmatprep.subr.bf16.mxu0 0
  %2164 = vmatpush2.bf16.msra.mxu0 0
  %2165 = vmatprep.subr.bf16.mxu0 0
  %2166 = vmatpush2.bf16.msra.mxu0 0
  %2167 = vmatprep.subr.bf16.mxu0 0
  %2168 = vmatpush2.bf16.msra.mxu0 0
  %2169 = vmatprep.subr.bf16.mxu0 0
  %2170 = vmatpush2.bf16.msra.mxu0 0
  %2171 = vmatprep.subr.bf16.mxu0 0
  %2172 = vmatpush2.bf16.msra.mxu0 0
  %2173 = vmatprep.subr.bf16.mxu0 0
  %2174 = vmatpush2.bf16.msra.mxu0 0
  %2175 = vmatprep.mubr.bf16.mxu0 0
  %2176 = vmatmul.mubr.bf16.gmra.mxu0 %v1867
  %v2177 = vpop.f32.mrf.mxu0
  %v2178 = vadd.f32 0.0, %v2177
  %v2179 = vpop.f32.mrf.mxu0
  %v2180 = vpop.f32.mrf.mxu0
  %v2181 = vpop.f32.mrf.mxu0
  %2182 = vdwg.mxu0
  %v2183 = vmax.f32 %v2077, %v2178
  %s2184 = scalar_lea.vmem %s4, 192
  %v2185 = vld [vmem:[%s2184] sm:$0xf]
  %v2186 = vld [vmem:[%s2184 + $0x4] sm:$0xf]
  %v2187 = vld [vmem:[%s2184 + $0x8] sm:$0xf]
  %v2188 = vld [vmem:[%s2184 + $0xc] sm:$0xf]
  %v2189 = vld [vmem:[%s2184 + $0x10] sm:$0xf]
  %v2190 = vld [vmem:[%s2184 + $0x14] sm:$0xf]
  %v2191 = vld [vmem:[%s2184 + $0x18] sm:$0xf]
  %v2192 = vld [vmem:[%s2184 + $0x1c] sm:$0xf]
  %v2193 = vld [vmem:[%s2184 + $0x20] sm:$0xf]
  %v2194 = vld [vmem:[%s2184 + $0x24] sm:$0xf]
  %v2195 = vld [vmem:[%s2184 + $0x28] sm:$0xf]
  %v2196 = vld [vmem:[%s2184 + $0x2c] sm:$0xf]
  %v2197 = vld [vmem:[%s2184 + $0x30] sm:$0xf]
  %v2198 = vld [vmem:[%s2184 + $0x34] sm:$0xf]
  %v2199 = vld [vmem:[%s2184 + $0x38] sm:$0xf]
  %v2200 = vld [vmem:[%s2184 + $0x3c] sm:$0xf]
  %v2217 = vunpack.c.l.b16 %v2185
  %v2218 = vunpack.c.l.b16 %v2186
  %v2219 = vunpack.c.l.b16 %v2187
  %v2220 = vunpack.c.l.b16 %v2188
  %v2221 = vunpack.c.l.b16 %v2189
  %v2222 = vunpack.c.l.b16 %v2190
  %v2223 = vunpack.c.l.b16 %v2191
  %v2224 = vunpack.c.l.b16 %v2192
  %v2225 = vunpack.c.l.b16 %v2193
  %v2226 = vunpack.c.l.b16 %v2194
  %v2227 = vunpack.c.l.b16 %v2195
  %v2228 = vunpack.c.l.b16 %v2196
  %v2229 = vunpack.c.l.b16 %v2197
  %v2230 = vunpack.c.l.b16 %v2198
  %v2231 = vunpack.c.l.b16 %v2199
  %v2232 = vunpack.c.l.b16 %v2200
  %v2233 = vpack.c.b16 %v2218, %v2217
  %v2234 = vpack.c.b16 %v2220, %v2219
  %v2235 = vpack.c.b16 %v2222, %v2221
  %v2236 = vpack.c.b16 %v2224, %v2223
  %v2237 = vpack.c.b16 %v2226, %v2225
  %v2238 = vpack.c.b16 %v2228, %v2227
  %v2239 = vpack.c.b16 %v2230, %v2229
  %v2240 = vpack.c.b16 %v2232, %v2231
  %2249 = vmatprep.subr.bf16.mxu0 0
  %2250 = vmatpush1.bf16.msra.mxu0 %v2240
  %2251 = vmatprep.subr.bf16.mxu0 0
  %2252 = vmatpush1.bf16.msra.mxu0 %v2239
  %2253 = vmatprep.subr.bf16.mxu0 0
  %2254 = vmatpush1.bf16.msra.mxu0 %v2238
  %2255 = vmatprep.subr.bf16.mxu0 0
  %2256 = vmatpush1.bf16.msra.mxu0 %v2237
  %2257 = vmatprep.subr.bf16.mxu0 0
  %2258 = vmatpush1.bf16.msra.mxu0 %v2236
  %2259 = vmatprep.subr.bf16.mxu0 0
  %2260 = vmatpush1.bf16.msra.mxu0 %v2235
  %2261 = vmatprep.subr.bf16.mxu0 0
  %2262 = vmatpush1.bf16.msra.mxu0 %v2234
  %2263 = vmatprep.subr.bf16.mxu0 0
  %2264 = vmatpush1.bf16.msra.mxu0 %v2233
  %2265 = vmatprep.subr.bf16.mxu0 0
  %2266 = vmatpush2.bf16.msra.mxu0 0
  %2267 = vmatprep.subr.bf16.mxu0 0
  %2268 = vmatpush2.bf16.msra.mxu0 0
  %2269 = vmatprep.subr.bf16.mxu0 0
  %2270 = vmatpush2.bf16.msra.mxu0 0
  %2271 = vmatprep.subr.bf16.mxu0 0
  %2272 = vmatpush2.bf16.msra.mxu0 0
  %2273 = vmatprep.subr.bf16.mxu0 0
  %2274 = vmatpush2.bf16.msra.mxu0 0
  %2275 = vmatprep.subr.bf16.mxu0 0
  %2276 = vmatpush2.bf16.msra.mxu0 0
  %2277 = vmatprep.subr.bf16.mxu0 0
  %2278 = vmatpush2.bf16.msra.mxu0 0
  %2279 = vmatprep.subr.bf16.mxu0 0
  %2280 = vmatpush2.bf16.msra.mxu0 0
  %2281 = vmatprep.mubr.bf16.mxu0 0
  %2282 = vmatmul.mubr.bf16.gmra.mxu0 %v1867
  %v2283 = vpop.f32.mrf.mxu0
  %v2284 = vadd.f32 0.0, %v2283
  %v2285 = vpop.f32.mrf.mxu0
  %v2286 = vpop.f32.mrf.mxu0
  %v2287 = vpop.f32.mrf.mxu0
  %2288 = vdwg.mxu0
  %v2289 = vmax.f32 %v2183, %v2284
  %v2290 = vld [vmem:[%s5] sm:$0xff]
  %v2291 = vld [vmem:[%s5 + $0x8] sm:$0xff]
  %v2292 = vld [vmem:[%s5 + $0x10] sm:$0xff]
  %v2293 = vld [vmem:[%s5 + $0x18] sm:$0xff]
  %s2294 = scalar_lea.vmem %s5, 32
  %v2295 = vld [vmem:[%s2294] sm:$0xff]
  %v2296 = vld [vmem:[%s2294 + $0x8] sm:$0xff]
  %v2297 = vld [vmem:[%s2294 + $0x10] sm:$0xff]
  %v2298 = vld [vmem:[%s2294 + $0x18] sm:$0xff]
  %v2300 = vrot.slane %v2289, 1
  %vm2301 = vcmask 261120
  %v2302 = vsel %vm2301, %v2300, 0
  %2304 = vmatprep.subr.mxu0 0.0
  %2305 = vmatpush1.msra.mxu0 0.0
  %2306 = vmatprep.subr.mxu0 0.0
  %2307 = vmatpush1.msra.mxu0 0.0
  %2308 = vmatprep.subr.mxu0 0.0
  %2309 = vmatpush1.msra.mxu0 0.0
  %2310 = vmatprep.subr.mxu0 0.0
  %2311 = vmatpush1.msra.mxu0 0.0
  %2312 = vmatprep.subr.mxu0 0.0
  %2313 = vmatpush1.msra.mxu0 0.0
  %2314 = vmatprep.subr.mxu0 0.0
  %2315 = vmatpush1.msra.mxu0 0.0
  %2316 = vmatprep.subr.mxu0 0.0
  %2317 = vmatpush1.msra.mxu0 0.0
  %2318 = vmatprep.subr.mxu0 0.0
  %2319 = vmatpush1.msra.mxu0 0.0
  %2320 = vmatprep.subr.mxu0 0.0
  %2321 = vmatpush1.msra.mxu0 0.0
  %2322 = vmatprep.subr.mxu0 0.0
  %2323 = vmatpush1.msra.mxu0 0.0
  %2324 = vmatprep.subr.mxu0 0.0
  %2325 = vmatpush1.msra.mxu0 0.0
  %2326 = vmatprep.subr.mxu0 0.0
  %2327 = vmatpush1.msra.mxu0 0.0
  %2328 = vmatprep.subr.mxu0 0.0
  %2329 = vmatpush1.msra.mxu0 %v2298
  %2330 = vmatprep.subr.mxu0 0.0
  %2331 = vmatpush1.msra.mxu0 %v2297
  %2332 = vmatprep.subr.mxu0 0.0
  %2333 = vmatpush1.msra.mxu0 %v2296
  %2334 = vmatprep.subr.mxu0 0.0
  %2335 = vmatpush1.msra.mxu0 %v2295
  %2336 = vmatprep.subr.mxu0 0.0
  %2337 = vmatpush2.msra.mxu0 0.0
  %2338 = vmatprep.subr.mxu0 0.0
  %2339 = vmatpush2.msra.mxu0 0.0
  %2340 = vmatprep.subr.mxu0 0.0
  %2341 = vmatpush2.msra.mxu0 0.0
  %2342 = vmatprep.subr.mxu0 0.0
  %2343 = vmatpush2.msra.mxu0 0.0
  %2344 = vmatprep.subr.mxu0 0.0
  %2345 = vmatpush2.msra.mxu0 0.0
  %2346 = vmatprep.subr.mxu0 0.0
  %2347 = vmatpush2.msra.mxu0 0.0
  %2348 = vmatprep.subr.mxu0 0.0
  %2349 = vmatpush2.msra.mxu0 0.0
  %2350 = vmatprep.subr.mxu0 0.0
  %2351 = vmatpush2.msra.mxu0 0.0
  %2352 = vmatprep.subr.mxu0 0.0
  %2353 = vmatpush2.msra.mxu0 0.0
  %2354 = vmatprep.subr.mxu0 0.0
  %2355 = vmatpush2.msra.mxu0 0.0
  %2356 = vmatprep.subr.mxu0 0.0
  %2357 = vmatpush2.msra.mxu0 0.0
  %2358 = vmatprep.subr.mxu0 0.0
  %2359 = vmatpush2.msra.mxu0 0.0
  %2360 = vmatprep.subr.mxu0 0.0
  %2361 = vmatpush2.msra.mxu0 0.0
  %2362 = vmatprep.subr.mxu0 0.0
  %2363 = vmatpush2.msra.mxu0 0.0
  %2364 = vmatprep.subr.mxu0 0.0
  %2365 = vmatpush2.msra.mxu0 0.0
  %2366 = vmatprep.subr.mxu0 0.0
  %2367 = vmatpush2.msra.mxu0 0.0
  %2368 = vmatprep.mubr.f32.mxu0 0.0
  %2369 = vmatmul.mubr.f32.gmra.mxu0 %v2302
  %v2370 = vpop.f32.mrf.mxu0
  %v2371 = vadd.f32 0.0, %v2370
  %v2372 = vpop.f32.mrf.mxu0
  %2373 = vdwg.mxu0
  %s2374 = scalar_lea.vmem %s5, 64
  %v2375 = vld [vmem:[%s2374] sm:$0xff]
  %v2376 = vld [vmem:[%s2374 + $0x8] sm:$0xff]
  %v2377 = vld [vmem:[%s2374 + $0x10] sm:$0xff]
  %v2378 = vld [vmem:[%s2374 + $0x18] sm:$0xff]
  %s2379 = scalar_lea.vmem %s5, 96
  %v2380 = vld [vmem:[%s2379] sm:$0xff]
  %v2381 = vld [vmem:[%s2379 + $0x8] sm:$0xff]
  %v2382 = vld [vmem:[%s2379 + $0x10] sm:$0xff]
  %v2383 = vld [vmem:[%s2379 + $0x18] sm:$0xff]
  %v2384 = vrot.slane %v2289, 3
  %v2385 = vsel %vm2301, %v2384, 0
  %2387 = vmatprep.subr.mxu0 0.0
  %2388 = vmatpush1.msra.mxu0 0.0
  %2389 = vmatprep.subr.mxu0 0.0
  %2390 = vmatpush1.msra.mxu0 0.0
  %2391 = vmatprep.subr.mxu0 0.0
  %2392 = vmatpush1.msra.mxu0 0.0
  %2393 = vmatprep.subr.mxu0 0.0
  %2394 = vmatpush1.msra.mxu0 0.0
  %2395 = vmatprep.subr.mxu0 0.0
  %2396 = vmatpush1.msra.mxu0 0.0
  %2397 = vmatprep.subr.mxu0 0.0
  %2398 = vmatpush1.msra.mxu0 0.0
  %2399 = vmatprep.subr.mxu0 0.0
  %2400 = vmatpush1.msra.mxu0 0.0
  %2401 = vmatprep.subr.mxu0 0.0
  %2402 = vmatpush1.msra.mxu0 0.0
  %2403 = vmatprep.subr.mxu0 0.0
  %2404 = vmatpush1.msra.mxu0 0.0
  %2405 = vmatprep.subr.mxu0 0.0
  %2406 = vmatpush1.msra.mxu0 0.0
  %2407 = vmatprep.subr.mxu0 0.0
  %2408 = vmatpush1.msra.mxu0 0.0
  %2409 = vmatprep.subr.mxu0 0.0
  %2410 = vmatpush1.msra.mxu0 0.0
  %2411 = vmatprep.subr.mxu0 0.0
  %2412 = vmatpush1.msra.mxu0 %v2383
  %2413 = vmatprep.subr.mxu0 0.0
  %2414 = vmatpush1.msra.mxu0 %v2382
  %2415 = vmatprep.subr.mxu0 0.0
  %2416 = vmatpush1.msra.mxu0 %v2381
  %2417 = vmatprep.subr.mxu0 0.0
  %2418 = vmatpush1.msra.mxu0 %v2380
  %2419 = vmatprep.subr.mxu0 0.0
  %2420 = vmatpush2.msra.mxu0 0.0
  %2421 = vmatprep.subr.mxu0 0.0
  %2422 = vmatpush2.msra.mxu0 0.0
  %2423 = vmatprep.subr.mxu0 0.0
  %2424 = vmatpush2.msra.mxu0 0.0
  %2425 = vmatprep.subr.mxu0 0.0
  %2426 = vmatpush2.msra.mxu0 0.0
  %2427 = vmatprep.subr.mxu0 0.0
  %2428 = vmatpush2.msra.mxu0 0.0
  %2429 = vmatprep.subr.mxu0 0.0
  %2430 = vmatpush2.msra.mxu0 0.0
  %2431 = vmatprep.subr.mxu0 0.0
  %2432 = vmatpush2.msra.mxu0 0.0
  %2433 = vmatprep.subr.mxu0 0.0
  %2434 = vmatpush2.msra.mxu0 0.0
  %2435 = vmatprep.subr.mxu0 0.0
  %2436 = vmatpush2.msra.mxu0 0.0
  %2437 = vmatprep.subr.mxu0 0.0
  %2438 = vmatpush2.msra.mxu0 0.0
  %2439 = vmatprep.subr.mxu0 0.0
  %2440 = vmatpush2.msra.mxu0 0.0
  %2441 = vmatprep.subr.mxu0 0.0
  %2442 = vmatpush2.msra.mxu0 0.0
  %2443 = vmatprep.subr.mxu0 0.0
  %2444 = vmatpush2.msra.mxu0 0.0
  %2445 = vmatprep.subr.mxu0 0.0
  %2446 = vmatpush2.msra.mxu0 0.0
  %2447 = vmatprep.subr.mxu0 0.0
  %2448 = vmatpush2.msra.mxu0 0.0
  %2449 = vmatprep.subr.mxu0 0.0
  %2450 = vmatpush2.msra.mxu0 0.0
  %2451 = vmatprep.mubr.f32.mxu0 0.0
  %2452 = vmatmul.mubr.f32.gmra.mxu0 %v2385
  %v2453 = vpop.f32.mrf.mxu0
  %v2454 = vadd.f32 0.0, %v2453
  %v2455 = vpop.f32.mrf.mxu0
  %2456 = vdwg.mxu0
  %v2457 = vsel %vm2301, %v2289, 0
  %2459 = vmatprep.subr.mxu0 0.0
  %2460 = vmatpush1.msra.mxu0 0.0
  %2461 = vmatprep.subr.mxu0 0.0
  %2462 = vmatpush1.msra.mxu0 0.0
  %2463 = vmatprep.subr.mxu0 0.0
  %2464 = vmatpush1.msra.mxu0 0.0
  %2465 = vmatprep.subr.mxu0 0.0
  %2466 = vmatpush1.msra.mxu0 0.0
  %2467 = vmatprep.subr.mxu0 0.0
  %2468 = vmatpush1.msra.mxu0 0.0
  %2469 = vmatprep.subr.mxu0 0.0
  %2470 = vmatpush1.msra.mxu0 0.0
  %2471 = vmatprep.subr.mxu0 0.0
  %2472 = vmatpush1.msra.mxu0 0.0
  %2473 = vmatprep.subr.mxu0 0.0
  %2474 = vmatpush1.msra.mxu0 0.0
  %2475 = vmatprep.subr.mxu0 0.0
  %2476 = vmatpush1.msra.mxu0 0.0
  %2477 = vmatprep.subr.mxu0 0.0
  %2478 = vmatpush1.msra.mxu0 0.0
  %2479 = vmatprep.subr.mxu0 0.0
  %2480 = vmatpush1.msra.mxu0 0.0
  %2481 = vmatprep.subr.mxu0 0.0
  %2482 = vmatpush1.msra.mxu0 0.0
  %2483 = vmatprep.subr.mxu0 0.0
  %2484 = vmatpush1.msra.mxu0 %v2293
  %2485 = vmatprep.subr.mxu0 0.0
  %2486 = vmatpush1.msra.mxu0 %v2292
  %2487 = vmatprep.subr.mxu0 0.0
  %2488 = vmatpush1.msra.mxu0 %v2291
  %2489 = vmatprep.subr.mxu0 0.0
  %2490 = vmatpush1.msra.mxu0 %v2290
  %2491 = vmatprep.subr.mxu0 0.0
  %2492 = vmatpush2.msra.mxu0 0.0
  %2493 = vmatprep.subr.mxu0 0.0
  %2494 = vmatpush2.msra.mxu0 0.0
  %2495 = vmatprep.subr.mxu0 0.0
  %2496 = vmatpush2.msra.mxu0 0.0
  %2497 = vmatprep.subr.mxu0 0.0
  %2498 = vmatpush2.msra.mxu0 0.0
  %2499 = vmatprep.subr.mxu0 0.0
  %2500 = vmatpush2.msra.mxu0 0.0
  %2501 = vmatprep.subr.mxu0 0.0
  %2502 = vmatpush2.msra.mxu0 0.0
  %2503 = vmatprep.subr.mxu0 0.0
  %2504 = vmatpush2.msra.mxu0 0.0
  %2505 = vmatprep.subr.mxu0 0.0
  %2506 = vmatpush2.msra.mxu0 0.0
  %2507 = vmatprep.subr.mxu0 0.0
  %2508 = vmatpush2.msra.mxu0 0.0
  %2509 = vmatprep.subr.mxu0 0.0
  %2510 = vmatpush2.msra.mxu0 0.0
  %2511 = vmatprep.subr.mxu0 0.0
  %2512 = vmatpush2.msra.mxu0 0.0
  %2513 = vmatprep.subr.mxu0 0.0
  %2514 = vmatpush2.msra.mxu0 0.0
  %2515 = vmatprep.subr.mxu0 0.0
  %2516 = vmatpush2.msra.mxu0 0.0
  %2517 = vmatprep.subr.mxu0 0.0
  %2518 = vmatpush2.msra.mxu0 0.0
  %2519 = vmatprep.subr.mxu0 0.0
  %2520 = vmatpush2.msra.mxu0 0.0
  %2521 = vmatprep.subr.mxu0 0.0
  %2522 = vmatpush2.msra.mxu0 0.0
  %2523 = vmatprep.mubr.f32.mxu0 0.0
  %2524 = vmatmul.mubr.f32.gmra.mxu0 %v2457
  %v2525 = vpop.f32.mrf.mxu0
  %v2526 = vadd.f32 %v2371, %v2525
  %v2527 = vpop.f32.mrf.mxu0
  %2528 = vdwg.mxu0
  %v2529 = vrot.slane %v2289, 2
  %v2530 = vsel %vm2301, %v2529, 0
  %2532 = vmatprep.subr.mxu0 0.0
  %2533 = vmatpush1.msra.mxu0 0.0
  %2534 = vmatprep.subr.mxu0 0.0
  %2535 = vmatpush1.msra.mxu0 0.0
  %2536 = vmatprep.subr.mxu0 0.0
  %2537 = vmatpush1.msra.mxu0 0.0
  %2538 = vmatprep.subr.mxu0 0.0
  %2539 = vmatpush1.msra.mxu0 0.0
  %2540 = vmatprep.subr.mxu0 0.0
  %2541 = vmatpush1.msra.mxu0 0.0
  %2542 = vmatprep.subr.mxu0 0.0
  %2543 = vmatpush1.msra.mxu0 0.0
  %2544 = vmatprep.subr.mxu0 0.0
  %2545 = vmatpush1.msra.mxu0 0.0
  %2546 = vmatprep.subr.mxu0 0.0
  %2547 = vmatpush1.msra.mxu0 0.0
  %2548 = vmatprep.subr.mxu0 0.0
  %2549 = vmatpush1.msra.mxu0 0.0
  %2550 = vmatprep.subr.mxu0 0.0
  %2551 = vmatpush1.msra.mxu0 0.0
  %2552 = vmatprep.subr.mxu0 0.0
  %2553 = vmatpush1.msra.mxu0 0.0
  %2554 = vmatprep.subr.mxu0 0.0
  %2555 = vmatpush1.msra.mxu0 0.0
  %2556 = vmatprep.subr.mxu0 0.0
  %2557 = vmatpush1.msra.mxu0 %v2378
  %2558 = vmatprep.subr.mxu0 0.0
  %2559 = vmatpush1.msra.mxu0 %v2377
  %2560 = vmatprep.subr.mxu0 0.0
  %2561 = vmatpush1.msra.mxu0 %v2376
  %2562 = vmatprep.subr.mxu0 0.0
  %2563 = vmatpush1.msra.mxu0 %v2375
  %2564 = vmatprep.subr.mxu0 0.0
  %2565 = vmatpush2.msra.mxu0 0.0
  %2566 = vmatprep.subr.mxu0 0.0
  %2567 = vmatpush2.msra.mxu0 0.0
  %2568 = vmatprep.subr.mxu0 0.0
  %2569 = vmatpush2.msra.mxu0 0.0
  %2570 = vmatprep.subr.mxu0 0.0
  %2571 = vmatpush2.msra.mxu0 0.0
  %2572 = vmatprep.subr.mxu0 0.0
  %2573 = vmatpush2.msra.mxu0 0.0
  %2574 = vmatprep.subr.mxu0 0.0
  %2575 = vmatpush2.msra.mxu0 0.0
  %2576 = vmatprep.subr.mxu0 0.0
  %2577 = vmatpush2.msra.mxu0 0.0
  %2578 = vmatprep.subr.mxu0 0.0
  %2579 = vmatpush2.msra.mxu0 0.0
  %2580 = vmatprep.subr.mxu0 0.0
  %2581 = vmatpush2.msra.mxu0 0.0
  %2582 = vmatprep.subr.mxu0 0.0
  %2583 = vmatpush2.msra.mxu0 0.0
  %2584 = vmatprep.subr.mxu0 0.0
  %2585 = vmatpush2.msra.mxu0 0.0
  %2586 = vmatprep.subr.mxu0 0.0
  %2587 = vmatpush2.msra.mxu0 0.0
  %2588 = vmatprep.subr.mxu0 0.0
  %2589 = vmatpush2.msra.mxu0 0.0
  %2590 = vmatprep.subr.mxu0 0.0
  %2591 = vmatpush2.msra.mxu0 0.0
  %2592 = vmatprep.subr.mxu0 0.0
  %2593 = vmatpush2.msra.mxu0 0.0
  %2594 = vmatprep.subr.mxu0 0.0
  %2595 = vmatpush2.msra.mxu0 0.0
  %2596 = vmatprep.mubr.f32.mxu0 0.0
  %2597 = vmatmul.mubr.f32.gmra.mxu0 %v2530
  %v2598 = vpop.f32.mrf.mxu0
  %v2599 = vadd.f32 %v2454, %v2598
  %v2600 = vpop.f32.mrf.mxu0
  %2601 = vdwg.mxu0
  %v2602 = vadd.f32 %v2526, %v2599
  %v2603 = vld [vmem:[%s13] sm:$0x1]
  %2605 = vset.pattern.permute.xlu0 11
  %2606 = vperm.xlu0 %2605, %v2603
  %v2607 = vpop.permute.xlu0 %2606
  %v2609 = vadd.f32 %v2602, %v2607
  %vm2610 = vcmp.ge.f32.partialorder %v2609, 0.0
  %v2611 = vmul.f32 %v2609, 0.2
  %v2612 = vsel %vm2610, %v2609, %v2611
  %2613 = vset.pattern.permute.xlu0 12
  %2614 = vperm.xlu0 %2613, %v2603
  %v2615 = vpop.permute.xlu0 %2614
  %v2617 = vmul.f32 %v2612, %v2615
  %2618 = vset.pattern.permute.xlu0 13
  %2619 = vperm.xlu0 %2618, %v2603
  %v2620 = vpop.permute.xlu0 %2619
  %v2622 = vadd.f32 %v2617, %v2620
  %v2623 = vld [vmem:[%s6] sm:$0xff]
  %v2624 = vld [vmem:[%s6 + $0x8] sm:$0xff]
  %v2625 = vld [vmem:[%s6 + $0x10] sm:$0xff]
  %v2626 = vld [vmem:[%s6 + $0x18] sm:$0xff]
  %v2628 = vsel %vm2301, %v2622, 0
  %2630 = vmatprep.subr.mxu0 0.0
  %2631 = vmatpush1.msra.mxu0 0.0
  %2632 = vmatprep.subr.mxu0 0.0
  %2633 = vmatpush1.msra.mxu0 0.0
  %2634 = vmatprep.subr.mxu0 0.0
  %2635 = vmatpush1.msra.mxu0 0.0
  %2636 = vmatprep.subr.mxu0 0.0
  %2637 = vmatpush1.msra.mxu0 0.0
  %2638 = vmatprep.subr.mxu0 0.0
  %2639 = vmatpush1.msra.mxu0 0.0
  %2640 = vmatprep.subr.mxu0 0.0
  %2641 = vmatpush1.msra.mxu0 0.0
  %2642 = vmatprep.subr.mxu0 0.0
  %2643 = vmatpush1.msra.mxu0 0.0
  %2644 = vmatprep.subr.mxu0 0.0
  %2645 = vmatpush1.msra.mxu0 0.0
  %2646 = vmatprep.subr.mxu0 0.0
  %2647 = vmatpush1.msra.mxu0 0.0
  %2648 = vmatprep.subr.mxu0 0.0
  %2649 = vmatpush1.msra.mxu0 0.0
  %2650 = vmatprep.subr.mxu0 0.0
  %2651 = vmatpush1.msra.mxu0 0.0
  %2652 = vmatprep.subr.mxu0 0.0
  %2653 = vmatpush1.msra.mxu0 0.0
  %2654 = vmatprep.subr.mxu0 0.0
  %2655 = vmatpush1.msra.mxu0 %v2626
  %2656 = vmatprep.subr.mxu0 0.0
  %2657 = vmatpush1.msra.mxu0 %v2625
  %2658 = vmatprep.subr.mxu0 0.0
  %2659 = vmatpush1.msra.mxu0 %v2624
  %2660 = vmatprep.subr.mxu0 0.0
  %2661 = vmatpush1.msra.mxu0 %v2623
  %2662 = vmatprep.subr.mxu0 0.0
  %2663 = vmatpush2.msra.mxu0 0.0
  %2664 = vmatprep.subr.mxu0 0.0
  %2665 = vmatpush2.msra.mxu0 0.0
  %2666 = vmatprep.subr.mxu0 0.0
  %2667 = vmatpush2.msra.mxu0 0.0
  %2668 = vmatprep.subr.mxu0 0.0
  %2669 = vmatpush2.msra.mxu0 0.0
  %2670 = vmatprep.subr.mxu0 0.0
  %2671 = vmatpush2.msra.mxu0 0.0
  %2672 = vmatprep.subr.mxu0 0.0
  %2673 = vmatpush2.msra.mxu0 0.0
  %2674 = vmatprep.subr.mxu0 0.0
  %2675 = vmatpush2.msra.mxu0 0.0
  %2676 = vmatprep.subr.mxu0 0.0
  %2677 = vmatpush2.msra.mxu0 0.0
  %2678 = vmatprep.subr.mxu0 0.0
  %2679 = vmatpush2.msra.mxu0 0.0
  %2680 = vmatprep.subr.mxu0 0.0
  %2681 = vmatpush2.msra.mxu0 0.0
  %2682 = vmatprep.subr.mxu0 0.0
  %2683 = vmatpush2.msra.mxu0 0.0
  %2684 = vmatprep.subr.mxu0 0.0
  %2685 = vmatpush2.msra.mxu0 0.0
  %2686 = vmatprep.subr.mxu0 0.0
  %2687 = vmatpush2.msra.mxu0 0.0
  %2688 = vmatprep.subr.mxu0 0.0
  %2689 = vmatpush2.msra.mxu0 0.0
  %2690 = vmatprep.subr.mxu0 0.0
  %2691 = vmatpush2.msra.mxu0 0.0
  %2692 = vmatprep.subr.mxu0 0.0
  %2693 = vmatpush2.msra.mxu0 0.0
  %2694 = vmatprep.mubr.f32.mxu0 0.0
  %2695 = vmatmul.mubr.f32.gmra.mxu0 %v2628
  %v2696 = vpop.f32.mrf.mxu0
  %v2697 = vadd.f32 0.0, %v2696
  %v2698 = vpop.f32.mrf.mxu0
  %2699 = vdwg.mxu0
  %s2700 = scalar_lea.vmem %s6, 32
  %v2701 = vld [vmem:[%s2700] sm:$0xff]
  %v2702 = vld [vmem:[%s2700 + $0x8] sm:$0xff]
  %v2703 = vld [vmem:[%s2700 + $0x10] sm:$0xff]
  %v2704 = vld [vmem:[%s2700 + $0x18] sm:$0xff]
  %2705 = vmatprep.subr.mxu0 0.0
  %2706 = vmatpush1.msra.mxu0 0.0
  %2707 = vmatprep.subr.mxu0 0.0
  %2708 = vmatpush1.msra.mxu0 0.0
  %2709 = vmatprep.subr.mxu0 0.0
  %2710 = vmatpush1.msra.mxu0 0.0
  %2711 = vmatprep.subr.mxu0 0.0
  %2712 = vmatpush1.msra.mxu0 0.0
  %2713 = vmatprep.subr.mxu0 0.0
  %2714 = vmatpush1.msra.mxu0 0.0
  %2715 = vmatprep.subr.mxu0 0.0
  %2716 = vmatpush1.msra.mxu0 0.0
  %2717 = vmatprep.subr.mxu0 0.0
  %2718 = vmatpush1.msra.mxu0 0.0
  %2719 = vmatprep.subr.mxu0 0.0
  %2720 = vmatpush1.msra.mxu0 0.0
  %2721 = vmatprep.subr.mxu0 0.0
  %2722 = vmatpush1.msra.mxu0 0.0
  %2723 = vmatprep.subr.mxu0 0.0
  %2724 = vmatpush1.msra.mxu0 0.0
  %2725 = vmatprep.subr.mxu0 0.0
  %2726 = vmatpush1.msra.mxu0 0.0
  %2727 = vmatprep.subr.mxu0 0.0
  %2728 = vmatpush1.msra.mxu0 0.0
  %2729 = vmatprep.subr.mxu0 0.0
  %2730 = vmatpush1.msra.mxu0 %v2704
  %2731 = vmatprep.subr.mxu0 0.0
  %2732 = vmatpush1.msra.mxu0 %v2703
  %2733 = vmatprep.subr.mxu0 0.0
  %2734 = vmatpush1.msra.mxu0 %v2702
  %2735 = vmatprep.subr.mxu0 0.0
  %2736 = vmatpush1.msra.mxu0 %v2701
  %2737 = vmatprep.subr.mxu0 0.0
  %2738 = vmatpush2.msra.mxu0 0.0
  %2739 = vmatprep.subr.mxu0 0.0
  %2740 = vmatpush2.msra.mxu0 0.0
  %2741 = vmatprep.subr.mxu0 0.0
  %2742 = vmatpush2.msra.mxu0 0.0
  %2743 = vmatprep.subr.mxu0 0.0
  %2744 = vmatpush2.msra.mxu0 0.0
  %2745 = vmatprep.subr.mxu0 0.0
  %2746 = vmatpush2.msra.mxu0 0.0
  %2747 = vmatprep.subr.mxu0 0.0
  %2748 = vmatpush2.msra.mxu0 0.0
  %2749 = vmatprep.subr.mxu0 0.0
  %2750 = vmatpush2.msra.mxu0 0.0
  %2751 = vmatprep.subr.mxu0 0.0
  %2752 = vmatpush2.msra.mxu0 0.0
  %2753 = vmatprep.subr.mxu0 0.0
  %2754 = vmatpush2.msra.mxu0 0.0
  %2755 = vmatprep.subr.mxu0 0.0
  %2756 = vmatpush2.msra.mxu0 0.0
  %2757 = vmatprep.subr.mxu0 0.0
  %2758 = vmatpush2.msra.mxu0 0.0
  %2759 = vmatprep.subr.mxu0 0.0
  %2760 = vmatpush2.msra.mxu0 0.0
  %2761 = vmatprep.subr.mxu0 0.0
  %2762 = vmatpush2.msra.mxu0 0.0
  %2763 = vmatprep.subr.mxu0 0.0
  %2764 = vmatpush2.msra.mxu0 0.0
  %2765 = vmatprep.subr.mxu0 0.0
  %2766 = vmatpush2.msra.mxu0 0.0
  %2767 = vmatprep.subr.mxu0 0.0
  %2768 = vmatpush2.msra.mxu0 0.0
  %2769 = vmatprep.mubr.f32.mxu0 0.0
  %2770 = vmatmul.mubr.f32.gmra.mxu0 %v2628
  %v2771 = vpop.f32.mrf.mxu0
  %v2772 = vadd.f32 0.0, %v2771
  %v2773 = vpop.f32.mrf.mxu0
  %2774 = vdwg.mxu0
  %v2775 = vmax.f32 %v2697, %v2772
  %s2776 = scalar_lea.vmem %s6, 64
  %v2777 = vld [vmem:[%s2776] sm:$0xff]
  %v2778 = vld [vmem:[%s2776 + $0x8] sm:$0xff]
  %v2779 = vld [vmem:[%s2776 + $0x10] sm:$0xff]
  %v2780 = vld [vmem:[%s2776 + $0x18] sm:$0xff]
  %2781 = vmatprep.subr.mxu0 0.0
  %2782 = vmatpush1.msra.mxu0 0.0
  %2783 = vmatprep.subr.mxu0 0.0
  %2784 = vmatpush1.msra.mxu0 0.0
  %2785 = vmatprep.subr.mxu0 0.0
  %2786 = vmatpush1.msra.mxu0 0.0
  %2787 = vmatprep.subr.mxu0 0.0
  %2788 = vmatpush1.msra.mxu0 0.0
  %2789 = vmatprep.subr.mxu0 0.0
  %2790 = vmatpush1.msra.mxu0 0.0
  %2791 = vmatprep.subr.mxu0 0.0
  %2792 = vmatpush1.msra.mxu0 0.0
  %2793 = vmatprep.subr.mxu0 0.0
  %2794 = vmatpush1.msra.mxu0 0.0
  %2795 = vmatprep.subr.mxu0 0.0
  %2796 = vmatpush1.msra.mxu0 0.0
  %2797 = vmatprep.subr.mxu0 0.0
  %2798 = vmatpush1.msra.mxu0 0.0
  %2799 = vmatprep.subr.mxu0 0.0
  %2800 = vmatpush1.msra.mxu0 0.0
  %2801 = vmatprep.subr.mxu0 0.0
  %2802 = vmatpush1.msra.mxu0 0.0
  %2803 = vmatprep.subr.mxu0 0.0
  %2804 = vmatpush1.msra.mxu0 0.0
  %2805 = vmatprep.subr.mxu0 0.0
  %2806 = vmatpush1.msra.mxu0 %v2780
  %2807 = vmatprep.subr.mxu0 0.0
  %2808 = vmatpush1.msra.mxu0 %v2779
  %2809 = vmatprep.subr.mxu0 0.0
  %2810 = vmatpush1.msra.mxu0 %v2778
  %2811 = vmatprep.subr.mxu0 0.0
  %2812 = vmatpush1.msra.mxu0 %v2777
  %2813 = vmatprep.subr.mxu0 0.0
  %2814 = vmatpush2.msra.mxu0 0.0
  %2815 = vmatprep.subr.mxu0 0.0
  %2816 = vmatpush2.msra.mxu0 0.0
  %2817 = vmatprep.subr.mxu0 0.0
  %2818 = vmatpush2.msra.mxu0 0.0
  %2819 = vmatprep.subr.mxu0 0.0
  %2820 = vmatpush2.msra.mxu0 0.0
  %2821 = vmatprep.subr.mxu0 0.0
  %2822 = vmatpush2.msra.mxu0 0.0
  %2823 = vmatprep.subr.mxu0 0.0
  %2824 = vmatpush2.msra.mxu0 0.0
  %2825 = vmatprep.subr.mxu0 0.0
  %2826 = vmatpush2.msra.mxu0 0.0
  %2827 = vmatprep.subr.mxu0 0.0
  %2828 = vmatpush2.msra.mxu0 0.0
  %2829 = vmatprep.subr.mxu0 0.0
  %2830 = vmatpush2.msra.mxu0 0.0
  %2831 = vmatprep.subr.mxu0 0.0
  %2832 = vmatpush2.msra.mxu0 0.0
  %2833 = vmatprep.subr.mxu0 0.0
  %2834 = vmatpush2.msra.mxu0 0.0
  %2835 = vmatprep.subr.mxu0 0.0
  %2836 = vmatpush2.msra.mxu0 0.0
  %2837 = vmatprep.subr.mxu0 0.0
  %2838 = vmatpush2.msra.mxu0 0.0
  %2839 = vmatprep.subr.mxu0 0.0
  %2840 = vmatpush2.msra.mxu0 0.0
  %2841 = vmatprep.subr.mxu0 0.0
  %2842 = vmatpush2.msra.mxu0 0.0
  %2843 = vmatprep.subr.mxu0 0.0
  %2844 = vmatpush2.msra.mxu0 0.0
  %2845 = vmatprep.mubr.f32.mxu0 0.0
  %2846 = vmatmul.mubr.f32.gmra.mxu0 %v2628
  %v2847 = vpop.f32.mrf.mxu0
  %v2848 = vadd.f32 0.0, %v2847
  %v2849 = vpop.f32.mrf.mxu0
  %2850 = vdwg.mxu0
  %v2851 = vmax.f32 %v2775, %v2848
  %s2852 = scalar_lea.vmem %s6, 96
  %v2853 = vld [vmem:[%s2852] sm:$0xff]
  %v2854 = vld [vmem:[%s2852 + $0x8] sm:$0xff]
  %v2855 = vld [vmem:[%s2852 + $0x10] sm:$0xff]
  %v2856 = vld [vmem:[%s2852 + $0x18] sm:$0xff]
  %2857 = vmatprep.subr.mxu0 0.0
  %2858 = vmatpush1.msra.mxu0 0.0
  %2859 = vmatprep.subr.mxu0 0.0
  %2860 = vmatpush1.msra.mxu0 0.0
  %2861 = vmatprep.subr.mxu0 0.0
  %2862 = vmatpush1.msra.mxu0 0.0
  %2863 = vmatprep.subr.mxu0 0.0
  %2864 = vmatpush1.msra.mxu0 0.0
  %2865 = vmatprep.subr.mxu0 0.0
  %2866 = vmatpush1.msra.mxu0 0.0
  %2867 = vmatprep.subr.mxu0 0.0
  %2868 = vmatpush1.msra.mxu0 0.0
  %2869 = vmatprep.subr.mxu0 0.0
  %2870 = vmatpush1.msra.mxu0 0.0
  %2871 = vmatprep.subr.mxu0 0.0
  %2872 = vmatpush1.msra.mxu0 0.0
  %2873 = vmatprep.subr.mxu0 0.0
  %2874 = vmatpush1.msra.mxu0 0.0
  %2875 = vmatprep.subr.mxu0 0.0
  %2876 = vmatpush1.msra.mxu0 0.0
  %2877 = vmatprep.subr.mxu0 0.0
  %2878 = vmatpush1.msra.mxu0 0.0
  %2879 = vmatprep.subr.mxu0 0.0
  %2880 = vmatpush1.msra.mxu0 0.0
  %2881 = vmatprep.subr.mxu0 0.0
  %2882 = vmatpush1.msra.mxu0 %v2856
  %2883 = vmatprep.subr.mxu0 0.0
  %2884 = vmatpush1.msra.mxu0 %v2855
  %2885 = vmatprep.subr.mxu0 0.0
  %2886 = vmatpush1.msra.mxu0 %v2854
  %2887 = vmatprep.subr.mxu0 0.0
  %2888 = vmatpush1.msra.mxu0 %v2853
  %2889 = vmatprep.subr.mxu0 0.0
  %2890 = vmatpush2.msra.mxu0 0.0
  %2891 = vmatprep.subr.mxu0 0.0
  %2892 = vmatpush2.msra.mxu0 0.0
  %2893 = vmatprep.subr.mxu0 0.0
  %2894 = vmatpush2.msra.mxu0 0.0
  %2895 = vmatprep.subr.mxu0 0.0
  %2896 = vmatpush2.msra.mxu0 0.0
  %2897 = vmatprep.subr.mxu0 0.0
  %2898 = vmatpush2.msra.mxu0 0.0
  %2899 = vmatprep.subr.mxu0 0.0
  %2900 = vmatpush2.msra.mxu0 0.0
  %2901 = vmatprep.subr.mxu0 0.0
  %2902 = vmatpush2.msra.mxu0 0.0
  %2903 = vmatprep.subr.mxu0 0.0
  %2904 = vmatpush2.msra.mxu0 0.0
  %2905 = vmatprep.subr.mxu0 0.0
  %2906 = vmatpush2.msra.mxu0 0.0
  %2907 = vmatprep.subr.mxu0 0.0
  %2908 = vmatpush2.msra.mxu0 0.0
  %2909 = vmatprep.subr.mxu0 0.0
  %2910 = vmatpush2.msra.mxu0 0.0
  %2911 = vmatprep.subr.mxu0 0.0
  %2912 = vmatpush2.msra.mxu0 0.0
  %2913 = vmatprep.subr.mxu0 0.0
  %2914 = vmatpush2.msra.mxu0 0.0
  %2915 = vmatprep.subr.mxu0 0.0
  %2916 = vmatpush2.msra.mxu0 0.0
  %2917 = vmatprep.subr.mxu0 0.0
  %2918 = vmatpush2.msra.mxu0 0.0
  %2919 = vmatprep.subr.mxu0 0.0
  %2920 = vmatpush2.msra.mxu0 0.0
  %2921 = vmatprep.mubr.f32.mxu0 0.0
  %2922 = vmatmul.mubr.f32.gmra.mxu0 %v2628
  %v2923 = vpop.f32.mrf.mxu0
  %v2924 = vadd.f32 0.0, %v2923
  %v2925 = vpop.f32.mrf.mxu0
  %2926 = vdwg.mxu0
  %v2927 = vmax.f32 %v2851, %v2924
  %v2928 = vld [vmem:[%s7] sm:$0xff]
  %v2929 = vld [vmem:[%s8] sm:$0x1]
  %vm2930 = vcmask 64512
  %v2932 = vsel %vm2930, %v2927, 0
  %2934 = vmatprep.subr.mxu0 0.0
  %2935 = vmatpush1.msra.mxu0 0.0
  %2936 = vmatprep.subr.mxu0 0.0
  %2937 = vmatpush1.msra.mxu0 0.0
  %2938 = vmatprep.subr.mxu0 0.0
  %2939 = vmatpush1.msra.mxu0 0.0
  %2940 = vmatprep.subr.mxu0 0.0
  %2941 = vmatpush1.msra.mxu0 0.0
  %2942 = vmatprep.subr.mxu0 0.0
  %2943 = vmatpush1.msra.mxu0 0.0
  %2944 = vmatprep.subr.mxu0 0.0
  %2945 = vmatpush1.msra.mxu0 0.0
  %2946 = vmatprep.subr.mxu0 0.0
  %2947 = vmatpush1.msra.mxu0 0.0
  %2948 = vmatprep.subr.mxu0 0.0
  %2949 = vmatpush1.msra.mxu0 0.0
  %2950 = vmatprep.subr.mxu0 0.0
  %2951 = vmatpush1.msra.mxu0 0.0
  %2952 = vmatprep.subr.mxu0 0.0
  %2953 = vmatpush1.msra.mxu0 0.0
  %2954 = vmatprep.subr.mxu0 0.0
  %2955 = vmatpush1.msra.mxu0 0.0
  %2956 = vmatprep.subr.mxu0 0.0
  %2957 = vmatpush1.msra.mxu0 0.0
  %2958 = vmatprep.subr.mxu0 0.0
  %2959 = vmatpush1.msra.mxu0 0.0
  %2960 = vmatprep.subr.mxu0 0.0
  %2961 = vmatpush1.msra.mxu0 0.0
  %2962 = vmatprep.subr.mxu0 0.0
  %2963 = vmatpush1.msra.mxu0 0.0
  %2964 = vmatprep.subr.mxu0 0.0
  %2965 = vmatpush1.msra.mxu0 %v2928
  %2966 = vmatprep.subr.mxu0 0.0
  %2967 = vmatpush2.msra.mxu0 0.0
  %2968 = vmatprep.subr.mxu0 0.0
  %2969 = vmatpush2.msra.mxu0 0.0
  %2970 = vmatprep.subr.mxu0 0.0
  %2971 = vmatpush2.msra.mxu0 0.0
  %2972 = vmatprep.subr.mxu0 0.0
  %2973 = vmatpush2.msra.mxu0 0.0
  %2974 = vmatprep.subr.mxu0 0.0
  %2975 = vmatpush2.msra.mxu0 0.0
  %2976 = vmatprep.subr.mxu0 0.0
  %2977 = vmatpush2.msra.mxu0 0.0
  %2978 = vmatprep.subr.mxu0 0.0
  %2979 = vmatpush2.msra.mxu0 0.0
  %2980 = vmatprep.subr.mxu0 0.0
  %2981 = vmatpush2.msra.mxu0 0.0
  %2982 = vmatprep.subr.mxu0 0.0
  %2983 = vmatpush2.msra.mxu0 0.0
  %2984 = vmatprep.subr.mxu0 0.0
  %2985 = vmatpush2.msra.mxu0 0.0
  %2986 = vmatprep.subr.mxu0 0.0
  %2987 = vmatpush2.msra.mxu0 0.0
  %2988 = vmatprep.subr.mxu0 0.0
  %2989 = vmatpush2.msra.mxu0 0.0
  %2990 = vmatprep.subr.mxu0 0.0
  %2991 = vmatpush2.msra.mxu0 0.0
  %2992 = vmatprep.subr.mxu0 0.0
  %2993 = vmatpush2.msra.mxu0 0.0
  %2994 = vmatprep.subr.mxu0 0.0
  %2995 = vmatpush2.msra.mxu0 0.0
  %2996 = vmatprep.subr.mxu0 0.0
  %2997 = vmatpush2.msra.mxu0 0.0
  %2998 = vmatprep.mubr.f32.mxu0 0.0
  %2999 = vmatmul.mubr.f32.gmra.mxu0 %v2932
  %v3000 = vpop.f32.mrf.mxu0
  %v3001 = vadd.f32 %v2929, %v3000
  %v3002 = vpop.f32.mrf.mxu0
  %3003 = vdwg.mxu0
  %v3004 = vmax.f32 %v3001, 0.0
  %v3005 = vadd.f32 %v3004, %v2927
  %v3006 = vld [vmem:[%s9] sm:$0xff]
  %v3008 = vsel %vm2930, %v3005, 0
  %3010 = vmatprep.subr.mxu0 0.0
  %3011 = vmatpush1.msra.mxu0 0.0
  %3012 = vmatprep.subr.mxu0 0.0
  %3013 = vmatpush1.msra.mxu0 0.0
  %3014 = vmatprep.subr.mxu0 0.0
  %3015 = vmatpush1.msra.mxu0 0.0
  %3016 = vmatprep.subr.mxu0 0.0
  %3017 = vmatpush1.msra.mxu0 0.0
  %3018 = vmatprep.subr.mxu0 0.0
  %3019 = vmatpush1.msra.mxu0 0.0
  %3020 = vmatprep.subr.mxu0 0.0
  %3021 = vmatpush1.msra.mxu0 0.0
  %3022 = vmatprep.subr.mxu0 0.0
  %3023 = vmatpush1.msra.mxu0 0.0
  %3024 = vmatprep.subr.mxu0 0.0
  %3025 = vmatpush1.msra.mxu0 0.0
  %3026 = vmatprep.subr.mxu0 0.0
  %3027 = vmatpush1.msra.mxu0 0.0
  %3028 = vmatprep.subr.mxu0 0.0
  %3029 = vmatpush1.msra.mxu0 0.0
  %3030 = vmatprep.subr.mxu0 0.0
  %3031 = vmatpush1.msra.mxu0 0.0
  %3032 = vmatprep.subr.mxu0 0.0
  %3033 = vmatpush1.msra.mxu0 0.0
  %3034 = vmatprep.subr.mxu0 0.0
  %3035 = vmatpush1.msra.mxu0 0.0
  %3036 = vmatprep.subr.mxu0 0.0
  %3037 = vmatpush1.msra.mxu0 0.0
  %3038 = vmatprep.subr.mxu0 0.0
  %3039 = vmatpush1.msra.mxu0 0.0
  %3040 = vmatprep.subr.mxu0 0.0
  %3041 = vmatpush1.msra.mxu0 %v3006
  %3042 = vmatprep.subr.mxu0 0.0
  %3043 = vmatpush2.msra.mxu0 0.0
  %3044 = vmatprep.subr.mxu0 0.0
  %3045 = vmatpush2.msra.mxu0 0.0
  %3046 = vmatprep.subr.mxu0 0.0
  %3047 = vmatpush2.msra.mxu0 0.0
  %3048 = vmatprep.subr.mxu0 0.0
  %3049 = vmatpush2.msra.mxu0 0.0
  %3050 = vmatprep.subr.mxu0 0.0
  %3051 = vmatpush2.msra.mxu0 0.0
  %3052 = vmatprep.subr.mxu0 0.0
  %3053 = vmatpush2.msra.mxu0 0.0
  %3054 = vmatprep.subr.mxu0 0.0
  %3055 = vmatpush2.msra.mxu0 0.0
  %3056 = vmatprep.subr.mxu0 0.0
  %3057 = vmatpush2.msra.mxu0 0.0
  %3058 = vmatprep.subr.mxu0 0.0
  %3059 = vmatpush2.msra.mxu0 0.0
  %3060 = vmatprep.subr.mxu0 0.0
  %3061 = vmatpush2.msra.mxu0 0.0
  %3062 = vmatprep.subr.mxu0 0.0
  %3063 = vmatpush2.msra.mxu0 0.0
  %3064 = vmatprep.subr.mxu0 0.0
  %3065 = vmatpush2.msra.mxu0 0.0
  %3066 = vmatprep.subr.mxu0 0.0
  %3067 = vmatpush2.msra.mxu0 0.0
  %3068 = vmatprep.subr.mxu0 0.0
  %3069 = vmatpush2.msra.mxu0 0.0
  %3070 = vmatprep.subr.mxu0 0.0
  %3071 = vmatpush2.msra.mxu0 0.0
  %3072 = vmatprep.subr.mxu0 0.0
  %3073 = vmatpush2.msra.mxu0 0.0
  %3074 = vmatprep.mubr.f32.mxu0 0.0
  %3075 = vmatmul.mubr.f32.gmra.mxu0 %v3008
  %v3076 = vpop.f32.mrf.mxu0
  %v3077 = vadd.f32 0.0, %v3076
  %v3078 = vpop.f32.mrf.mxu0
  %3079 = vdwg.mxu0
  %v3080 = vmax.f32 %v3077, 0.0
  %3081 = vset.pattern.permute.xlu0 14
  %3082 = vperm.xlu0 %3081, %v2603
  %v3083 = vpop.permute.xlu0 %3082
  %v3085 = vmul.f32 %v3080, %v3083
  %3086 = vset.pattern.permute.xlu0 15
  %3087 = vperm.xlu0 %3086, %v2603
  %v3088 = vpop.permute.xlu0 %3087
  %v3090 = vadd.f32 %v3085, %v3088
  %v3091 = vlaneseq
  %v3092 = vshrl.u32 %v3091, 7
  %v3093 = vsub.s32 0, %v3092
  %v3094 = vrot.slane %v3090, %v3093
  %v3095 = vadd.f32 %v3094, %v2289
  %v3096 = vpack.c.bf16 %v3095, %v3095
  %v3097 = vld [vmem:[%s10] sm:$0xf]
  %v3098 = vld [vmem:[%s10 + $0x4] sm:$0xf]
  %v3099 = vld [vmem:[%s10 + $0x8] sm:$0xf]
  %v3100 = vld [vmem:[%s10 + $0xc] sm:$0xf]
  %v3105 = vunpack.c.l.b16 %v3097
  %v3106 = vunpack.c.l.b16 %v3098
  %v3107 = vunpack.c.l.b16 %v3099
  %v3108 = vunpack.c.l.b16 %v3100
  %v3109 = vpack.c.b16 %v3106, %v3105
  %v3110 = vpack.c.b16 %v3108, %v3107
  %v3114 = vsel %vm2301, %v3096, 0
  %3116 = vmatprep.subr.bf16.mxu0 0
  %3117 = vmatpush1.bf16.msra.mxu0 0
  %3118 = vmatprep.subr.bf16.mxu0 0
  %3119 = vmatpush1.bf16.msra.mxu0 0
  %3120 = vmatprep.subr.bf16.mxu0 0
  %3121 = vmatpush1.bf16.msra.mxu0 0
  %3122 = vmatprep.subr.bf16.mxu0 0
  %3123 = vmatpush1.bf16.msra.mxu0 0
  %3124 = vmatprep.subr.bf16.mxu0 0
  %3125 = vmatpush1.bf16.msra.mxu0 0
  %3126 = vmatprep.subr.bf16.mxu0 0
  %3127 = vmatpush1.bf16.msra.mxu0 0
  %3128 = vmatprep.subr.bf16.mxu0 0
  %3129 = vmatpush1.bf16.msra.mxu0 %v3110
  %3130 = vmatprep.subr.bf16.mxu0 0
  %3131 = vmatpush1.bf16.msra.mxu0 %v3109
  %3132 = vmatprep.subr.bf16.mxu0 0
  %3133 = vmatpush2.bf16.msra.mxu0 0
  %3134 = vmatprep.subr.bf16.mxu0 0
  %3135 = vmatpush2.bf16.msra.mxu0 0
  %3136 = vmatprep.subr.bf16.mxu0 0
  %3137 = vmatpush2.bf16.msra.mxu0 0
  %3138 = vmatprep.subr.bf16.mxu0 0
  %3139 = vmatpush2.bf16.msra.mxu0 0
  %3140 = vmatprep.subr.bf16.mxu0 0
  %3141 = vmatpush2.bf16.msra.mxu0 0
  %3142 = vmatprep.subr.bf16.mxu0 0
  %3143 = vmatpush2.bf16.msra.mxu0 0
  %3144 = vmatprep.subr.bf16.mxu0 0
  %3145 = vmatpush2.bf16.msra.mxu0 0
  %3146 = vmatprep.subr.bf16.mxu0 0
  %3147 = vmatpush2.bf16.msra.mxu0 0
  %3148 = vmatprep.mubr.bf16.mxu0 0
  %3149 = vmatmul.mubr.bf16.gmra.mxu0 %v3114
  %v3150 = vpop.f32.mrf.mxu0
  %v3151 = vadd.f32 0.0, %v3150
  %v3152 = vpop.f32.mrf.mxu0
  %v3153 = vpop.f32.mrf.mxu0
  %v3154 = vpop.f32.mrf.mxu0
  %3155 = vdwg.mxu0
  %v3156 = vmax.f32 %v3151, 0.0
  %3157 = vset.pattern.permute.xlu0 6
  %3158 = vperm.xlu0 %3157, %v428
  %v3159 = vpop.permute.xlu0 %3158
  %v3161 = vmul.f32 %v3156, %v3159
  %3162 = vset.pattern.permute.xlu0 7
  %3163 = vperm.xlu0 %3162, %v428
  %v3164 = vpop.permute.xlu0 %3163
  %v3166 = vadd.f32 %v3161, %v3164
  %v3167 = vadd.f32 %v3166, %v1799
  %v3168 = vpack.c.bf16 %v3167, %v3167
  %v3169 = vld [vmem:[%s11] sm:$0xff]
  %v3170 = vld [vmem:[%s11 + $0x8] sm:$0xff]
  %v3171 = vld [vmem:[%s11 + $0x10] sm:$0xff]
  %v3172 = vld [vmem:[%s11 + $0x18] sm:$0xff]
  %v3173 = vld [vmem:[%s11 + $0x20] sm:$0xff]
  %v3174 = vld [vmem:[%s11 + $0x28] sm:$0xff]
  %v3175 = vld [vmem:[%s11 + $0x30] sm:$0xff]
  %v3176 = vld [vmem:[%s11 + $0x38] sm:$0xff]
  %v3177 = vld [vmem:[%s11 + $0x40] sm:$0xff]
  %v3178 = vld [vmem:[%s11 + $0x48] sm:$0xff]
  %v3179 = vld [vmem:[%s11 + $0x50] sm:$0xff]
  %v3180 = vld [vmem:[%s11 + $0x58] sm:$0xff]
  %v3181 = vld [vmem:[%s11 + $0x60] sm:$0xff]
  %v3182 = vld [vmem:[%s11 + $0x68] sm:$0xff]
  %v3183 = vld [vmem:[%s11 + $0x70] sm:$0xff]
  %v3184 = vld [vmem:[%s11 + $0x78] sm:$0xff]
  %v3185 = vld [vmem:[%s11 + $0x80] sm:$0xff]
  %v3186 = vld [vmem:[%s11 + $0x88] sm:$0xff]
  %v3187 = vld [vmem:[%s11 + $0x90] sm:$0xff]
  %v3188 = vld [vmem:[%s11 + $0x98] sm:$0xff]
  %v3189 = vld [vmem:[%s11 + $0xa0] sm:$0xff]
  %v3190 = vld [vmem:[%s11 + $0xa8] sm:$0xff]
  %v3191 = vld [vmem:[%s11 + $0xb0] sm:$0xff]
  %v3192 = vld [vmem:[%s11 + $0xb8] sm:$0xff]
  %v3193 = vld [vmem:[%s11 + $0xc0] sm:$0xff]
  %v3194 = vld [vmem:[%s11 + $0xc8] sm:$0xff]
  %v3195 = vld [vmem:[%s11 + $0xd0] sm:$0xff]
  %v3196 = vld [vmem:[%s11 + $0xd8] sm:$0xff]
  %v3197 = vld [vmem:[%s11 + $0xe0] sm:$0xff]
  %v3198 = vld [vmem:[%s11 + $0xe8] sm:$0xff]
  %v3199 = vld [vmem:[%s11 + $0xf0] sm:$0xff]
  %v3200 = vld [vmem:[%s11 + $0xf8] sm:$0xff]
  %v3233 = vunpack.c.l.b16 %v3169
  %v3234 = vunpack.c.h.b16 %v3169
  %v3235 = vunpack.c.l.b16 %v3170
  %v3236 = vunpack.c.h.b16 %v3170
  %v3237 = vunpack.c.l.b16 %v3171
  %v3238 = vunpack.c.h.b16 %v3171
  %v3239 = vunpack.c.l.b16 %v3172
  %v3240 = vunpack.c.h.b16 %v3172
  %v3241 = vunpack.c.l.b16 %v3173
  %v3242 = vunpack.c.h.b16 %v3173
  %v3243 = vunpack.c.l.b16 %v3174
  %v3244 = vunpack.c.h.b16 %v3174
  %v3245 = vunpack.c.l.b16 %v3175
  %v3246 = vunpack.c.h.b16 %v3175
  %v3247 = vunpack.c.l.b16 %v3176
  %v3248 = vunpack.c.h.b16 %v3176
  %v3249 = vunpack.c.l.b16 %v3177
  %v3250 = vunpack.c.h.b16 %v3177
  %v3251 = vunpack.c.l.b16 %v3178
  %v3252 = vunpack.c.h.b16 %v3178
  %v3253 = vunpack.c.l.b16 %v3179
  %v3254 = vunpack.c.h.b16 %v3179
  %v3255 = vunpack.c.l.b16 %v3180
  %v3256 = vunpack.c.h.b16 %v3180
  %v3257 = vunpack.c.l.b16 %v3181
  %v3258 = vunpack.c.h.b16 %v3181
  %v3259 = vunpack.c.l.b16 %v3182
  %v3260 = vunpack.c.h.b16 %v3182
  %v3261 = vunpack.c.l.b16 %v3183
  %v3262 = vunpack.c.h.b16 %v3183
  %v3263 = vunpack.c.l.b16 %v3184
  %v3264 = vunpack.c.h.b16 %v3184
  %v3265 = vunpack.c.l.b16 %v3185
  %v3266 = vunpack.c.h.b16 %v3185
  %v3267 = vunpack.c.l.b16 %v3186
  %v3268 = vunpack.c.h.b16 %v3186
  %v3269 = vunpack.c.l.b16 %v3187
  %v3270 = vunpack.c.h.b16 %v3187
  %v3271 = vunpack.c.l.b16 %v3188
  %v3272 = vunpack.c.h.b16 %v3188
  %v3273 = vunpack.c.l.b16 %v3189
  %v3274 = vunpack.c.h.b16 %v3189
  %v3275 = vunpack.c.l.b16 %v3190
  %v3276 = vunpack.c.h.b16 %v3190
  %v3277 = vunpack.c.l.b16 %v3191
  %v3278 = vunpack.c.h.b16 %v3191
  %v3279 = vunpack.c.l.b16 %v3192
  %v3280 = vunpack.c.h.b16 %v3192
  %v3281 = vunpack.c.l.b16 %v3193
  %v3282 = vunpack.c.h.b16 %v3193
  %v3283 = vunpack.c.l.b16 %v3194
  %v3284 = vunpack.c.h.b16 %v3194
  %v3285 = vunpack.c.l.b16 %v3195
  %v3286 = vunpack.c.h.b16 %v3195
  %v3287 = vunpack.c.l.b16 %v3196
  %v3288 = vunpack.c.h.b16 %v3196
  %v3289 = vunpack.c.l.b16 %v3197
  %v3290 = vunpack.c.h.b16 %v3197
  %v3291 = vunpack.c.l.b16 %v3198
  %v3292 = vunpack.c.h.b16 %v3198
  %v3293 = vunpack.c.l.b16 %v3199
  %v3294 = vunpack.c.h.b16 %v3199
  %v3295 = vunpack.c.l.b16 %v3200
  %v3296 = vunpack.c.h.b16 %v3200
  %v3297 = vpack.c.b16 %v3237, %v3233
  %v3298 = vpack.c.b16 %v3238, %v3234
  %v3299 = vpack.c.b16 %v3239, %v3235
  %v3300 = vpack.c.b16 %v3240, %v3236
  %v3301 = vpack.c.b16 %v3245, %v3241
  %v3302 = vpack.c.b16 %v3246, %v3242
  %v3303 = vpack.c.b16 %v3247, %v3243
  %v3304 = vpack.c.b16 %v3248, %v3244
  %v3305 = vpack.c.b16 %v3253, %v3249
  %v3306 = vpack.c.b16 %v3254, %v3250
  %v3307 = vpack.c.b16 %v3255, %v3251
  %v3308 = vpack.c.b16 %v3256, %v3252
  %v3309 = vpack.c.b16 %v3261, %v3257
  %v3310 = vpack.c.b16 %v3262, %v3258
  %v3311 = vpack.c.b16 %v3263, %v3259
  %v3312 = vpack.c.b16 %v3264, %v3260
  %v3313 = vpack.c.b16 %v3269, %v3265
  %v3314 = vpack.c.b16 %v3270, %v3266
  %v3315 = vpack.c.b16 %v3271, %v3267
  %v3316 = vpack.c.b16 %v3272, %v3268
  %v3317 = vpack.c.b16 %v3277, %v3273
  %v3318 = vpack.c.b16 %v3278, %v3274
  %v3319 = vpack.c.b16 %v3279, %v3275
  %v3320 = vpack.c.b16 %v3280, %v3276
  %v3321 = vpack.c.b16 %v3285, %v3281
  %v3322 = vpack.c.b16 %v3286, %v3282
  %v3323 = vpack.c.b16 %v3287, %v3283
  %v3324 = vpack.c.b16 %v3288, %v3284
  %v3325 = vpack.c.b16 %v3293, %v3289
  %v3326 = vpack.c.b16 %v3294, %v3290
  %v3327 = vpack.c.b16 %v3295, %v3291
  %v3328 = vpack.c.b16 %v3296, %v3292
  %3361 = vmatprep.subr.bf16.mxu0 %v3326
  %3362 = vmatpush1.bf16.msra.mxu0 %v3325
  %3363 = vmatprep.subr.bf16.mxu0 %v3322
  %3364 = vmatpush1.bf16.msra.mxu0 %v3321
  %3365 = vmatprep.subr.bf16.mxu0 %v3318
  %3366 = vmatpush1.bf16.msra.mxu0 %v3317
  %3367 = vmatprep.subr.bf16.mxu0 %v3314
  %3368 = vmatpush1.bf16.msra.mxu0 %v3313
  %3369 = vmatprep.subr.bf16.mxu0 %v3310
  %3370 = vmatpush1.bf16.msra.mxu0 %v3309
  %3371 = vmatprep.subr.bf16.mxu0 %v3306
  %3372 = vmatpush1.bf16.msra.mxu0 %v3305
  %3373 = vmatprep.subr.bf16.mxu0 %v3302
  %3374 = vmatpush1.bf16.msra.mxu0 %v3301
  %3375 = vmatprep.subr.bf16.mxu0 %v3298
  %3376 = vmatpush1.bf16.msra.mxu0 %v3297
  %3377 = vmatprep.subr.bf16.mxu0 0
  %3378 = vmatpush2.bf16.msra.mxu0 0
  %3379 = vmatprep.subr.bf16.mxu0 0
  %3380 = vmatpush2.bf16.msra.mxu0 0
  %3381 = vmatprep.subr.bf16.mxu0 0
  %3382 = vmatpush2.bf16.msra.mxu0 0
  %3383 = vmatprep.subr.bf16.mxu0 0
  %3384 = vmatpush2.bf16.msra.mxu0 0
  %3385 = vmatprep.subr.bf16.mxu0 0
  %3386 = vmatpush2.bf16.msra.mxu0 0
  %3387 = vmatprep.subr.bf16.mxu0 0
  %3388 = vmatpush2.bf16.msra.mxu0 0
  %3389 = vmatprep.subr.bf16.mxu0 0
  %3390 = vmatpush2.bf16.msra.mxu0 0
  %3391 = vmatprep.subr.bf16.mxu0 0
  %3392 = vmatpush2.bf16.msra.mxu0 0
  %3393 = vmatprep.mubr.bf16.mxu0 0
  %3394 = vmatmul.mubr.bf16.gmra.mxu0 %v3168
  %v3395 = vpop.f32.mrf.mxu0
  %v3396 = vadd.f32 0.0, %v3395
  %v3397 = vpop.f32.mrf.mxu0
  %v3398 = vadd.f32 0.0, %v3397
  %v3399 = vpop.f32.mrf.mxu0
  %v3400 = vpop.f32.mrf.mxu0
  %3401 = vdwg.mxu0
  %3402 = vmatprep.subr.bf16.mxu0 %v3328
  %3403 = vmatpush1.bf16.msra.mxu0 %v3327
  %3404 = vmatprep.subr.bf16.mxu0 %v3324
  %3405 = vmatpush1.bf16.msra.mxu0 %v3323
  %3406 = vmatprep.subr.bf16.mxu0 %v3320
  %3407 = vmatpush1.bf16.msra.mxu0 %v3319
  %3408 = vmatprep.subr.bf16.mxu0 %v3316
  %3409 = vmatpush1.bf16.msra.mxu0 %v3315
  %3410 = vmatprep.subr.bf16.mxu0 %v3312
  %3411 = vmatpush1.bf16.msra.mxu0 %v3311
  %3412 = vmatprep.subr.bf16.mxu0 %v3308
  %3413 = vmatpush1.bf16.msra.mxu0 %v3307
  %3414 = vmatprep.subr.bf16.mxu0 %v3304
  %3415 = vmatpush1.bf16.msra.mxu0 %v3303
  %3416 = vmatprep.subr.bf16.mxu0 %v3300
  %3417 = vmatpush1.bf16.msra.mxu0 %v3299
  %3418 = vmatprep.subr.bf16.mxu0 0
  %3419 = vmatpush2.bf16.msra.mxu0 0
  %3420 = vmatprep.subr.bf16.mxu0 0
  %3421 = vmatpush2.bf16.msra.mxu0 0
  %3422 = vmatprep.subr.bf16.mxu0 0
  %3423 = vmatpush2.bf16.msra.mxu0 0
  %3424 = vmatprep.subr.bf16.mxu0 0
  %3425 = vmatpush2.bf16.msra.mxu0 0
  %3426 = vmatprep.subr.bf16.mxu0 0
  %3427 = vmatpush2.bf16.msra.mxu0 0
  %3428 = vmatprep.subr.bf16.mxu0 0
  %3429 = vmatpush2.bf16.msra.mxu0 0
  %3430 = vmatprep.subr.bf16.mxu0 0
  %3431 = vmatpush2.bf16.msra.mxu0 0
  %3432 = vmatprep.subr.bf16.mxu0 0
  %3433 = vmatpush2.bf16.msra.mxu0 0
  %3434 = vmatprep.mubr.bf16.mxu0 0
  %3435 = vmatmul.mubr.bf16.gmra.mxu0 %v3168
  %v3436 = vpop.f32.mrf.mxu0
  %v3437 = vadd.f32 0.0, %v3436
  %v3438 = vpop.f32.mrf.mxu0
  %v3439 = vadd.f32 0.0, %v3438
  %v3440 = vpop.f32.mrf.mxu0
  %v3441 = vpop.f32.mrf.mxu0
  %3442 = vdwg.mxu0
  %v3443 = vmax.f32 %v3396, 0.0
  %v3444 = vmax.f32 %v3398, 0.0
  %v3445 = vmax.f32 %v3437, 0.0
  %v3446 = vmax.f32 %v3439, 0.0
  %3447 = vset.pattern.permute.xlu0 8
  %3448 = vperm.xlu0 %3447, %v428
  %v3449 = vpop.permute.xlu0 %3448
  %v3451 = vmul.f32 %v3443, %v3449
  %v3452 = vmul.f32 %v3444, %v3449
  %v3453 = vmul.f32 %v3445, %v3449
  %v3454 = vmul.f32 %v3446, %v3449
  %3455 = vset.pattern.permute.xlu0 9
  %3456 = vperm.xlu0 %3455, %v428
  %v3457 = vpop.permute.xlu0 %3456
  %v3459 = vadd.f32 %v3451, %v3457
  %v3460 = vadd.f32 %v3452, %v3457
  %v3461 = vadd.f32 %v3453, %v3457
  %v3462 = vadd.f32 %v3454, %v3457
  %v3463 = vld [vmem:[%s12] sm:$0x1]
  %v3464 = vpack.c.bf16 %v3459, %v3459
  %v3465 = vpack.c.bf16 %v3460, %v3460
  %v3466 = vpack.c.bf16 %v3461, %v3461
  %v3467 = vpack.c.bf16 %v3462, %v3462
  %v3468 = vld [vmem:[%s13] sm:$0x3]
  %3470 = vset.pattern.permute.xlu0 10
  %3471 = vperm.xlu0 %3470, %v3468
  %v3472 = vpop.permute.xlu0 %3471
  %v3475 = vsel %vm1806, %v3463, 0
  %v3478 = vsel %vm1810, %v3464, 0
  %v3481 = vsel %vm1810, %v3465, 0
  %v3484 = vsel %vm1810, %v3466, 0
  %v3487 = vsel %vm1810, %v3467, 0
  %3489 = vmatprep.subr.bf16.mxu0 0
  %3490 = vmatpush1.bf16.msra.mxu0 0
  %3491 = vmatprep.subr.bf16.mxu0 0
  %3492 = vmatpush1.bf16.msra.mxu0 0
  %3493 = vmatprep.subr.bf16.mxu0 0
  %3494 = vmatpush1.bf16.msra.mxu0 0
  %3495 = vmatprep.subr.bf16.mxu0 0
  %3496 = vmatpush1.bf16.msra.mxu0 0
  %3497 = vmatprep.subr.bf16.mxu0 0
  %3498 = vmatpush1.bf16.msra.mxu0 0
  %3499 = vmatprep.subr.bf16.mxu0 0
  %3500 = vmatpush1.bf16.msra.mxu0 0
  %3501 = vmatprep.subr.bf16.mxu0 0
  %3502 = vmatpush1.bf16.msra.mxu0 0
  %3503 = vmatprep.subr.bf16.mxu0 %v3481
  %3504 = vmatpush1.bf16.msra.mxu0 %v3478
  %3505 = vmatprep.subr.bf16.mxu0 0
  %3506 = vmatpush2.bf16.msra.mxu0 0
  %3507 = vmatprep.subr.bf16.mxu0 0
  %3508 = vmatpush2.bf16.msra.mxu0 0
  %3509 = vmatprep.subr.bf16.mxu0 0
  %3510 = vmatpush2.bf16.msra.mxu0 0
  %3511 = vmatprep.subr.bf16.mxu0 0
  %3512 = vmatpush2.bf16.msra.mxu0 0
  %3513 = vmatprep.subr.bf16.mxu0 0
  %3514 = vmatpush2.bf16.msra.mxu0 0
  %3515 = vmatprep.subr.bf16.mxu0 0
  %3516 = vmatpush2.bf16.msra.mxu0 0
  %3517 = vmatprep.subr.bf16.mxu0 0
  %3518 = vmatpush2.bf16.msra.mxu0 0
  %3519 = vmatprep.subr.bf16.mxu0 0
  %3520 = vmatpush2.bf16.msra.mxu0 0
  %3521 = vmatprep.mubr.bf16.mxu0 0
  %3522 = vmatmul.mubr.bf16.gmra.mxu0 %v3475
  %v3523 = vpop.f32.mrf.mxu0
  %v3524 = vadd.f32 %v3472, %v3523
  %v3525 = vpop.f32.mrf.mxu0
  %v3526 = vadd.f32 %v3472, %v3525
  %v3527 = vpop.f32.mrf.mxu0
  %v3528 = vpop.f32.mrf.mxu0
  %3529 = vdwg.mxu0
  %3530 = vmatprep.subr.bf16.mxu0 0
  %3531 = vmatpush1.bf16.msra.mxu0 0
  %3532 = vmatprep.subr.bf16.mxu0 0
  %3533 = vmatpush1.bf16.msra.mxu0 0
  %3534 = vmatprep.subr.bf16.mxu0 0
  %3535 = vmatpush1.bf16.msra.mxu0 0
  %3536 = vmatprep.subr.bf16.mxu0 0
  %3537 = vmatpush1.bf16.msra.mxu0 0
  %3538 = vmatprep.subr.bf16.mxu0 0
  %3539 = vmatpush1.bf16.msra.mxu0 0
  %3540 = vmatprep.subr.bf16.mxu0 0
  %3541 = vmatpush1.bf16.msra.mxu0 0
  %3542 = vmatprep.subr.bf16.mxu0 0
  %3543 = vmatpush1.bf16.msra.mxu0 0
  %3544 = vmatprep.subr.bf16.mxu0 %v3487
  %3545 = vmatpush1.bf16.msra.mxu0 %v3484
  %3546 = vmatprep.subr.bf16.mxu0 0
  %3547 = vmatpush2.bf16.msra.mxu0 0
  %3548 = vmatprep.subr.bf16.mxu0 0
  %3549 = vmatpush2.bf16.msra.mxu0 0
  %3550 = vmatprep.subr.bf16.mxu0 0
  %3551 = vmatpush2.bf16.msra.mxu0 0
  %3552 = vmatprep.subr.bf16.mxu0 0
  %3553 = vmatpush2.bf16.msra.mxu0 0
  %3554 = vmatprep.subr.bf16.mxu0 0
  %3555 = vmatpush2.bf16.msra.mxu0 0
  %3556 = vmatprep.subr.bf16.mxu0 0
  %3557 = vmatpush2.bf16.msra.mxu0 0
  %3558 = vmatprep.subr.bf16.mxu0 0
  %3559 = vmatpush2.bf16.msra.mxu0 0
  %3560 = vmatprep.subr.bf16.mxu0 0
  %3561 = vmatpush2.bf16.msra.mxu0 0
  %3562 = vmatprep.mubr.bf16.mxu0 0
  %3563 = vmatmul.mubr.bf16.gmra.mxu0 %v3475
  %v3564 = vpop.f32.mrf.mxu0
  %v3565 = vadd.f32 %v3472, %v3564
  %v3566 = vpop.f32.mrf.mxu0
  %v3567 = vadd.f32 %v3472, %v3566
  %v3568 = vpop.f32.mrf.mxu0
  %v3569 = vpop.f32.mrf.mxu0
  %3570 = vdwg.mxu0
  %v3575 = vcombine.low %v3524, %v3526
  %v3576 = vcombine.low %v3565, %v3567
  %v3578 = vunpack.c.l.s4 1983009808
  %v3579 = vunpack.c.0.s8 %v3578
  %v3580 = vlaneseq
  %v3581 = vshrl.u32 %v3580, 7
  %v3582 = vsub.s32 %v3579, %v3581
  %v3583 = vrot.slane %v3575, %v3582
  %v3585 = vunpack.c.l.s4 1983009808
  %v3586 = vunpack.c.0.s8 %v3585
  %v3587 = vlaneseq
  %v3588 = vshrl.u32 %v3587, 7
  %v3589 = vsub.s32 %v3586, %v3588
  %v3590 = vrot.slane %v3576, %v3589
  %v3591 = vcombine.low %v3583, %v3590
  %3593 = vst [vmem:[%s14] sm:$0xff] %v3591
  // Predicated region
  $region58: #{data_imputator_forward.1} parent=0 // pred_check
    _
  $region59: #{data_imputator_forward.1} parent=0 // pred_check_branch
    %3595 = sbr.rel (0) target = $region61
  $region60: #{data_imputator_forward.1} parent=0 // pred_region
    _
  $region61: #{data_imputator_forward.1} parent=0 // pred_fallthru
    _
  // Predicated region
  $region62: #{data_imputator_forward.1} parent=0 // pred_check
    _
  $region63: #{data_imputator_forward.1} parent=0 // pred_check_branch
    %3597 = sbr.rel (0) target = $region65
  $region64: #{data_imputator_forward.1} parent=0 // pred_region
    _
  $region65: #{data_imputator_forward.1} parent=0 // pred_fallthru
    _

</llo_original>
